<compile_context>
chip_gen: v6e
topology: v6e:2x2x1
jax: 0.10.0
libtpu: 0.0.40
codegen_flags: <defaults>
</compile_context>

<pallas_src>
import math
from functools import partial

import jax
import jax.numpy as jnp
from jax import lax
from jax.experimental import pallas as pl
from jax.experimental.pallas import tpu as pltpu


# ----------------------------- fused decoder kernel --------------------------
def _decoder_stack_kernel(num_heads,
                          x_ref, enc_ref, sbias_ref, cbias_ref,
                          wqkv1_ref, wo1_ref, wq2_ref, wkv2_ref, wo2_ref,
                          g1_ref, b1_ref, g2_ref, b2_ref, g3_ref, b3_ref,
                          w1_ref, w2_ref,
                          o_ref, x_scr):
    """Grid axis 0 = decoder layer index. Activations carried in VMEM scratch."""
    layer = pl.program_id(0)
    E = x_ref.shape[-1]
    dh = E // num_heads
    scale = 1.0 / math.sqrt(dh)

    @pl.when(layer == 0)
    def _():
        x_scr[...] = x_ref[...].astype(jnp.float32)

    xf = x_scr[...]                          # (B*S, E)  f32
    encf = enc_ref[...].astype(jnp.float32)  # (B*Se, E) f32
    sbias = sbias_ref[...]                   # (B*S, B*S)  additive mask
    cbias = cbias_ref[...]                   # (B*S, B*Se) additive mask

    def layernorm(h, g, b, eps=1e-5):
        mu = jnp.mean(h, axis=-1, keepdims=True)
        var = jnp.mean((h - mu) ** 2, axis=-1, keepdims=True)
        return (h - mu) * lax.rsqrt(var + eps) * g + b

    def attend(q, k, v, bias):
        # q: (Rq, E), k/v: (Rk, E), bias: (Rq, Rk) with 0 / -1e30 entries.
        heads = []
        for h in range(num_heads):          # static unrolled loop over heads
            qh = q[:, h * dh:(h + 1) * dh]
            kh = k[:, h * dh:(h + 1) * dh]
            vh = v[:, h * dh:(h + 1) * dh]
            s = lax.dot_general(qh, kh, (((1,), (1,)), ((), ())),
                                preferred_element_type=jnp.float32)
            s = s * scale + bias
            m = jnp.max(s, axis=-1, keepdims=True)
            p = jnp.exp(s - m)
            denom = jnp.sum(p, axis=-1, keepdims=True)
            p = p * pl.reciprocal(denom, approx=True)   # divide on the EUP slot
            heads.append(jnp.dot(p, vh, preferred_element_type=jnp.float32))
        return jnp.concatenate(heads, axis=-1)          # (Rq, E)

    # ---- masked self-attention + residual + LN1 ----
    qkv1 = jnp.dot(xf, wqkv1_ref[0], preferred_element_type=jnp.float32)  # (R, 3E)
    a1 = attend(qkv1[:, :E], qkv1[:, E:2 * E], qkv1[:, 2 * E:], sbias)
    attn1 = jnp.dot(a1, wo1_ref[0], preferred_element_type=jnp.float32)
    x1 = layernorm(xf + attn1, g1_ref[0], b1_ref[0])

    # ---- cross-attention (q from decoder, k/v from encoder) + residual + LN2 ----
    q2 = jnp.dot(x1, wq2_ref[0], preferred_element_type=jnp.float32)      # (R, E)
    kv2 = jnp.dot(encf, wkv2_ref[0], preferred_element_type=jnp.float32)  # (Re, 2E)
    a2 = attend(q2, kv2[:, :E], kv2[:, E:], cbias)
    attn2 = jnp.dot(a2, wo2_ref[0], preferred_element_type=jnp.float32)
    x2 = layernorm(x1 + attn2, g2_ref[0], b2_ref[0])

    # ---- feed-forward (bias=False) + residual + LN3 ----
    hid = jnp.maximum(jnp.dot(x2, w1_ref[0], preferred_element_type=jnp.float32), 0.0)
    ffn = jnp.dot(hid, w2_ref[0], preferred_element_type=jnp.float32)
    x3 = layernorm(x2 + ffn, g3_ref[0], b3_ref[0])

    x_scr[...] = x3

    @pl.when(layer == pl.num_programs(0) - 1)
    def _():
        o_ref[...] = x3.astype(o_ref.dtype)


# ------------------------------- wrapper -------------------------------------
def decoder_forward(x, enc, layer_params, num_heads):
    """x: (B, S, E) f32, enc: (B, Se, E) f32, layer_params: list of weight dicts."""
    B, S, E = x.shape
    _, Se, _ = enc.shape
    Nx = len(layer_params)
    H = layer_params[0]["w1"].shape[1]

    R = B * S          # decoder rows (batch folded into matmul M)
    Re = B * Se        # encoder rows

    xf = x.reshape(R, E)
    encf = enc.reshape(Re, E)

    # --- stack / fuse weights across layers (layer axis streamed by BlockSpec) ---
    wqkv1 = jnp.stack([jnp.concatenate([p["wq1"], p["wk1"], p["wv1"]], axis=1)
                       for p in layer_params])                     # (Nx, E, 3E)
    wo1 = jnp.stack([p["wo1"] for p in layer_params])              # (Nx, E, E)
    wq2 = jnp.stack([p["wq2"] for p in layer_params])              # (Nx, E, E)
    wkv2 = jnp.stack([jnp.concatenate([p["wk2"], p["wv2"]], axis=1)
                      for p in layer_params])                      # (Nx, E, 2E)
    wo2 = jnp.stack([p["wo2"] for p in layer_params])              # (Nx, E, E)
    g1 = jnp.stack([p["g1"] for p in layer_params])                # (Nx, 1, E)
    b1 = jnp.stack([p["b1"] for p in layer_params])
    g2 = jnp.stack([p["g2"] for p in layer_params])
    b2 = jnp.stack([p["b2"] for p in layer_params])
    g3 = jnp.stack([p["g3"] for p in layer_params])
    b3 = jnp.stack([p["b3"] for p in layer_params])
    w1 = jnp.stack([p["w1"] for p in layer_params])                # (Nx, E, H)
    w2 = jnp.stack([p["w2"] for p in layer_params])                # (Nx, H, E)

    # --- precomputed additive attention masks (block-diagonal over batch) ---
    r = jnp.arange(R)
    c = jnp.arange(R)
    same_batch = (r[:, None] // S) == (c[None, :] // S)
    causal = (r[:, None] % S) >= (c[None, :] % S)
    self_bias = jnp.where(same_batch & causal, 0.0, -1e30).astype(jnp.float32)
    ce = jnp.arange(Re)
    cross_same = (r[:, None] // S) == (ce[None, :] // Se)
    cross_bias = jnp.where(cross_same, 0.0, -1e30).astype(jnp.float32)

    const2 = lambda l: (0, 0)          # activations / masks: resident across layers

    def lspec(shape):                  # per-layer weight block, streamed over layers
        return pl.BlockSpec((1,) + shape, lambda l: (l,) + (0,) * len(shape))

    in_specs = [
        pl.BlockSpec((R, E), const2),        # x (flattened batch*seq)
        pl.BlockSpec((Re, E), const2),       # encoder output (flattened)
        pl.BlockSpec((R, R), const2),        # self-attn additive mask
        pl.BlockSpec((R, Re), const2),       # cross-attn additive mask
        lspec((E, 3 * E)), lspec((E, E)),    # wqkv1, wo1
        lspec((E, E)), lspec((E, 2 * E)), lspec((E, E)),   # wq2, wkv2, wo2
        lspec((1, E)), lspec((1, E)),        # ln1 gamma/beta
        lspec((1, E)), lspec((1, E)),        # ln2 gamma/beta
        lspec((1, E)), lspec((1, E)),        # ln3 gamma/beta
        lspec((E, H)), lspec((H, E)),        # ffn w1, w2
    ]
    out_spec = pl.BlockSpec((R, E), const2)

    kernel = partial(_decoder_stack_kernel, num_heads)
    out_flat = pl.pallas_call(
        kernel,
        out_shape=jax.ShapeDtypeStruct((R, E), x.dtype),
        grid_spec=pltpu.PrefetchScalarGridSpec(
            num_scalar_prefetch=0,
            grid=(Nx,),                       # sequential over layers
            in_specs=in_specs,
            out_specs=out_spec,
            scratch_shapes=[pltpu.VMEM((R, E), jnp.float32)],   # activation carry
        ),
        # Layer axis is a chain -> "arbitrary". For large B on v7x one would add a
        # leading "parallel" batch-block axis to shard across the two TensorCores.
        compiler_params=pltpu.CompilerParams(dimension_semantics=("arbitrary",)),
    )(xf, encf, self_bias, cross_bias,
      wqkv1, wo1, wq2, wkv2, wo2,
      g1, b1, g2, b2, g3, b3,
      w1, w2)

    return out_flat.reshape(B, S, E)


# --------------------------- pure-JAX reference -------------------------------
def _ref_block(x, enc, p, num_heads):
    def ln(h, g, b, eps=1e-5):
        mu = h.mean(-1, keepdims=True)
        var = ((h - mu) ** 2).mean(-1, keepdims=True)
        return (h - mu) / jnp.sqrt(var + eps) * g + b

    def mha(qi, kvi, wq, wk, wv, wo, causal):
        B, Sq, E = qi.shape
        Sk = kvi.shape[1]
        dh = E // num_heads
        q = (qi @ wq).reshape(B, Sq, num_heads, dh).transpose(0, 2, 1, 3)
        k = (kvi @ wk).reshape(B, Sk, num_heads, dh).transpose(0, 2, 1, 3)
        v = (kvi @ wv).reshape(B, Sk, num_heads, dh).transpose(0, 2, 1, 3)
        s = jnp.einsum("bhqd,bhkd->bhqk", q, k) / math.sqrt(dh)
        if causal:
            mask = jnp.tril(jnp.ones((Sq, Sk), dtype=bool))
            s = jnp.where(mask, s, -1e30)
        a = jax.nn.softmax(s, axis=-1)
        o = jnp.einsum("bhqk,bhkd->bhqd", a, v).transpose(0, 2, 1, 3).reshape(B, Sq, E)
        return o @ wo

    x = ln(x + mha(x, x, p["wq1"], p["wk1"], p["wv1"], p["wo1"], True), p["g1"], p["b1"])
    x = ln(x + mha(x, enc, p["wq2"], p["wk2"], p["wv2"], p["wo2"], False), p["g2"], p["b2"])
    ff = jnp.maximum(x @ p["w1"], 0.0) @ p["w2"]
    x = ln(x + ff, p["g3"], p["b3"])
    return x


def _ref_decoder(x, enc, layer_params, num_heads):
    for p in layer_params:
        x = _ref_block(x, enc, p, num_heads)
    return x


# ------------------------------- param init -----------------------------------
def init_layer_params(key, embed_dim, hidden_dim):
    ks = jax.random.split(key, 10)
    s_e = 1.0 / math.sqrt(embed_dim)
    s_h = 1.0 / math.sqrt(hidden_dim)
    return {
        "wq1": jax.random.normal(ks[0], (embed_dim, embed_dim), jnp.float32) * s_e,
        "wk1": jax.random.normal(ks[1], (embed_dim, embed_dim), jnp.float32) * s_e,
        "wv1": jax.random.normal(ks[2], (embed_dim, embed_dim), jnp.float32) * s_e,
        "wo1": jax.random.normal(ks[3], (embed_dim, embed_dim), jnp.float32) * s_e,
        "wq2": jax.random.normal(ks[4], (embed_dim, embed_dim), jnp.float32) * s_e,
        "wk2": jax.random.normal(ks[5], (embed_dim, embed_dim), jnp.float32) * s_e,
        "wv2": jax.random.normal(ks[6], (embed_dim, embed_dim), jnp.float32) * s_e,
        "wo2": jax.random.normal(ks[7], (embed_dim, embed_dim), jnp.float32) * s_e,
        "g1": jnp.ones((1, embed_dim), jnp.float32),
        "b1": jnp.zeros((1, embed_dim), jnp.float32),
        "g2": jnp.ones((1, embed_dim), jnp.float32),
        "b2": jnp.zeros((1, embed_dim), jnp.float32),
        "g3": jnp.ones((1, embed_dim), jnp.float32),
        "b3": jnp.zeros((1, embed_dim), jnp.float32),
        "w1": jax.random.normal(ks[8], (embed_dim, hidden_dim), jnp.float32) * s_e,
        "w2": jax.random.normal(ks[9], (hidden_dim, embed_dim), jnp.float32) * s_h,
    }


# ---------------------------------- main ---------------------------------------
if __name__ == "__main__":
    # Decoder(Nx=2, embed_dim=32, num_heads=4, ff_hidden_dim=64)
    Nx, E, NUM_HEADS, H = 2, 32, 4, 64
    B, S, Se = 2, 8, 8

    key = jax.random.PRNGKey(0)
    kx, kenc, kw = jax.random.split(key, 3)
    x = jax.random.normal(kx, (B, S, E), jnp.float32)
    enc = jax.random.normal(kenc, (B, Se, E), jnp.float32)

    layer_keys = jax.random.split(kw, Nx)
    layer_params = [init_layer_params(layer_keys[i], E, H) for i in range(Nx)]

    out = decoder_forward(x, enc, layer_params, NUM_HEADS)
    out = jax.block_until_ready(out)

    ref = _ref_decoder(x, enc, layer_params, NUM_HEADS)
    assert out.shape == (B, S, E)
    # Tolerance accounts for pl.reciprocal(approx=True) (EUP approximate divide)
    # in the softmax normalization; genuine bugs produce O(0.1-1) errors.
    assert jnp.allclose(out, ref, atol=1e-2, rtol=1e-2), "mismatch vs reference"

    print("KERNEL_OK")
</pallas_src>

<mosaic_0001>
module attributes {stable_mosaic.version = 11 : i64} {
  func.func @_decoder_stack_kernel(%arg0: i32, %arg1: memref<16x32xf32, #tpu.memory_space<vmem>>, %arg2: memref<16x32xf32, #tpu.memory_space<vmem>>, %arg3: memref<16x16xf32, #tpu.memory_space<vmem>>, %arg4: memref<16x16xf32, #tpu.memory_space<vmem>>, %arg5: memref<1x32x96xf32, #tpu.memory_space<vmem>>, %arg6: memref<1x32x32xf32, #tpu.memory_space<vmem>>, %arg7: memref<1x32x32xf32, #tpu.memory_space<vmem>>, %arg8: memref<1x32x64xf32, #tpu.memory_space<vmem>>, %arg9: memref<1x32x32xf32, #tpu.memory_space<vmem>>, %arg10: memref<1x1x32xf32, #tpu.memory_space<vmem>>, %arg11: memref<1x1x32xf32, #tpu.memory_space<vmem>>, %arg12: memref<1x1x32xf32, #tpu.memory_space<vmem>>, %arg13: memref<1x1x32xf32, #tpu.memory_space<vmem>>, %arg14: memref<1x1x32xf32, #tpu.memory_space<vmem>>, %arg15: memref<1x1x32xf32, #tpu.memory_space<vmem>>, %arg16: memref<1x32x64xf32, #tpu.memory_space<vmem>>, %arg17: memref<1x64x32xf32, #tpu.memory_space<vmem>>, %arg18: memref<16x32xf32, #tpu.memory_space<vmem>>, %arg19: memref<16x32xf32, #tpu.memory_space<vmem>>) attributes {dimension_semantics = [#tpu.dimension_semantics<arbitrary>], iteration_bounds = array<i64: 2>, scalar_prefetch = 0 : i64, scratch_operands = 1 : i64, tpu.core_type = #tpu.core_type<tc>, window_params = [{pipeline_mode = #tpu.pipeline_mode<synchronous>, transform_indices = @transform_0, window_bounds = array<i64: 16, 32>}, {pipeline_mode = #tpu.pipeline_mode<synchronous>, transform_indices = @transform_1, window_bounds = array<i64: 16, 32>}, {pipeline_mode = #tpu.pipeline_mode<synchronous>, transform_indices = @transform_2, window_bounds = array<i64: 16, 16>}, {pipeline_mode = #tpu.pipeline_mode<synchronous>, transform_indices = @transform_3, window_bounds = array<i64: 16, 16>}, {transform_indices = @transform_4, window_bounds = array<i64: 1, 32, 96>}, {transform_indices = @transform_5, window_bounds = array<i64: 1, 32, 32>}, {transform_indices = @transform_6, window_bounds = array<i64: 1, 32, 32>}, {transform_indices = @transform_7, window_bounds = array<i64: 1, 32, 64>}, {transform_indices = @transform_8, window_bounds = array<i64: 1, 32, 32>}, {transform_indices = @transform_9, window_bounds = array<i64: 1, 1, 32>}, {transform_indices = @transform_10, window_bounds = array<i64: 1, 1, 32>}, {transform_indices = @transform_11, window_bounds = array<i64: 1, 1, 32>}, {transform_indices = @transform_12, window_bounds = array<i64: 1, 1, 32>}, {transform_indices = @transform_13, window_bounds = array<i64: 1, 1, 32>}, {transform_indices = @transform_14, window_bounds = array<i64: 1, 1, 32>}, {transform_indices = @transform_15, window_bounds = array<i64: 1, 32, 64>}, {transform_indices = @transform_16, window_bounds = array<i64: 1, 64, 32>}, {pipeline_mode = #tpu.pipeline_mode<synchronous>, transform_indices = @transform_17, window_bounds = array<i64: 16, 32>}]} {
    %c0_i32 = arith.constant 0 : i32
    %0 = arith.cmpi eq, %arg0, %c0_i32 : i32
    %1 = arith.extui %0 : i1 to i32
    %c0_i32_0 = arith.constant 0 : i32
    %2 = arith.cmpi ne, %1, %c0_i32_0 : i32
    scf.if %2 {
      %c0_112 = arith.constant 0 : index
      %c0_113 = arith.constant 0 : index
      %266 = vector.load %arg1[%c0_112, %c0_113] : memref<16x32xf32, #tpu.memory_space<vmem>>, vector<16x32xf32>
      %c0_114 = arith.constant 0 : index
      %c0_115 = arith.constant 0 : index
      %267 = vector.load %arg19[%c0_114, %c0_115] : memref<16x32xf32, #tpu.memory_space<vmem>>, vector<16x32xf32>
      tpu.vector_store %arg19[%c0_114, %c0_115], %266 {strides = array<i32>} : memref<16x32xf32, #tpu.memory_space<vmem>>, vector<16x32xf32>,
    } else {
    }
    %c0 = arith.constant 0 : index
    %c0_1 = arith.constant 0 : index
    %3 = vector.load %arg19[%c0, %c0_1] : memref<16x32xf32, #tpu.memory_space<vmem>>, vector<16x32xf32>
    %c0_2 = arith.constant 0 : index
    %c0_3 = arith.constant 0 : index
    %4 = vector.load %arg2[%c0_2, %c0_3] : memref<16x32xf32, #tpu.memory_space<vmem>>, vector<16x32xf32>
    %c0_4 = arith.constant 0 : index
    %c0_5 = arith.constant 0 : index
    %5 = vector.load %arg3[%c0_4, %c0_5] : memref<16x16xf32, #tpu.memory_space<vmem>>, vector<16x16xf32>
    %c0_6 = arith.constant 0 : index
    %c0_7 = arith.constant 0 : index
    %6 = vector.load %arg4[%c0_6, %c0_7] : memref<16x16xf32, #tpu.memory_space<vmem>>, vector<16x16xf32>
    %c0_8 = arith.constant 0 : index
    %c0_9 = arith.constant 0 : index
    %c0_10 = arith.constant 0 : index
    %7 = vector.load %arg5[%c0_8, %c0_9, %c0_10] : memref<1x32x96xf32, #tpu.memory_space<vmem>>, vector<1x32x96xf32>
    %8 = vector.shape_cast %7 : vector<1x32x96xf32> to vector<32x96xf32>
    %cst = arith.constant dense<0.000000e+00> : vector<16x96xf32>
    %9 = tpu.matmul %3, %8, %cst {dimension_numbers = #tpu.dot_dimension_numbers<[1], [0], [0], [1], [0, 0, 1, 1], [], []>} : vector<16x32xf32>, vector<32x96xf32>, vector<16x96xf32> -> vector<16x96xf32>
    %10 = vector.extract_strided_slice %9 {offsets = [0, 0], sizes = [16, 32], strides = [1, 1]} : vector<16x96xf32> to vector<16x32xf32>
    %11 = vector.extract_strided_slice %9 {offsets = [0, 32], sizes = [16, 32], strides = [1, 1]} : vector<16x96xf32> to vector<16x32xf32>
    %12 = vector.extract_strided_slice %9 {offsets = [0, 64], sizes = [16, 32], strides = [1, 1]} : vector<16x96xf32> to vector<16x32xf32>
    %13 = vector.extract_strided_slice %10 {offsets = [0, 0], sizes = [16, 8], strides = [1, 1]} : vector<16x32xf32> to vector<16x8xf32>
    %14 = vector.extract_strided_slice %11 {offsets = [0, 0], sizes = [16, 8], strides = [1, 1]} : vector<16x32xf32> to vector<16x8xf32>
    %15 = vector.extract_strided_slice %12 {offsets = [0, 0], sizes = [16, 8], strides = [1, 1]} : vector<16x32xf32> to vector<16x8xf32>
    %cst_11 = arith.constant dense<0.000000e+00> : vector<16x16xf32>
    %16 = tpu.matmul %13, %14, %cst_11 {dimension_numbers = #tpu.dot_dimension_numbers<[1], [1], [0], [0], [0, 0, 1, 0], [], []>} : vector<16x8xf32>, vector<16x8xf32>, vector<16x16xf32> -> vector<16x16xf32>
    %cst_12 = arith.constant 0.353553385 : f32
    %17 = vector.broadcast %cst_12 : f32 to vector<16x16xf32>
    %18 = arith.mulf %16, %17 : vector<16x16xf32>
    %19 = arith.addf %18, %5 : vector<16x16xf32>
    %cst_13 = arith.constant dense<0xFF800000> : vector<16xf32>
    %20 = vector.multi_reduction <maximumf>, %19, %cst_13 [1] : vector<16x16xf32> to vector<16xf32>
    %21 = vector.shape_cast %20 : vector<16xf32> to vector<16x1xf32>
    %22 = vector.broadcast %21 : vector<16x1xf32> to vector<16x16xf32>
    %23 = arith.subf %19, %22 : vector<16x16xf32>
    %24 = math.exp %23 : vector<16x16xf32>
    %cst_14 = arith.constant dense<0.000000e+00> : vector<16xf32>
    %25 = vector.multi_reduction <add>, %24, %cst_14 [1] : vector<16x16xf32> to vector<16xf32>
    %26 = vector.shape_cast %25 : vector<16xf32> to vector<16x1xf32>
    %27 = tpu.reciprocal %26 {approx = true} : vector<16x1xf32> -> vector<16x1xf32>
    %28 = vector.broadcast %27 : vector<16x1xf32> to vector<16x16xf32>
    %29 = arith.mulf %24, %28 : vector<16x16xf32>
    %cst_15 = arith.constant dense<0.000000e+00> : vector<16x8xf32>
    %30 = tpu.matmul %29, %15, %cst_15 {dimension_numbers = #tpu.dot_dimension_numbers<[1], [0], [0], [1], [0, 0, 1, 1], [], []>} : vector<16x16xf32>, vector<16x8xf32>, vector<16x8xf32> -> vector<16x8xf32>
    %31 = vector.extract_strided_slice %10 {offsets = [0, 8], sizes = [16, 8], strides = [1, 1]} : vector<16x32xf32> to vector<16x8xf32>
    %32 = vector.extract_strided_slice %11 {offsets = [0, 8], sizes = [16, 8], strides = [1, 1]} : vector<16x32xf32> to vector<16x8xf32>
    %33 = vector.extract_strided_slice %12 {offsets = [0, 8], sizes = [16, 8], strides = [1, 1]} : vector<16x32xf32> to vector<16x8xf32>
    %cst_16 = arith.constant dense<0.000000e+00> : vector<16x16xf32>
    %34 = tpu.matmul %31, %32, %cst_16 {dimension_numbers = #tpu.dot_dimension_numbers<[1], [1], [0], [0], [0, 0, 1, 0], [], []>} : vector<16x8xf32>, vector<16x8xf32>, vector<16x16xf32> -> vector<16x16xf32>
    %cst_17 = arith.constant 0.353553385 : f32
    %35 = vector.broadcast %cst_17 : f32 to vector<16x16xf32>
    %36 = arith.mulf %34, %35 : vector<16x16xf32>
    %37 = arith.addf %36, %5 : vector<16x16xf32>
    %cst_18 = arith.constant dense<0xFF800000> : vector<16xf32>
    %38 = vector.multi_reduction <maximumf>, %37, %cst_18 [1] : vector<16x16xf32> to vector<16xf32>
    %39 = vector.shape_cast %38 : vector<16xf32> to vector<16x1xf32>
    %40 = vector.broadcast %39 : vector<16x1xf32> to vector<16x16xf32>
    %41 = arith.subf %37, %40 : vector<16x16xf32>
    %42 = math.exp %41 : vector<16x16xf32>
    %cst_19 = arith.constant dense<0.000000e+00> : vector<16xf32>
    %43 = vector.multi_reduction <add>, %42, %cst_19 [1] : vector<16x16xf32> to vector<16xf32>
    %44 = vector.shape_cast %43 : vector<16xf32> to vector<16x1xf32>
    %45 = tpu.reciprocal %44 {approx = true} : vector<16x1xf32> -> vector<16x1xf32>
    %46 = vector.broadcast %45 : vector<16x1xf32> to vector<16x16xf32>
    %47 = arith.mulf %42, %46 : vector<16x16xf32>
    %cst_20 = arith.constant dense<0.000000e+00> : vector<16x8xf32>
    %48 = tpu.matmul %47, %33, %cst_20 {dimension_numbers = #tpu.dot_dimension_numbers<[1], [0], [0], [1], [0, 0, 1, 1], [], []>} : vector<16x16xf32>, vector<16x8xf32>, vector<16x8xf32> -> vector<16x8xf32>
    %49 = vector.extract_strided_slice %10 {offsets = [0, 16], sizes = [16, 8], strides = [1, 1]} : vector<16x32xf32> to vector<16x8xf32>
    %50 = vector.extract_strided_slice %11 {offsets = [0, 16], sizes = [16, 8], strides = [1, 1]} : vector<16x32xf32> to vector<16x8xf32>
    %51 = vector.extract_strided_slice %12 {offsets = [0, 16], sizes = [16, 8], strides = [1, 1]} : vector<16x32xf32> to vector<16x8xf32>
    %cst_21 = arith.constant dense<0.000000e+00> : vector<16x16xf32>
    %52 = tpu.matmul %49, %50, %cst_21 {dimension_numbers = #tpu.dot_dimension_numbers<[1], [1], [0], [0], [0, 0, 1, 0], [], []>} : vector<16x8xf32>, vector<16x8xf32>, vector<16x16xf32> -> vector<16x16xf32>
    %cst_22 = arith.constant 0.353553385 : f32
    %53 = vector.broadcast %cst_22 : f32 to vector<16x16xf32>
    %54 = arith.mulf %52, %53 : vector<16x16xf32>
    %55 = arith.addf %54, %5 : vector<16x16xf32>
    %cst_23 = arith.constant dense<0xFF800000> : vector<16xf32>
    %56 = vector.multi_reduction <maximumf>, %55, %cst_23 [1] : vector<16x16xf32> to vector<16xf32>
    %57 = vector.shape_cast %56 : vector<16xf32> to vector<16x1xf32>
    %58 = vector.broadcast %57 : vector<16x1xf32> to vector<16x16xf32>
    %59 = arith.subf %55, %58 : vector<16x16xf32>
    %60 = math.exp %59 : vector<16x16xf32>
    %cst_24 = arith.constant dense<0.000000e+00> : vector<16xf32>
    %61 = vector.multi_reduction <add>, %60, %cst_24 [1] : vector<16x16xf32> to vector<16xf32>
    %62 = vector.shape_cast %61 : vector<16xf32> to vector<16x1xf32>
    %63 = tpu.reciprocal %62 {approx = true} : vector<16x1xf32> -> vector<16x1xf32>
    %64 = vector.broadcast %63 : vector<16x1xf32> to vector<16x16xf32>
    %65 = arith.mulf %60, %64 : vector<16x16xf32>
    %cst_25 = arith.constant dense<0.000000e+00> : vector<16x8xf32>
    %66 = tpu.matmul %65, %51, %cst_25 {dimension_numbers = #tpu.dot_dimension_numbers<[1], [0], [0], [1], [0, 0, 1, 1], [], []>} : vector<16x16xf32>, vector<16x8xf32>, vector<16x8xf32> -> vector<16x8xf32>
    %67 = vector.extract_strided_slice %10 {offsets = [0, 24], sizes = [16, 8], strides = [1, 1]} : vector<16x32xf32> to vector<16x8xf32>
    %68 = vector.extract_strided_slice %11 {offsets = [0, 24], sizes = [16, 8], strides = [1, 1]} : vector<16x32xf32> to vector<16x8xf32>
    %69 = vector.extract_strided_slice %12 {offsets = [0, 24], sizes = [16, 8], strides = [1, 1]} : vector<16x32xf32> to vector<16x8xf32>
    %cst_26 = arith.constant dense<0.000000e+00> : vector<16x16xf32>
    %70 = tpu.matmul %67, %68, %cst_26 {dimension_numbers = #tpu.dot_dimension_numbers<[1], [1], [0], [0], [0, 0, 1, 0], [], []>} : vector<16x8xf32>, vector<16x8xf32>, vector<16x16xf32> -> vector<16x16xf32>
    %cst_27 = arith.constant 0.353553385 : f32
    %71 = vector.broadcast %cst_27 : f32 to vector<16x16xf32>
    %72 = arith.mulf %70, %71 : vector<16x16xf32>
    %73 = arith.addf %72, %5 : vector<16x16xf32>
    %cst_28 = arith.constant dense<0xFF800000> : vector<16xf32>
    %74 = vector.multi_reduction <maximumf>, %73, %cst_28 [1] : vector<16x16xf32> to vector<16xf32>
    %75 = vector.shape_cast %74 : vector<16xf32> to vector<16x1xf32>
    %76 = vector.broadcast %75 : vector<16x1xf32> to vector<16x16xf32>
    %77 = arith.subf %73, %76 : vector<16x16xf32>
    %78 = math.exp %77 : vector<16x16xf32>
    %cst_29 = arith.constant dense<0.000000e+00> : vector<16xf32>
    %79 = vector.multi_reduction <add>, %78, %cst_29 [1] : vector<16x16xf32> to vector<16xf32>
    %80 = vector.shape_cast %79 : vector<16xf32> to vector<16x1xf32>
    %81 = tpu.reciprocal %80 {approx = true} : vector<16x1xf32> -> vector<16x1xf32>
    %82 = vector.broadcast %81 : vector<16x1xf32> to vector<16x16xf32>
    %83 = arith.mulf %78, %82 : vector<16x16xf32>
    %cst_30 = arith.constant dense<0.000000e+00> : vector<16x8xf32>
    %84 = tpu.matmul %83, %69, %cst_30 {dimension_numbers = #tpu.dot_dimension_numbers<[1], [0], [0], [1], [0, 0, 1, 1], [], []>} : vector<16x16xf32>, vector<16x8xf32>, vector<16x8xf32> -> vector<16x8xf32>
    %85 = tpu.concatenate %30, %48, %66, %84 in 1 : vector<16x8xf32>, vector<16x8xf32>, vector<16x8xf32>, vector<16x8xf32> -> vector<16x32xf32>
    %c0_31 = arith.constant 0 : index
    %c0_32 = arith.constant 0 : index
    %c0_33 = arith.constant 0 : index
    %86 = vector.load %arg6[%c0_31, %c0_32, %c0_33] : memref<1x32x32xf32, #tpu.memory_space<vmem>>, vector<1x32x32xf32>
    %87 = vector.shape_cast %86 : vector<1x32x32xf32> to vector<32x32xf32>
    %cst_34 = arith.constant dense<0.000000e+00> : vector<16x32xf32>
    %88 = tpu.matmul %85, %87, %cst_34 {dimension_numbers = #tpu.dot_dimension_numbers<[1], [0], [0], [1], [0, 0, 1, 1], [], []>} : vector<16x32xf32>, vector<32x32xf32>, vector<16x32xf32> -> vector<16x32xf32>
    %89 = arith.addf %3, %88 : vector<16x32xf32>
    %c0_35 = arith.constant 0 : index
    %c0_36 = arith.constant 0 : index
    %c0_37 = arith.constant 0 : index
    %90 = vector.load %arg10[%c0_35, %c0_36, %c0_37] : memref<1x1x32xf32, #tpu.memory_space<vmem>>, vector<1x1x32xf32>
    %91 = vector.shape_cast %90 : vector<1x1x32xf32> to vector<1x32xf32>
    %c0_38 = arith.constant 0 : index
    %c0_39 = arith.constant 0 : index
    %c0_40 = arith.constant 0 : index
    %92 = vector.load %arg11[%c0_38, %c0_39, %c0_40] : memref<1x1x32xf32, #tpu.memory_space<vmem>>, vector<1x1x32xf32>
    %93 = vector.shape_cast %92 : vector<1x1x32xf32> to vector<1x32xf32>
    %cst_41 = arith.constant dense<0.000000e+00> : vector<16xf32>
    %94 = vector.multi_reduction <add>, %89, %cst_41 [1] : vector<16x32xf32> to vector<16xf32>
    %95 = vector.shape_cast %94 : vector<16xf32> to vector<16x1xf32>
    %cst_42 = arith.constant 3.200000e+01 : f32
    %96 = vector.broadcast %cst_42 : f32 to vector<16x1xf32>
    %97 = arith.divf %95, %96 : vector<16x1xf32>
    %98 = vector.broadcast %97 : vector<16x1xf32> to vector<16x32xf32>
    %99 = arith.subf %89, %98 : vector<16x32xf32>
    %100 = arith.mulf %99, %99 : vector<16x32xf32>
    %cst_43 = arith.constant dense<0.000000e+00> : vector<16xf32>
    %101 = vector.multi_reduction <add>, %100, %cst_43 [1] : vector<16x32xf32> to vector<16xf32>
    %102 = vector.shape_cast %101 : vector<16xf32> to vector<16x1xf32>
    %cst_44 = arith.constant 3.200000e+01 : f32
    %103 = vector.broadcast %cst_44 : f32 to vector<16x1xf32>
    %104 = arith.divf %102, %103 : vector<16x1xf32>
    %105 = vector.broadcast %97 : vector<16x1xf32> to vector<16x32xf32>
    %106 = arith.subf %89, %105 : vector<16x32xf32>
    %cst_45 = arith.constant 9.99999974E-6 : f32
    %107 = vector.broadcast %cst_45 : f32 to vector<16x1xf32>
    %108 = arith.addf %104, %107 : vector<16x1xf32>
    %109 = math.rsqrt %108 : vector<16x1xf32>
    %110 = vector.broadcast %109 : vector<16x1xf32> to vector<16x32xf32>
    %111 = arith.mulf %106, %110 : vector<16x32xf32>
    %112 = vector.broadcast %91 : vector<1x32xf32> to vector<16x32xf32>
    %113 = arith.mulf %111, %112 : vector<16x32xf32>
    %114 = vector.broadcast %93 : vector<1x32xf32> to vector<16x32xf32>
    %115 = arith.addf %113, %114 : vector<16x32xf32>
    %c0_46 = arith.constant 0 : index
    %c0_47 = arith.constant 0 : index
    %c0_48 = arith.constant 0 : index
    %116 = vector.load %arg7[%c0_46, %c0_47, %c0_48] : memref<1x32x32xf32, #tpu.memory_space<vmem>>, vector<1x32x32xf32>
    %117 = vector.shape_cast %116 : vector<1x32x32xf32> to vector<32x32xf32>
    %cst_49 = arith.constant dense<0.000000e+00> : vector<16x32xf32>
    %118 = tpu.matmul %115, %117, %cst_49 {dimension_numbers = #tpu.dot_dimension_numbers<[1], [0], [0], [1], [0, 0, 1, 1], [], []>} : vector<16x32xf32>, vector<32x32xf32>, vector<16x32xf32> -> vector<16x32xf32>
    %c0_50 = arith.constant 0 : index
    %c0_51 = arith.constant 0 : index
    %c0_52 = arith.constant 0 : index
    %119 = vector.load %arg8[%c0_50, %c0_51, %c0_52] : memref<1x32x64xf32, #tpu.memory_space<vmem>>, vector<1x32x64xf32>
    %120 = vector.shape_cast %119 : vector<1x32x64xf32> to vector<32x64xf32>
    %cst_53 = arith.constant dense<0.000000e+00> : vector<16x64xf32>
    %121 = tpu.matmul %4, %120, %cst_53 {dimension_numbers = #tpu.dot_dimension_numbers<[1], [0], [0], [1], [0, 0, 1, 1], [], []>} : vector<16x32xf32>, vector<32x64xf32>, vector<16x64xf32> -> vector<16x64xf32>
    %122 = vector.extract_strided_slice %121 {offsets = [0, 0], sizes = [16, 32], strides = [1, 1]} : vector<16x64xf32> to vector<16x32xf32>
    %123 = vector.extract_strided_slice %121 {offsets = [0, 32], sizes = [16, 32], strides = [1, 1]} : vector<16x64xf32> to vector<16x32xf32>
    %124 = vector.extract_strided_slice %118 {offsets = [0, 0], sizes = [16, 8], strides = [1, 1]} : vector<16x32xf32> to vector<16x8xf32>
    %125 = vector.extract_strided_slice %122 {offsets = [0, 0], sizes = [16, 8], strides = [1, 1]} : vector<16x32xf32> to vector<16x8xf32>
    %126 = vector.extract_strided_slice %123 {offsets = [0, 0], sizes = [16, 8], strides = [1, 1]} : vector<16x32xf32> to vector<16x8xf32>
    %cst_54 = arith.constant dense<0.000000e+00> : vector<16x16xf32>
    %127 = tpu.matmul %124, %125, %cst_54 {dimension_numbers = #tpu.dot_dimension_numbers<[1], [1], [0], [0], [0, 0, 1, 0], [], []>} : vector<16x8xf32>, vector<16x8xf32>, vector<16x16xf32> -> vector<16x16xf32>
    %cst_55 = arith.constant 0.353553385 : f32
    %128 = vector.broadcast %cst_55 : f32 to vector<16x16xf32>
    %129 = arith.mulf %127, %128 : vector<16x16xf32>
    %130 = arith.addf %129, %6 : vector<16x16xf32>
    %cst_56 = arith.constant dense<0xFF800000> : vector<16xf32>
    %131 = vector.multi_reduction <maximumf>, %130, %cst_56 [1] : vector<16x16xf32> to vector<16xf32>
    %132 = vector.shape_cast %131 : vector<16xf32> to vector<16x1xf32>
    %133 = vector.broadcast %132 : vector<16x1xf32> to vector<16x16xf32>
    %134 = arith.subf %130, %133 : vector<16x16xf32>
    %135 = math.exp %134 : vector<16x16xf32>
    %cst_57 = arith.constant dense<0.000000e+00> : vector<16xf32>
    %136 = vector.multi_reduction <add>, %135, %cst_57 [1] : vector<16x16xf32> to vector<16xf32>
    %137 = vector.shape_cast %136 : vector<16xf32> to vector<16x1xf32>
    %138 = tpu.reciprocal %137 {approx = true} : vector<16x1xf32> -> vector<16x1xf32>
    %139 = vector.broadcast %138 : vector<16x1xf32> to vector<16x16xf32>
    %140 = arith.mulf %135, %139 : vector<16x16xf32>
    %cst_58 = arith.constant dense<0.000000e+00> : vector<16x8xf32>
    %141 = tpu.matmul %140, %126, %cst_58 {dimension_numbers = #tpu.dot_dimension_numbers<[1], [0], [0], [1], [0, 0, 1, 1], [], []>} : vector<16x16xf32>, vector<16x8xf32>, vector<16x8xf32> -> vector<16x8xf32>
    %142 = vector.extract_strided_slice %118 {offsets = [0, 8], sizes = [16, 8], strides = [1, 1]} : vector<16x32xf32> to vector<16x8xf32>
    %143 = vector.extract_strided_slice %122 {offsets = [0, 8], sizes = [16, 8], strides = [1, 1]} : vector<16x32xf32> to vector<16x8xf32>
    %144 = vector.extract_strided_slice %123 {offsets = [0, 8], sizes = [16, 8], strides = [1, 1]} : vector<16x32xf32> to vector<16x8xf32>
    %cst_59 = arith.constant dense<0.000000e+00> : vector<16x16xf32>
    %145 = tpu.matmul %142, %143, %cst_59 {dimension_numbers = #tpu.dot_dimension_numbers<[1], [1], [0], [0], [0, 0, 1, 0], [], []>} : vector<16x8xf32>, vector<16x8xf32>, vector<16x16xf32> -> vector<16x16xf32>
    %cst_60 = arith.constant 0.353553385 : f32
    %146 = vector.broadcast %cst_60 : f32 to vector<16x16xf32>
    %147 = arith.mulf %145, %146 : vector<16x16xf32>
    %148 = arith.addf %147, %6 : vector<16x16xf32>
    %cst_61 = arith.constant dense<0xFF800000> : vector<16xf32>
    %149 = vector.multi_reduction <maximumf>, %148, %cst_61 [1] : vector<16x16xf32> to vector<16xf32>
    %150 = vector.shape_cast %149 : vector<16xf32> to vector<16x1xf32>
    %151 = vector.broadcast %150 : vector<16x1xf32> to vector<16x16xf32>
    %152 = arith.subf %148, %151 : vector<16x16xf32>
    %153 = math.exp %152 : vector<16x16xf32>
    %cst_62 = arith.constant dense<0.000000e+00> : vector<16xf32>
    %154 = vector.multi_reduction <add>, %153, %cst_62 [1] : vector<16x16xf32> to vector<16xf32>
    %155 = vector.shape_cast %154 : vector<16xf32> to vector<16x1xf32>
    %156 = tpu.reciprocal %155 {approx = true} : vector<16x1xf32> -> vector<16x1xf32>
    %157 = vector.broadcast %156 : vector<16x1xf32> to vector<16x16xf32>
    %158 = arith.mulf %153, %157 : vector<16x16xf32>
    %cst_63 = arith.constant dense<0.000000e+00> : vector<16x8xf32>
    %159 = tpu.matmul %158, %144, %cst_63 {dimension_numbers = #tpu.dot_dimension_numbers<[1], [0], [0], [1], [0, 0, 1, 1], [], []>} : vector<16x16xf32>, vector<16x8xf32>, vector<16x8xf32> -> vector<16x8xf32>
    %160 = vector.extract_strided_slice %118 {offsets = [0, 16], sizes = [16, 8], strides = [1, 1]} : vector<16x32xf32> to vector<16x8xf32>
    %161 = vector.extract_strided_slice %122 {offsets = [0, 16], sizes = [16, 8], strides = [1, 1]} : vector<16x32xf32> to vector<16x8xf32>
    %162 = vector.extract_strided_slice %123 {offsets = [0, 16], sizes = [16, 8], strides = [1, 1]} : vector<16x32xf32> to vector<16x8xf32>
    %cst_64 = arith.constant dense<0.000000e+00> : vector<16x16xf32>
    %163 = tpu.matmul %160, %161, %cst_64 {dimension_numbers = #tpu.dot_dimension_numbers<[1], [1], [0], [0], [0, 0, 1, 0], [], []>} : vector<16x8xf32>, vector<16x8xf32>, vector<16x16xf32> -> vector<16x16xf32>
    %cst_65 = arith.constant 0.353553385 : f32
    %164 = vector.broadcast %cst_65 : f32 to vector<16x16xf32>
    %165 = arith.mulf %163, %164 : vector<16x16xf32>
    %166 = arith.addf %165, %6 : vector<16x16xf32>
    %cst_66 = arith.constant dense<0xFF800000> : vector<16xf32>
    %167 = vector.multi_reduction <maximumf>, %166, %cst_66 [1] : vector<16x16xf32> to vector<16xf32>
    %168 = vector.shape_cast %167 : vector<16xf32> to vector<16x1xf32>
    %169 = vector.broadcast %168 : vector<16x1xf32> to vector<16x16xf32>
    %170 = arith.subf %166, %169 : vector<16x16xf32>
    %171 = math.exp %170 : vector<16x16xf32>
    %cst_67 = arith.constant dense<0.000000e+00> : vector<16xf32>
    %172 = vector.multi_reduction <add>, %171, %cst_67 [1] : vector<16x16xf32> to vector<16xf32>
    %173 = vector.shape_cast %172 : vector<16xf32> to vector<16x1xf32>
    %174 = tpu.reciprocal %173 {approx = true} : vector<16x1xf32> -> vector<16x1xf32>
    %175 = vector.broadcast %174 : vector<16x1xf32> to vector<16x16xf32>
    %176 = arith.mulf %171, %175 : vector<16x16xf32>
    %cst_68 = arith.constant dense<0.000000e+00> : vector<16x8xf32>
    %177 = tpu.matmul %176, %162, %cst_68 {dimension_numbers = #tpu.dot_dimension_numbers<[1], [0], [0], [1], [0, 0, 1, 1], [], []>} : vector<16x16xf32>, vector<16x8xf32>, vector<16x8xf32> -> vector<16x8xf32>
    %178 = vector.extract_strided_slice %118 {offsets = [0, 24], sizes = [16, 8], strides = [1, 1]} : vector<16x32xf32> to vector<16x8xf32>
    %179 = vector.extract_strided_slice %122 {offsets = [0, 24], sizes = [16, 8], strides = [1, 1]} : vector<16x32xf32> to vector<16x8xf32>
    %180 = vector.extract_strided_slice %123 {offsets = [0, 24], sizes = [16, 8], strides = [1, 1]} : vector<16x32xf32> to vector<16x8xf32>
    %cst_69 = arith.constant dense<0.000000e+00> : vector<16x16xf32>
    %181 = tpu.matmul %178, %179, %cst_69 {dimension_numbers = #tpu.dot_dimension_numbers<[1], [1], [0], [0], [0, 0, 1, 0], [], []>} : vector<16x8xf32>, vector<16x8xf32>, vector<16x16xf32> -> vector<16x16xf32>
    %cst_70 = arith.constant 0.353553385 : f32
    %182 = vector.broadcast %cst_70 : f32 to vector<16x16xf32>
    %183 = arith.mulf %181, %182 : vector<16x16xf32>
    %184 = arith.addf %183, %6 : vector<16x16xf32>
    %cst_71 = arith.constant dense<0xFF800000> : vector<16xf32>
    %185 = vector.multi_reduction <maximumf>, %184, %cst_71 [1] : vector<16x16xf32> to vector<16xf32>
    %186 = vector.shape_cast %185 : vector<16xf32> to vector<16x1xf32>
    %187 = vector.broadcast %186 : vector<16x1xf32> to vector<16x16xf32>
    %188 = arith.subf %184, %187 : vector<16x16xf32>
    %189 = math.exp %188 : vector<16x16xf32>
    %cst_72 = arith.constant dense<0.000000e+00> : vector<16xf32>
    %190 = vector.multi_reduction <add>, %189, %cst_72 [1] : vector<16x16xf32> to vector<16xf32>
    %191 = vector.shape_cast %190 : vector<16xf32> to vector<16x1xf32>
    %192 = tpu.reciprocal %191 {approx = true} : vector<16x1xf32> -> vector<16x1xf32>
    %193 = vector.broadcast %192 : vector<16x1xf32> to vector<16x16xf32>
    %194 = arith.mulf %189, %193 : vector<16x16xf32>
    %cst_73 = arith.constant dense<0.000000e+00> : vector<16x8xf32>
    %195 = tpu.matmul %194, %180, %cst_73 {dimension_numbers = #tpu.dot_dimension_numbers<[1], [0], [0], [1], [0, 0, 1, 1], [], []>} : vector<16x16xf32>, vector<16x8xf32>, vector<16x8xf32> -> vector<16x8xf32>
    %196 = tpu.concatenate %141, %159, %177, %195 in 1 : vector<16x8xf32>, vector<16x8xf32>, vector<16x8xf32>, vector<16x8xf32> -> vector<16x32xf32>
    %c0_74 = arith.constant 0 : index
    %c0_75 = arith.constant 0 : index
    %c0_76 = arith.constant 0 : index
    %197 = vector.load %arg9[%c0_74, %c0_75, %c0_76] : memref<1x32x32xf32, #tpu.memory_space<vmem>>, vector<1x32x32xf32>
    %198 = vector.shape_cast %197 : vector<1x32x32xf32> to vector<32x32xf32>
    %cst_77 = arith.constant dense<0.000000e+00> : vector<16x32xf32>
    %199 = tpu.matmul %196, %198, %cst_77 {dimension_numbers = #tpu.dot_dimension_numbers<[1], [0], [0], [1], [0, 0, 1, 1], [], []>} : vector<16x32xf32>, vector<32x32xf32>, vector<16x32xf32> -> vector<16x32xf32>
    %200 = arith.addf %115, %199 : vector<16x32xf32>
    %c0_78 = arith.constant 0 : index
    %c0_79 = arith.constant 0 : index
    %c0_80 = arith.constant 0 : index
    %201 = vector.load %arg12[%c0_78, %c0_79, %c0_80] : memref<1x1x32xf32, #tpu.memory_space<vmem>>, vector<1x1x32xf32>
    %202 = vector.shape_cast %201 : vector<1x1x32xf32> to vector<1x32xf32>
    %c0_81 = arith.constant 0 : index
    %c0_82 = arith.constant 0 : index
    %c0_83 = arith.constant 0 : index
    %203 = vector.load %arg13[%c0_81, %c0_82, %c0_83] : memref<1x1x32xf32, #tpu.memory_space<vmem>>, vector<1x1x32xf32>
    %204 = vector.shape_cast %203 : vector<1x1x32xf32> to vector<1x32xf32>
    %cst_84 = arith.constant dense<0.000000e+00> : vector<16xf32>
    %205 = vector.multi_reduction <add>, %200, %cst_84 [1] : vector<16x32xf32> to vector<16xf32>
    %206 = vector.shape_cast %205 : vector<16xf32> to vector<16x1xf32>
    %cst_85 = arith.constant 3.200000e+01 : f32
    %207 = vector.broadcast %cst_85 : f32 to vector<16x1xf32>
    %208 = arith.divf %206, %207 : vector<16x1xf32>
    %209 = vector.broadcast %208 : vector<16x1xf32> to vector<16x32xf32>
    %210 = arith.subf %200, %209 : vector<16x32xf32>
    %211 = arith.mulf %210, %210 : vector<16x32xf32>
    %cst_86 = arith.constant dense<0.000000e+00> : vector<16xf32>
    %212 = vector.multi_reduction <add>, %211, %cst_86 [1] : vector<16x32xf32> to vector<16xf32>
    %213 = vector.shape_cast %212 : vector<16xf32> to vector<16x1xf32>
    %cst_87 = arith.constant 3.200000e+01 : f32
    %214 = vector.broadcast %cst_87 : f32 to vector<16x1xf32>
    %215 = arith.divf %213, %214 : vector<16x1xf32>
    %216 = vector.broadcast %208 : vector<16x1xf32> to vector<16x32xf32>
    %217 = arith.subf %200, %216 : vector<16x32xf32>
    %cst_88 = arith.constant 9.99999974E-6 : f32
    %218 = vector.broadcast %cst_88 : f32 to vector<16x1xf32>
    %219 = arith.addf %215, %218 : vector<16x1xf32>
    %220 = math.rsqrt %219 : vector<16x1xf32>
    %221 = vector.broadcast %220 : vector<16x1xf32> to vector<16x32xf32>
    %222 = arith.mulf %217, %221 : vector<16x32xf32>
    %223 = vector.broadcast %202 : vector<1x32xf32> to vector<16x32xf32>
    %224 = arith.mulf %222, %223 : vector<16x32xf32>
    %225 = vector.broadcast %204 : vector<1x32xf32> to vector<16x32xf32>
    %226 = arith.addf %224, %225 : vector<16x32xf32>
    %c0_89 = arith.constant 0 : index
    %c0_90 = arith.constant 0 : index
    %c0_91 = arith.constant 0 : index
    %227 = vector.load %arg16[%c0_89, %c0_90, %c0_91] : memref<1x32x64xf32, #tpu.memory_space<vmem>>, vector<1x32x64xf32>
    %228 = vector.shape_cast %227 : vector<1x32x64xf32> to vector<32x64xf32>
    %cst_92 = arith.constant dense<0.000000e+00> : vector<16x64xf32>
    %229 = tpu.matmul %226, %228, %cst_92 {dimension_numbers = #tpu.dot_dimension_numbers<[1], [0], [0], [1], [0, 0, 1, 1], [], []>} : vector<16x32xf32>, vector<32x64xf32>, vector<16x64xf32> -> vector<16x64xf32>
    %cst_93 = arith.constant 0.000000e+00 : f32
    %230 = vector.broadcast %cst_93 : f32 to vector<16x64xf32>
    %231 = arith.maximumf %229, %230 : vector<16x64xf32>
    %c0_94 = arith.constant 0 : index
    %c0_95 = arith.constant 0 : index
    %c0_96 = arith.constant 0 : index
    %232 = vector.load %arg17[%c0_94, %c0_95, %c0_96] : memref<1x64x32xf32, #tpu.memory_space<vmem>>, vector<1x64x32xf32>
    %233 = vector.shape_cast %232 : vector<1x64x32xf32> to vector<64x32xf32>
    %cst_97 = arith.constant dense<0.000000e+00> : vector<16x32xf32>
    %234 = tpu.matmul %231, %233, %cst_97 {dimension_numbers = #tpu.dot_dimension_numbers<[1], [0], [0], [1], [0, 0, 1, 1], [], []>} : vector<16x64xf32>, vector<64x32xf32>, vector<16x32xf32> -> vector<16x32xf32>
    %235 = arith.addf %226, %234 : vector<16x32xf32>
    %c0_98 = arith.constant 0 : index
    %c0_99 = arith.constant 0 : index
    %c0_100 = arith.constant 0 : index
    %236 = vector.load %arg14[%c0_98, %c0_99, %c0_100] : memref<1x1x32xf32, #tpu.memory_space<vmem>>, vector<1x1x32xf32>
    %237 = vector.shape_cast %236 : vector<1x1x32xf32> to vector<1x32xf32>
    %c0_101 = arith.constant 0 : index
    %c0_102 = arith.constant 0 : index
    %c0_103 = arith.constant 0 : index
    %238 = vector.load %arg15[%c0_101, %c0_102, %c0_103] : memref<1x1x32xf32, #tpu.memory_space<vmem>>, vector<1x1x32xf32>
    %239 = vector.shape_cast %238 : vector<1x1x32xf32> to vector<1x32xf32>
    %cst_104 = arith.constant dense<0.000000e+00> : vector<16xf32>
    %240 = vector.multi_reduction <add>, %235, %cst_104 [1] : vector<16x32xf32> to vector<16xf32>
    %241 = vector.shape_cast %240 : vector<16xf32> to vector<16x1xf32>
    %cst_105 = arith.constant 3.200000e+01 : f32
    %242 = vector.broadcast %cst_105 : f32 to vector<16x1xf32>
    %243 = arith.divf %241, %242 : vector<16x1xf32>
    %244 = vector.broadcast %243 : vector<16x1xf32> to vector<16x32xf32>
    %245 = arith.subf %235, %244 : vector<16x32xf32>
    %246 = arith.mulf %245, %245 : vector<16x32xf32>
    %cst_106 = arith.constant dense<0.000000e+00> : vector<16xf32>
    %247 = vector.multi_reduction <add>, %246, %cst_106 [1] : vector<16x32xf32> to vector<16xf32>
    %248 = vector.shape_cast %247 : vector<16xf32> to vector<16x1xf32>
    %cst_107 = arith.constant 3.200000e+01 : f32
    %249 = vector.broadcast %cst_107 : f32 to vector<16x1xf32>
    %250 = arith.divf %248, %249 : vector<16x1xf32>
    %251 = vector.broadcast %243 : vector<16x1xf32> to vector<16x32xf32>
    %252 = arith.subf %235, %251 : vector<16x32xf32>
    %cst_108 = arith.constant 9.99999974E-6 : f32
    %253 = vector.broadcast %cst_108 : f32 to vector<16x1xf32>
    %254 = arith.addf %250, %253 : vector<16x1xf32>
    %255 = math.rsqrt %254 : vector<16x1xf32>
    %256 = vector.broadcast %255 : vector<16x1xf32> to vector<16x32xf32>
    %257 = arith.mulf %252, %256 : vector<16x32xf32>
    %258 = vector.broadcast %237 : vector<1x32xf32> to vector<16x32xf32>
    %259 = arith.mulf %257, %258 : vector<16x32xf32>
    %260 = vector.broadcast %239 : vector<1x32xf32> to vector<16x32xf32>
    %261 = arith.addf %259, %260 : vector<16x32xf32>
    %c0_109 = arith.constant 0 : index
    %c0_110 = arith.constant 0 : index
    %262 = vector.load %arg19[%c0_109, %c0_110] : memref<16x32xf32, #tpu.memory_space<vmem>>, vector<16x32xf32>
    tpu.vector_store %arg19[%c0_109, %c0_110], %261 {strides = array<i32>} : memref<16x32xf32, #tpu.memory_space<vmem>>, vector<16x32xf32>,
    %c1_i32 = arith.constant 1 : i32
    %263 = arith.cmpi eq, %arg0, %c1_i32 : i32
    %264 = arith.extui %263 : i1 to i32
    %c0_i32_111 = arith.constant 0 : i32
    %265 = arith.cmpi ne, %264, %c0_i32_111 : i32
    scf.if %265 {
      %c0_112 = arith.constant 0 : index
      %c0_113 = arith.constant 0 : index
      %266 = vector.load %arg18[%c0_112, %c0_113] : memref<16x32xf32, #tpu.memory_space<vmem>>, vector<16x32xf32>
      tpu.vector_store %arg18[%c0_112, %c0_113], %261 {strides = array<i32>} : memref<16x32xf32, #tpu.memory_space<vmem>>, vector<16x32xf32>,
    } else {
    }
    return
  }
  func.func @transform_0(%arg0: i32) -> (i32, i32) {
    %c0_i32 = arith.constant 0 : i32
    %c0_i32_0 = arith.constant 0 : i32
    %c0_i32_1 = arith.constant 0 : i32
    return %c0_i32, %c0_i32_0 : i32, i32
  }
  func.func @transform_1(%arg0: i32) -> (i32, i32) {
    %c0_i32 = arith.constant 0 : i32
    %c0_i32_0 = arith.constant 0 : i32
    %c0_i32_1 = arith.constant 0 : i32
    return %c0_i32, %c0_i32_0 : i32, i32
  }
  func.func @transform_2(%arg0: i32) -> (i32, i32) {
    %c0_i32 = arith.constant 0 : i32
    %c0_i32_0 = arith.constant 0 : i32
    %c0_i32_1 = arith.constant 0 : i32
    return %c0_i32, %c0_i32_0 : i32, i32
  }
  func.func @transform_3(%arg0: i32) -> (i32, i32) {
    %c0_i32 = arith.constant 0 : i32
    %c0_i32_0 = arith.constant 0 : i32
    %c0_i32_1 = arith.constant 0 : i32
    return %c0_i32, %c0_i32_0 : i32, i32
  }
  func.func @transform_4(%arg0: i32) -> (i32, i32, i32) {
    %c0_i32 = arith.constant 0 : i32
    %c0_i32_0 = arith.constant 0 : i32
    %c0_i32_1 = arith.constant 0 : i32
    return %arg0, %c0_i32, %c0_i32_0 : i32, i32, i32
  }
  func.func @transform_5(%arg0: i32) -> (i32, i32, i32) {
    %c0_i32 = arith.constant 0 : i32
    %c0_i32_0 = arith.constant 0 : i32
    %c0_i32_1 = arith.constant 0 : i32
    return %arg0, %c0_i32, %c0_i32_0 : i32, i32, i32
  }
  func.func @transform_6(%arg0: i32) -> (i32, i32, i32) {
    %c0_i32 = arith.constant 0 : i32
    %c0_i32_0 = arith.constant 0 : i32
    %c0_i32_1 = arith.constant 0 : i32
    return %arg0, %c0_i32, %c0_i32_0 : i32, i32, i32
  }
  func.func @transform_7(%arg0: i32) -> (i32, i32, i32) {
    %c0_i32 = arith.constant 0 : i32
    %c0_i32_0 = arith.constant 0 : i32
    %c0_i32_1 = arith.constant 0 : i32
    return %arg0, %c0_i32, %c0_i32_0 : i32, i32, i32
  }
  func.func @transform_8(%arg0: i32) -> (i32, i32, i32) {
    %c0_i32 = arith.constant 0 : i32
    %c0_i32_0 = arith.constant 0 : i32
    %c0_i32_1 = arith.constant 0 : i32
    return %arg0, %c0_i32, %c0_i32_0 : i32, i32, i32
  }
  func.func @transform_9(%arg0: i32) -> (i32, i32, i32) {
    %c0_i32 = arith.constant 0 : i32
    %c0_i32_0 = arith.constant 0 : i32
    %c0_i32_1 = arith.constant 0 : i32
    return %arg0, %c0_i32, %c0_i32_0 : i32, i32, i32
  }
  func.func @transform_10(%arg0: i32) -> (i32, i32, i32) {
    %c0_i32 = arith.constant 0 : i32
    %c0_i32_0 = arith.constant 0 : i32
    %c0_i32_1 = arith.constant 0 : i32
    return %arg0, %c0_i32, %c0_i32_0 : i32, i32, i32
  }
  func.func @transform_11(%arg0: i32) -> (i32, i32, i32) {
    %c0_i32 = arith.constant 0 : i32
    %c0_i32_0 = arith.constant 0 : i32
    %c0_i32_1 = arith.constant 0 : i32
    return %arg0, %c0_i32, %c0_i32_0 : i32, i32, i32
  }
  func.func @transform_12(%arg0: i32) -> (i32, i32, i32) {
    %c0_i32 = arith.constant 0 : i32
    %c0_i32_0 = arith.constant 0 : i32
    %c0_i32_1 = arith.constant 0 : i32
    return %arg0, %c0_i32, %c0_i32_0 : i32, i32, i32
  }
  func.func @transform_13(%arg0: i32) -> (i32, i32, i32) {
    %c0_i32 = arith.constant 0 : i32
    %c0_i32_0 = arith.constant 0 : i32
    %c0_i32_1 = arith.constant 0 : i32
    return %arg0, %c0_i32, %c0_i32_0 : i32, i32, i32
  }
  func.func @transform_14(%arg0: i32) -> (i32, i32, i32) {
    %c0_i32 = arith.constant 0 : i32
    %c0_i32_0 = arith.constant 0 : i32
    %c0_i32_1 = arith.constant 0 : i32
    return %arg0, %c0_i32, %c0_i32_0 : i32, i32, i32
  }
  func.func @transform_15(%arg0: i32) -> (i32, i32, i32) {
    %c0_i32 = arith.constant 0 : i32
    %c0_i32_0 = arith.constant 0 : i32
    %c0_i32_1 = arith.constant 0 : i32
    return %arg0, %c0_i32, %c0_i32_0 : i32, i32, i32
  }
  func.func @transform_16(%arg0: i32) -> (i32, i32, i32) {
    %c0_i32 = arith.constant 0 : i32
    %c0_i32_0 = arith.constant 0 : i32
    %c0_i32_1 = arith.constant 0 : i32
    return %arg0, %c0_i32, %c0_i32_0 : i32, i32, i32
  }
  func.func @transform_17(%arg0: i32) -> (i32, i32) {
    %c0_i32 = arith.constant 0 : i32
    %c0_i32_0 = arith.constant 0 : i32
    %c0_i32_1 = arith.constant 0 : i32
    return %c0_i32, %c0_i32_0 : i32, i32
  }
}

</mosaic_0001>

<llo_original>
// kernel: tpu_custom_call.1
$region0: #{tpu_custom_call.1}
  #allocation0 [shape = 'u32[]', space=smem, size = 0x4, offset = 0x4, fixed_abs, tag = 'smem constant byte address 0x4 - core index']
  #allocation1 [shape = 'u32[144,128]{1,0:T(1,128)}', space=vmem, size = 0x12000, scoped, tag = 'internal scratch']
  #allocation2 [shape = 'f32[16,32]{1,0:T(8,128)}', space=vmem, size = 0x2000, scoped, tag = 'scratch operand']
  %s0 = inlined_call_operand.hbm [shape: f32[16,32], index: 0, kind: input, shape index: {}]
  %s1 = inlined_call_operand.hbm [shape: f32[16,32], index: 1, kind: input, shape index: {}]
  %s2 = inlined_call_operand.hbm [shape: f32[16,16], index: 2, kind: input, shape index: {}]
  %s3 = inlined_call_operand.hbm [shape: f32[16,16], index: 3, kind: input, shape index: {}]
  %s4 = inlined_call_operand.vmem [shape: f32[2,32,96], index: 4, kind: input, shape index: {}]
  %s5 = inlined_call_operand.vmem [shape: f32[2,32,32], index: 5, kind: input, shape index: {}]
  %s6 = inlined_call_operand.vmem [shape: f32[2,32,32], index: 6, kind: input, shape index: {}]
  %s7 = inlined_call_operand.hbm [shape: f32[2,32,64], index: 7, kind: input, shape index: {}]
  %s8 = inlined_call_operand.hbm [shape: f32[2,32,32], index: 8, kind: input, shape index: {}]
  %s9 = inlined_call_operand.vmem [shape: f32[2,1,32], index: 9, kind: input, shape index: {}]
  %s10 = inlined_call_operand.vmem [shape: f32[2,1,32], index: 10, kind: input, shape index: {}]
  %s11 = inlined_call_operand.vmem [shape: f32[2,1,32], index: 11, kind: input, shape index: {}]
  %s12 = inlined_call_operand.vmem [shape: f32[2,1,32], index: 12, kind: input, shape index: {}]
  %s13 = inlined_call_operand.vmem [shape: f32[2,1,32], index: 13, kind: input, shape index: {}]
  %s14 = inlined_call_operand.vmem [shape: f32[2,1,32], index: 14, kind: input, shape index: {}]
  %s15 = inlined_call_operand.hbm [shape: f32[2,32,64], index: 15, kind: input, shape index: {}]
  %s16 = inlined_call_operand.vmem [shape: f32[2,64,32], index: 16, kind: input, shape index: {}]
  %s17 = inlined_call_operand.hbm [shape: f32[16,32], index: 17, kind: output, shape index: {}]
  %s18 = sld [smem:[#allocation0]]
  $region137: #{tpu_custom_call.1} parent=0
    _
  %s20 = ssub.s32 1, %s18
  %s21 = scalar_select 0, %s20, %s18
  $region1: #{tpu_custom_call.1} parent=0
    #allocation3 [shape = 'u8[8192]{0}', space=vmem, size = 0x2000, scoped, tag = 'input window, operand 0, single buffered']
    #allocation4 [shape = 's32[2]{0}', space=sflag, size = 0x8, scoped, tag = 'scoped memory for tpu_custom_call.1']
    #allocation5 [shape = 's32[2]{0}', space=sflag, size = 0x8, scoped, tag = 'scoped memory for tpu_custom_call.1']
    #allocation6 [shape = 'u8[8192]{0}', space=vmem, size = 0x2000, scoped, tag = 'input window, operand 1, single buffered']
    #allocation7 [shape = 's32[1]{0}', space=sflag, size = 0x4, scoped, tag = 'scoped memory for tpu_custom_call.1']
    #allocation8 [shape = 'u8[8192]{0}', space=vmem, size = 0x2000, scoped, tag = 'input window, operand 2, single buffered']
    #allocation9 [shape = 'u8[8192]{0}', space=vmem, size = 0x2000, scoped, tag = 'input window, operand 3, single buffered']
    #allocation10 [shape = 's32[1]{0}', space=sflag, size = 0x4, scoped, tag = 'scoped memory for tpu_custom_call.1']
    #allocation11 [shape = 'u8[32768]{0}', space=vmem, size = 0x8000, scoped, tag = 'input window, operand 7']
    #allocation12 [shape = 'u8[32768]{0}', space=vmem, size = 0x8000, scoped, tag = 'input window, operand 8']
    #allocation13 [shape = 'u8[32768]{0}', space=vmem, size = 0x8000, scoped, tag = 'input window, operand 15']
    #allocation14 [shape = 'u8[8192]{0}', space=vmem, size = 0x2000, scoped, tag = 'output window, operand 0, single buffered']
    %22 = vsyncpa [#allocation4], 0
    %23 = vsyncpa [#allocation7], 0
    %24 = vsyncpa [#allocation10], 0
    %25 = vsyncpa [#allocation5], 0
    loop: start=0, step=1, limit=4
    $region2: #{tpu_custom_call.1} parent=1 // loop_pre_header
      _
    $region3: #{tpu_custom_call.1} parent=1 // loop_header
      %s27 = sphi 0, %s31
      %p28 = scmp.ge.s32.totalorder %s27, 4
      %s35 = sphi 0, %s35
      %s37 = sphi 0, %s35
      %s38 = sphi 0, %s37
      %s52 = sphi 0, %s38
      %s56 = sphi 0, %s56
      %s58 = sphi 0, %s56
      %s59 = sphi 0, %s58
      %s73 = sphi 0, %s59
      %s77 = sphi 0, %s77
      %s79 = sphi 0, %s77
      %s80 = sphi 0, %s79
      %s94 = sphi 0, %s80
      %s98 = sphi 0, %s98
      %s100 = sphi 0, %s98
      %s101 = sphi 0, %s100
      %s115 = sphi 0, %s101
      %s121 = sphi 0, %s123
      %s124 = sphi 0, %s121
      %s125 = sphi 0, %s124
      %s141 = sphi 0, %s125
      %s147 = sphi 0, %s149
      %s150 = sphi 0, %s147
      %s151 = sphi 0, %s150
      %s167 = sphi 0, %s151
      %s173 = sphi 0, %s175
      %s176 = sphi 0, %s173
      %s177 = sphi 0, %s176
      %s193 = sphi 0, %s177
      %s199 = sphi 0, %s201
      %s202 = sphi 0, %s199
      %s203 = sphi 0, %s202
      %s219 = sphi 0, %s203
      %s225 = sphi 0, %s227
      %s228 = sphi 0, %s225
      %s229 = sphi 0, %s228
      %s245 = sphi 0, %s229
      %s251 = sphi 0, %s253
      %s254 = sphi 0, %s251
      %s255 = sphi 0, %s254
      %s271 = sphi 0, %s255
      %s277 = sphi 0, %s279
      %s280 = sphi 0, %s277
      %s281 = sphi 0, %s280
      %s297 = sphi 0, %s281
      %s303 = sphi 0, %s305
      %s306 = sphi 0, %s303
      %s307 = sphi 0, %s306
      %s323 = sphi 0, %s307
      %s329 = sphi 0, %s331
      %s332 = sphi 0, %s329
      %s333 = sphi 0, %s332
      %s349 = sphi 0, %s333
      %s355 = sphi 0, %s357
      %s358 = sphi 0, %s355
      %s359 = sphi 0, %s358
      %s375 = sphi 0, %s359
      %s381 = sphi 0, %s383
      %s384 = sphi 0, %s381
      %s385 = sphi 0, %s384
      %s401 = sphi 0, %s385
      %s407 = sphi 0, %s409
      %s410 = sphi 0, %s407
      %s411 = sphi 0, %s410
      %s427 = sphi 0, %s411
      %s433 = sphi 0, %s435
      %s436 = sphi 0, %s433
      %s437 = sphi 0, %s436
      %s453 = sphi 0, %s437
      %s457 = sphi 0, %s457
      %s459 = sphi 0, %s457
      %s460 = sphi 0, %s459
      %s474 = sphi 0, %s460
    $region4: #{tpu_custom_call.1} parent=1 // loop_header_branch
      %30 = sbr.rel (%p28) target = $region8
    $region5: #{tpu_custom_call.1} parent=1 // loop_body
      %s32 = ssub.s32 %s27, 1
      %s33 = ssub.s32 %s27, 2
      %s34 = sadd.s32 %s27, 1
      %s36 = sadd.s32 %s35, 1
      %p39 = scmp.eq.s32.totalorder %s27, 1
      %p40 = scmp.ne.s32.totalorder %s35, %s37
      %p41 = scmp.eq.s32.totalorder %s27, 0
      %p42 = por %p40, %p41
      %p43 = scmp.ne.s32.totalorder %s35, %s37
      %p44 = scmp.eq.s32.totalorder %s32, 1
      %p45 = por %p43, %p44
      %p46 = scmp.ne.s32.totalorder %s37, %s38
      %p47 = scmp.eq.s32.totalorder %s32, 0
      %p48 = por %p46, %p47
      %p49 = scmp.ne.s32.totalorder %s37, %s38
      %p50 = scmp.eq.s32.totalorder %s33, 1
      %p51 = por %p49, %p50
      %p53 = scmp.ne.s32.totalorder %s38, %s52
      %p54 = scmp.eq.s32.totalorder %s33, 0
      %p55 = por %p53, %p54
      %s57 = sadd.s32 %s56, 1
      %p60 = scmp.eq.s32.totalorder %s27, 1
      %p61 = scmp.ne.s32.totalorder %s56, %s58
      %p62 = scmp.eq.s32.totalorder %s27, 0
      %p63 = por %p61, %p62
      %p64 = scmp.ne.s32.totalorder %s56, %s58
      %p65 = scmp.eq.s32.totalorder %s32, 1
      %p66 = por %p64, %p65
      %p67 = scmp.ne.s32.totalorder %s58, %s59
      %p68 = scmp.eq.s32.totalorder %s32, 0
      %p69 = por %p67, %p68
      %p70 = scmp.ne.s32.totalorder %s58, %s59
      %p71 = scmp.eq.s32.totalorder %s33, 1
      %p72 = por %p70, %p71
      %p74 = scmp.ne.s32.totalorder %s59, %s73
      %p75 = scmp.eq.s32.totalorder %s33, 0
      %p76 = por %p74, %p75
      %s78 = sadd.s32 %s77, 1
      %p81 = scmp.eq.s32.totalorder %s27, 1
      %p82 = scmp.ne.s32.totalorder %s77, %s79
      %p83 = scmp.eq.s32.totalorder %s27, 0
      %p84 = por %p82, %p83
      %p85 = scmp.ne.s32.totalorder %s77, %s79
      %p86 = scmp.eq.s32.totalorder %s32, 1
      %p87 = por %p85, %p86
      %p88 = scmp.ne.s32.totalorder %s79, %s80
      %p89 = scmp.eq.s32.totalorder %s32, 0
      %p90 = por %p88, %p89
      %p91 = scmp.ne.s32.totalorder %s79, %s80
      %p92 = scmp.eq.s32.totalorder %s33, 1
      %p93 = por %p91, %p92
      %p95 = scmp.ne.s32.totalorder %s80, %s94
      %p96 = scmp.eq.s32.totalorder %s33, 0
      %p97 = por %p95, %p96
      %s99 = sadd.s32 %s98, 1
      %p102 = scmp.eq.s32.totalorder %s27, 1
      %p103 = scmp.ne.s32.totalorder %s98, %s100
      %p104 = scmp.eq.s32.totalorder %s27, 0
      %p105 = por %p103, %p104
      %p106 = scmp.ne.s32.totalorder %s98, %s100
      %p107 = scmp.eq.s32.totalorder %s32, 1
      %p108 = por %p106, %p107
      %p109 = scmp.ne.s32.totalorder %s100, %s101
      %p110 = scmp.eq.s32.totalorder %s32, 0
      %p111 = por %p109, %p110
      %p112 = scmp.ne.s32.totalorder %s100, %s101
      %p113 = scmp.eq.s32.totalorder %s33, 1
      %p114 = por %p112, %p113
      %p116 = scmp.ne.s32.totalorder %s101, %s115
      %p117 = scmp.eq.s32.totalorder %s33, 0
      %p118 = por %p116, %p117
      %s119 = ssub.s32 %s27, %s34
      %p120 = scmp.eq.s32.totalorder %s119, 0
      %s122 = sadd.s32 %s121, 1
      %s123 = scalar_select %p120, %s121, %s122
      %p126 = pneg %p120
      %p127 = scmp.eq.s32.totalorder %s27, 1
      %p128 = por %p126, %p127
      %p129 = scmp.ne.s32.totalorder %s121, %s124
      %p130 = scmp.eq.s32.totalorder %s27, 0
      %p131 = por %p129, %p130
      %p132 = scmp.ne.s32.totalorder %s121, %s124
      %p133 = scmp.eq.s32.totalorder %s32, 1
      %p134 = por %p132, %p133
      %p135 = scmp.ne.s32.totalorder %s124, %s125
      %p136 = scmp.eq.s32.totalorder %s32, 0
      %p137 = por %p135, %p136
      %p138 = scmp.ne.s32.totalorder %s124, %s125
      %p139 = scmp.eq.s32.totalorder %s33, 1
      %p140 = por %p138, %p139
      %p142 = scmp.ne.s32.totalorder %s125, %s141
      %p143 = scmp.eq.s32.totalorder %s33, 0
      %p144 = por %p142, %p143
      %s145 = ssub.s32 %s27, %s34
      %p146 = scmp.eq.s32.totalorder %s145, 0
      %s148 = sadd.s32 %s147, 1
      %s149 = scalar_select %p146, %s147, %s148
      %p152 = pneg %p146
      %p153 = scmp.eq.s32.totalorder %s27, 1
      %p154 = por %p152, %p153
      %p155 = scmp.ne.s32.totalorder %s147, %s150
      %p156 = scmp.eq.s32.totalorder %s27, 0
      %p157 = por %p155, %p156
      %p158 = scmp.ne.s32.totalorder %s147, %s150
      %p159 = scmp.eq.s32.totalorder %s32, 1
      %p160 = por %p158, %p159
      %p161 = scmp.ne.s32.totalorder %s150, %s151
      %p162 = scmp.eq.s32.totalorder %s32, 0
      %p163 = por %p161, %p162
      %p164 = scmp.ne.s32.totalorder %s150, %s151
      %p165 = scmp.eq.s32.totalorder %s33, 1
      %p166 = por %p164, %p165
      %p168 = scmp.ne.s32.totalorder %s151, %s167
      %p169 = scmp.eq.s32.totalorder %s33, 0
      %p170 = por %p168, %p169
      %s171 = ssub.s32 %s27, %s34
      %p172 = scmp.eq.s32.totalorder %s171, 0
      %s174 = sadd.s32 %s173, 1
      %s175 = scalar_select %p172, %s173, %s174
      %p178 = pneg %p172
      %p179 = scmp.eq.s32.totalorder %s27, 1
      %p180 = por %p178, %p179
      %p181 = scmp.ne.s32.totalorder %s173, %s176
      %p182 = scmp.eq.s32.totalorder %s27, 0
      %p183 = por %p181, %p182
      %p184 = scmp.ne.s32.totalorder %s173, %s176
      %p185 = scmp.eq.s32.totalorder %s32, 1
      %p186 = por %p184, %p185
      %p187 = scmp.ne.s32.totalorder %s176, %s177
      %p188 = scmp.eq.s32.totalorder %s32, 0
      %p189 = por %p187, %p188
      %p190 = scmp.ne.s32.totalorder %s176, %s177
      %p191 = scmp.eq.s32.totalorder %s33, 1
      %p192 = por %p190, %p191
      %p194 = scmp.ne.s32.totalorder %s177, %s193
      %p195 = scmp.eq.s32.totalorder %s33, 0
      %p196 = por %p194, %p195
      %s197 = ssub.s32 %s27, %s34
      %p198 = scmp.eq.s32.totalorder %s197, 0
      %s200 = sadd.s32 %s199, 1
      %s201 = scalar_select %p198, %s199, %s200
      %p204 = pneg %p198
      %p205 = scmp.eq.s32.totalorder %s27, 1
      %p206 = por %p204, %p205
      %p207 = scmp.ne.s32.totalorder %s199, %s202
      %p208 = scmp.eq.s32.totalorder %s27, 0
      %p209 = por %p207, %p208
      %p210 = scmp.ne.s32.totalorder %s199, %s202
      %p211 = scmp.eq.s32.totalorder %s32, 1
      %p212 = por %p210, %p211
      %p213 = scmp.ne.s32.totalorder %s202, %s203
      %p214 = scmp.eq.s32.totalorder %s32, 0
      %p215 = por %p213, %p214
      %p216 = scmp.ne.s32.totalorder %s202, %s203
      %p217 = scmp.eq.s32.totalorder %s33, 1
      %p218 = por %p216, %p217
      %p220 = scmp.ne.s32.totalorder %s203, %s219
      %p221 = scmp.eq.s32.totalorder %s33, 0
      %p222 = por %p220, %p221
      %s223 = ssub.s32 %s27, %s34
      %p224 = scmp.eq.s32.totalorder %s223, 0
      %s226 = sadd.s32 %s225, 1
      %s227 = scalar_select %p224, %s225, %s226
      %p230 = pneg %p224
      %p231 = scmp.eq.s32.totalorder %s27, 1
      %p232 = por %p230, %p231
      %p233 = scmp.ne.s32.totalorder %s225, %s228
      %p234 = scmp.eq.s32.totalorder %s27, 0
      %p235 = por %p233, %p234
      %p236 = scmp.ne.s32.totalorder %s225, %s228
      %p237 = scmp.eq.s32.totalorder %s32, 1
      %p238 = por %p236, %p237
      %p239 = scmp.ne.s32.totalorder %s228, %s229
      %p240 = scmp.eq.s32.totalorder %s32, 0
      %p241 = por %p239, %p240
      %p242 = scmp.ne.s32.totalorder %s228, %s229
      %p243 = scmp.eq.s32.totalorder %s33, 1
      %p244 = por %p242, %p243
      %p246 = scmp.ne.s32.totalorder %s229, %s245
      %p247 = scmp.eq.s32.totalorder %s33, 0
      %p248 = por %p246, %p247
      %s249 = ssub.s32 %s27, %s34
      %p250 = scmp.eq.s32.totalorder %s249, 0
      %s252 = sadd.s32 %s251, 1
      %s253 = scalar_select %p250, %s251, %s252
      %p256 = pneg %p250
      %p257 = scmp.eq.s32.totalorder %s27, 1
      %p258 = por %p256, %p257
      %p259 = scmp.ne.s32.totalorder %s251, %s254
      %p260 = scmp.eq.s32.totalorder %s27, 0
      %p261 = por %p259, %p260
      %p262 = scmp.ne.s32.totalorder %s251, %s254
      %p263 = scmp.eq.s32.totalorder %s32, 1
      %p264 = por %p262, %p263
      %p265 = scmp.ne.s32.totalorder %s254, %s255
      %p266 = scmp.eq.s32.totalorder %s32, 0
      %p267 = por %p265, %p266
      %p268 = scmp.ne.s32.totalorder %s254, %s255
      %p269 = scmp.eq.s32.totalorder %s33, 1
      %p270 = por %p268, %p269
      %p272 = scmp.ne.s32.totalorder %s255, %s271
      %p273 = scmp.eq.s32.totalorder %s33, 0
      %p274 = por %p272, %p273
      %s275 = ssub.s32 %s27, %s34
      %p276 = scmp.eq.s32.totalorder %s275, 0
      %s278 = sadd.s32 %s277, 1
      %s279 = scalar_select %p276, %s277, %s278
      %p282 = pneg %p276
      %p283 = scmp.eq.s32.totalorder %s27, 1
      %p284 = por %p282, %p283
      %p285 = scmp.ne.s32.totalorder %s277, %s280
      %p286 = scmp.eq.s32.totalorder %s27, 0
      %p287 = por %p285, %p286
      %p288 = scmp.ne.s32.totalorder %s277, %s280
      %p289 = scmp.eq.s32.totalorder %s32, 1
      %p290 = por %p288, %p289
      %p291 = scmp.ne.s32.totalorder %s280, %s281
      %p292 = scmp.eq.s32.totalorder %s32, 0
      %p293 = por %p291, %p292
      %p294 = scmp.ne.s32.totalorder %s280, %s281
      %p295 = scmp.eq.s32.totalorder %s33, 1
      %p296 = por %p294, %p295
      %p298 = scmp.ne.s32.totalorder %s281, %s297
      %p299 = scmp.eq.s32.totalorder %s33, 0
      %p300 = por %p298, %p299
      %s301 = ssub.s32 %s27, %s34
      %p302 = scmp.eq.s32.totalorder %s301, 0
      %s304 = sadd.s32 %s303, 1
      %s305 = scalar_select %p302, %s303, %s304
      %p308 = pneg %p302
      %p309 = scmp.eq.s32.totalorder %s27, 1
      %p310 = por %p308, %p309
      %p311 = scmp.ne.s32.totalorder %s303, %s306
      %p312 = scmp.eq.s32.totalorder %s27, 0
      %p313 = por %p311, %p312
      %p314 = scmp.ne.s32.totalorder %s303, %s306
      %p315 = scmp.eq.s32.totalorder %s32, 1
      %p316 = por %p314, %p315
      %p317 = scmp.ne.s32.totalorder %s306, %s307
      %p318 = scmp.eq.s32.totalorder %s32, 0
      %p319 = por %p317, %p318
      %p320 = scmp.ne.s32.totalorder %s306, %s307
      %p321 = scmp.eq.s32.totalorder %s33, 1
      %p322 = por %p320, %p321
      %p324 = scmp.ne.s32.totalorder %s307, %s323
      %p325 = scmp.eq.s32.totalorder %s33, 0
      %p326 = por %p324, %p325
      %s327 = ssub.s32 %s27, %s34
      %p328 = scmp.eq.s32.totalorder %s327, 0
      %s330 = sadd.s32 %s329, 1
      %s331 = scalar_select %p328, %s329, %s330
      %p334 = pneg %p328
      %p335 = scmp.eq.s32.totalorder %s27, 1
      %p336 = por %p334, %p335
      %p337 = scmp.ne.s32.totalorder %s329, %s332
      %p338 = scmp.eq.s32.totalorder %s27, 0
      %p339 = por %p337, %p338
      %p340 = scmp.ne.s32.totalorder %s329, %s332
      %p341 = scmp.eq.s32.totalorder %s32, 1
      %p342 = por %p340, %p341
      %p343 = scmp.ne.s32.totalorder %s332, %s333
      %p344 = scmp.eq.s32.totalorder %s32, 0
      %p345 = por %p343, %p344
      %p346 = scmp.ne.s32.totalorder %s332, %s333
      %p347 = scmp.eq.s32.totalorder %s33, 1
      %p348 = por %p346, %p347
      %p350 = scmp.ne.s32.totalorder %s333, %s349
      %p351 = scmp.eq.s32.totalorder %s33, 0
      %p352 = por %p350, %p351
      %s353 = ssub.s32 %s27, %s34
      %p354 = scmp.eq.s32.totalorder %s353, 0
      %s356 = sadd.s32 %s355, 1
      %s357 = scalar_select %p354, %s355, %s356
      %p360 = pneg %p354
      %p361 = scmp.eq.s32.totalorder %s27, 1
      %p362 = por %p360, %p361
      %p363 = scmp.ne.s32.totalorder %s355, %s358
      %p364 = scmp.eq.s32.totalorder %s27, 0
      %p365 = por %p363, %p364
      %p366 = scmp.ne.s32.totalorder %s355, %s358
      %p367 = scmp.eq.s32.totalorder %s32, 1
      %p368 = por %p366, %p367
      %p369 = scmp.ne.s32.totalorder %s358, %s359
      %p370 = scmp.eq.s32.totalorder %s32, 0
      %p371 = por %p369, %p370
      %p372 = scmp.ne.s32.totalorder %s358, %s359
      %p373 = scmp.eq.s32.totalorder %s33, 1
      %p374 = por %p372, %p373
      %p376 = scmp.ne.s32.totalorder %s359, %s375
      %p377 = scmp.eq.s32.totalorder %s33, 0
      %p378 = por %p376, %p377
      %s379 = ssub.s32 %s27, %s34
      %p380 = scmp.eq.s32.totalorder %s379, 0
      %s382 = sadd.s32 %s381, 1
      %s383 = scalar_select %p380, %s381, %s382
      %p386 = pneg %p380
      %p387 = scmp.eq.s32.totalorder %s27, 1
      %p388 = por %p386, %p387
      %p389 = scmp.ne.s32.totalorder %s381, %s384
      %p390 = scmp.eq.s32.totalorder %s27, 0
      %p391 = por %p389, %p390
      %p392 = scmp.ne.s32.totalorder %s381, %s384
      %p393 = scmp.eq.s32.totalorder %s32, 1
      %p394 = por %p392, %p393
      %p395 = scmp.ne.s32.totalorder %s384, %s385
      %p396 = scmp.eq.s32.totalorder %s32, 0
      %p397 = por %p395, %p396
      %p398 = scmp.ne.s32.totalorder %s384, %s385
      %p399 = scmp.eq.s32.totalorder %s33, 1
      %p400 = por %p398, %p399
      %p402 = scmp.ne.s32.totalorder %s385, %s401
      %p403 = scmp.eq.s32.totalorder %s33, 0
      %p404 = por %p402, %p403
      %s405 = ssub.s32 %s27, %s34
      %p406 = scmp.eq.s32.totalorder %s405, 0
      %s408 = sadd.s32 %s407, 1
      %s409 = scalar_select %p406, %s407, %s408
      %p412 = pneg %p406
      %p413 = scmp.eq.s32.totalorder %s27, 1
      %p414 = por %p412, %p413
      %p415 = scmp.ne.s32.totalorder %s407, %s410
      %p416 = scmp.eq.s32.totalorder %s27, 0
      %p417 = por %p415, %p416
      %p418 = scmp.ne.s32.totalorder %s407, %s410
      %p419 = scmp.eq.s32.totalorder %s32, 1
      %p420 = por %p418, %p419
      %p421 = scmp.ne.s32.totalorder %s410, %s411
      %p422 = scmp.eq.s32.totalorder %s32, 0
      %p423 = por %p421, %p422
      %p424 = scmp.ne.s32.totalorder %s410, %s411
      %p425 = scmp.eq.s32.totalorder %s33, 1
      %p426 = por %p424, %p425
      %p428 = scmp.ne.s32.totalorder %s411, %s427
      %p429 = scmp.eq.s32.totalorder %s33, 0
      %p430 = por %p428, %p429
      %s431 = ssub.s32 %s27, %s34
      %p432 = scmp.eq.s32.totalorder %s431, 0
      %s434 = sadd.s32 %s433, 1
      %s435 = scalar_select %p432, %s433, %s434
      %p438 = pneg %p432
      %p439 = scmp.eq.s32.totalorder %s27, 1
      %p440 = por %p438, %p439
      %p441 = scmp.ne.s32.totalorder %s433, %s436
      %p442 = scmp.eq.s32.totalorder %s27, 0
      %p443 = por %p441, %p442
      %p444 = scmp.ne.s32.totalorder %s433, %s436
      %p445 = scmp.eq.s32.totalorder %s32, 1
      %p446 = por %p444, %p445
      %p447 = scmp.ne.s32.totalorder %s436, %s437
      %p448 = scmp.eq.s32.totalorder %s32, 0
      %p449 = por %p447, %p448
      %p450 = scmp.ne.s32.totalorder %s436, %s437
      %p451 = scmp.eq.s32.totalorder %s33, 1
      %p452 = por %p450, %p451
      %p454 = scmp.ne.s32.totalorder %s437, %s453
      %p455 = scmp.eq.s32.totalorder %s33, 0
      %p456 = por %p454, %p455
      %s458 = sadd.s32 %s457, 1
      %p461 = scmp.eq.s32.totalorder %s27, 1
      %p462 = scmp.ne.s32.totalorder %s457, %s459
      %p463 = scmp.eq.s32.totalorder %s27, 0
      %p464 = por %p462, %p463
      %p465 = scmp.ne.s32.totalorder %s457, %s459
      %p466 = scmp.eq.s32.totalorder %s32, 1
      %p467 = por %p465, %p466
      %p468 = scmp.ne.s32.totalorder %s459, %s460
      %p469 = scmp.eq.s32.totalorder %s32, 0
      %p470 = por %p468, %p469
      %p471 = scmp.ne.s32.totalorder %s459, %s460
      %p472 = scmp.eq.s32.totalorder %s33, 1
      %p473 = por %p471, %p472
      %p475 = scmp.ne.s32.totalorder %s460, %s474
      %p476 = scmp.eq.s32.totalorder %s33, 0
      %p477 = por %p475, %p476
      %p478 = scmp.le.s32.totalorder 1, %s27
      %p479 = scmp.lt.s32.totalorder %s27, 3
      %p480 = pnand %p478, %p479
      %p481 = pneg %p480
      // Predicated region
      $region9: #{tpu_custom_call.1} parent=5 // pred_check
        _
      $region10: #{tpu_custom_call.1} parent=5 // pred_check_branch
        %483 = sbr.rel (%p480) target = $region12
      $region11: #{tpu_custom_call.1} parent=5 // pred_region
        %s484 = ssub.s32 %s27, 1
        // Predicated region
        $region13: #{tpu_custom_call.1} parent=11 // pred_check
          %p485 = pneg %p48
        $region14: #{tpu_custom_call.1} parent=11 // pred_check_branch
          %487 = sbr.rel (%p485) target = $region16
        $region15: #{tpu_custom_call.1} parent=11 // pred_region
          %s489 = ssub.s32 256, 256
          %490 = vsyncadd [#allocation4], %s489
          %s491 = sshll.u32 [#allocation3], 4
          %s492 = int_to_ptr.vmem [resolvable:$true] %s491
          %497 = dma.hbm_to_vmem [thread:$0]  %s0, 256, %s492, [#allocation4], 128, 128, 8
        $region16: #{tpu_custom_call.1} parent=11 // pred_fallthru
          _
        // Predicated region
        $region17: #{tpu_custom_call.1} parent=11 // pred_check
          %p498 = pneg %p69
        $region18: #{tpu_custom_call.1} parent=11 // pred_check_branch
          %500 = sbr.rel (%p498) target = $region20
        $region19: #{tpu_custom_call.1} parent=11 // pred_region
          %s502 = ssub.s32 256, 256
          %503 = vsyncadd [#allocation7], %s502
          %s504 = sshll.u32 [#allocation6], 4
          %s505 = int_to_ptr.vmem [resolvable:$true] %s504
          %510 = dma.hbm_to_vmem [thread:$0]  %s1, 256, %s505, [#allocation7], 128, 128, 8
        $region20: #{tpu_custom_call.1} parent=11 // pred_fallthru
          _
        // Predicated region
        $region21: #{tpu_custom_call.1} parent=11 // pred_check
          %p511 = pneg %p90
        $region22: #{tpu_custom_call.1} parent=11 // pred_check_branch
          %513 = sbr.rel (%p511) target = $region24
        $region23: #{tpu_custom_call.1} parent=11 // pred_region
          %s515 = ssub.s32 256, 256
          %516 = vsyncadd [#allocation7], %s515
          %s517 = sshll.u32 [#allocation8], 4
          %s518 = int_to_ptr.vmem [resolvable:$true] %s517
          %523 = dma.hbm_to_vmem [thread:$0]  %s2, 256, %s518, [#allocation7], 128, 128, 8
        $region24: #{tpu_custom_call.1} parent=11 // pred_fallthru
          _
        // Predicated region
        $region25: #{tpu_custom_call.1} parent=11 // pred_check
          %p524 = pneg %p111
        $region26: #{tpu_custom_call.1} parent=11 // pred_check_branch
          %526 = sbr.rel (%p524) target = $region28
        $region27: #{tpu_custom_call.1} parent=11 // pred_region
          %s528 = ssub.s32 256, 256
          %529 = vsyncadd [#allocation10], %s528
          %s530 = sshll.u32 [#allocation9], 4
          %s531 = int_to_ptr.vmem [resolvable:$true] %s530
          %536 = dma.hbm_to_vmem [thread:$0]  %s3, 256, %s531, [#allocation10], 128, 128, 8
        $region28: #{tpu_custom_call.1} parent=11 // pred_fallthru
          _
      $region12: #{tpu_custom_call.1} parent=5 // pred_fallthru
        _
      %p537 = scmp.lt.s32.totalorder %s27, 2
      // Predicated region
      $region29: #{tpu_custom_call.1} parent=5 // pred_check
        %p538 = pneg %p537
      $region30: #{tpu_custom_call.1} parent=5 // pred_check_branch
        %540 = sbr.rel (%p538) target = $region32
      $region31: #{tpu_custom_call.1} parent=5 // pred_region
        // Predicated region
        $region33: #{tpu_custom_call.1} parent=31 // pred_check
          %p541 = pneg %p131
        $region34: #{tpu_custom_call.1} parent=31 // pred_check_branch
          %543 = sbr.rel (%p541) target = $region36
        $region35: #{tpu_custom_call.1} parent=31 // pred_region
          %p544 = scmp.lt.s32.totalorder %s27, 1
          %s545 = scalar_select %p544, %s27, 1
          %s546 = smul.addr %s545, 4
          %s547 = smul.addr %s546, 8
          %s548 = scalar_lea.vmem %s4, %s547
        $region36: #{tpu_custom_call.1} parent=31 // pred_fallthru
          _
        // Predicated region
        $region37: #{tpu_custom_call.1} parent=31 // pred_check
          %p549 = pneg %p157
        $region38: #{tpu_custom_call.1} parent=31 // pred_check_branch
          %551 = sbr.rel (%p549) target = $region40
        $region39: #{tpu_custom_call.1} parent=31 // pred_region
          %p552 = scmp.lt.s32.totalorder %s27, 1
          %s553 = scalar_select %p552, %s27, 1
          %s554 = smul.addr %s553, 4
          %s555 = smul.addr %s554, 8
          %s556 = scalar_lea.vmem %s5, %s555
        $region40: #{tpu_custom_call.1} parent=31 // pred_fallthru
          _
        // Predicated region
        $region41: #{tpu_custom_call.1} parent=31 // pred_check
          %p557 = pneg %p183
        $region42: #{tpu_custom_call.1} parent=31 // pred_check_branch
          %559 = sbr.rel (%p557) target = $region44
        $region43: #{tpu_custom_call.1} parent=31 // pred_region
          %p560 = scmp.lt.s32.totalorder %s27, 1
          %s561 = scalar_select %p560, %s27, 1
          %s562 = smul.addr %s561, 4
          %s563 = smul.addr %s562, 8
          %s564 = scalar_lea.vmem %s6, %s563
        $region44: #{tpu_custom_call.1} parent=31 // pred_fallthru
          _
        // Predicated region
        $region45: #{tpu_custom_call.1} parent=31 // pred_check
          %p565 = pneg %p209
        $region46: #{tpu_custom_call.1} parent=31 // pred_check_branch
          %567 = sbr.rel (%p565) target = $region48
        $region47: #{tpu_custom_call.1} parent=31 // pred_region
          %s568 = sand.u32 %s27, 1
          %s569 = scalar_lea.sflag [#allocation4], %s568
          %s570 = sand.u32 %s199, 1
          %s571 = smul.addr %s570, 32
          %s572 = scalar_lea.vmem [#allocation11], %s571
          %s574 = ssub.s32 512, 512
          %575 = vsyncadd %s569, %s574
          %s576 = smul.addr %s27, 4
          %s577 = smul.addr %s576, 128
          %s578 = scalar_lea.hbm %s7, %s577
          %s579 = sshll.u32 %s572, 4
          %s580 = int_to_ptr.vmem [resolvable:$true] %s579
          %585 = dma.hbm_to_vmem [thread:$0]  %s578, 512, %s580, %s569, 128, 128, 8
        $region48: #{tpu_custom_call.1} parent=31 // pred_fallthru
          _
        // Predicated region
        $region49: #{tpu_custom_call.1} parent=31 // pred_check
          %p586 = pneg %p235
        $region50: #{tpu_custom_call.1} parent=31 // pred_check_branch
          %588 = sbr.rel (%p586) target = $region52
        $region51: #{tpu_custom_call.1} parent=31 // pred_region
          %s589 = sand.u32 %s27, 1
          %s590 = scalar_lea.sflag [#allocation4], %s589
          %s591 = sand.u32 %s225, 1
          %s592 = smul.addr %s591, 32
          %s593 = scalar_lea.vmem [#allocation12], %s592
          %s595 = ssub.s32 512, 512
          %596 = vsyncadd %s590, %s595
          %s597 = smul.addr %s27, 4
          %s598 = smul.addr %s597, 128
          %s599 = scalar_lea.hbm %s8, %s598
          %s600 = sshll.u32 %s593, 4
          %s601 = int_to_ptr.vmem [resolvable:$true] %s600
          %606 = dma.hbm_to_vmem [thread:$0]  %s599, 512, %s601, %s590, 128, 128, 8
        $region52: #{tpu_custom_call.1} parent=31 // pred_fallthru
          _
        // Predicated region
        $region53: #{tpu_custom_call.1} parent=31 // pred_check
          %p607 = pneg %p261
        $region54: #{tpu_custom_call.1} parent=31 // pred_check_branch
          %609 = sbr.rel (%p607) target = $region56
        $region55: #{tpu_custom_call.1} parent=31 // pred_region
          %p610 = scmp.lt.s32.totalorder %s27, 1
          %s611 = scalar_select %p610, %s27, 1
          %s612 = scalar_lea.vmem %s9, %s611
        $region56: #{tpu_custom_call.1} parent=31 // pred_fallthru
          _
        // Predicated region
        $region57: #{tpu_custom_call.1} parent=31 // pred_check
          %p613 = pneg %p287
        $region58: #{tpu_custom_call.1} parent=31 // pred_check_branch
          %615 = sbr.rel (%p613) target = $region60
        $region59: #{tpu_custom_call.1} parent=31 // pred_region
          %p616 = scmp.lt.s32.totalorder %s27, 1
          %s617 = scalar_select %p616, %s27, 1
          %s618 = scalar_lea.vmem %s10, %s617
        $region60: #{tpu_custom_call.1} parent=31 // pred_fallthru
          _
        // Predicated region
        $region61: #{tpu_custom_call.1} parent=31 // pred_check
          %p619 = pneg %p313
        $region62: #{tpu_custom_call.1} parent=31 // pred_check_branch
          %621 = sbr.rel (%p619) target = $region64
        $region63: #{tpu_custom_call.1} parent=31 // pred_region
          %p622 = scmp.lt.s32.totalorder %s27, 1
          %s623 = scalar_select %p622, %s27, 1
          %s624 = scalar_lea.vmem %s11, %s623
        $region64: #{tpu_custom_call.1} parent=31 // pred_fallthru
          _
        // Predicated region
        $region65: #{tpu_custom_call.1} parent=31 // pred_check
          %p625 = pneg %p339
        $region66: #{tpu_custom_call.1} parent=31 // pred_check_branch
          %627 = sbr.rel (%p625) target = $region68
        $region67: #{tpu_custom_call.1} parent=31 // pred_region
          %p628 = scmp.lt.s32.totalorder %s27, 1
          %s629 = scalar_select %p628, %s27, 1
          %s630 = scalar_lea.vmem %s12, %s629
        $region68: #{tpu_custom_call.1} parent=31 // pred_fallthru
          _
        // Predicated region
        $region69: #{tpu_custom_call.1} parent=31 // pred_check
          %p631 = pneg %p365
        $region70: #{tpu_custom_call.1} parent=31 // pred_check_branch
          %633 = sbr.rel (%p631) target = $region72
        $region71: #{tpu_custom_call.1} parent=31 // pred_region
          %p634 = scmp.lt.s32.totalorder %s27, 1
          %s635 = scalar_select %p634, %s27, 1
          %s636 = scalar_lea.vmem %s13, %s635
        $region72: #{tpu_custom_call.1} parent=31 // pred_fallthru
          _
        // Predicated region
        $region73: #{tpu_custom_call.1} parent=31 // pred_check
          %p637 = pneg %p391
        $region74: #{tpu_custom_call.1} parent=31 // pred_check_branch
          %639 = sbr.rel (%p637) target = $region76
        $region75: #{tpu_custom_call.1} parent=31 // pred_region
          %p640 = scmp.lt.s32.totalorder %s27, 1
          %s641 = scalar_select %p640, %s27, 1
          %s642 = scalar_lea.vmem %s14, %s641
        $region76: #{tpu_custom_call.1} parent=31 // pred_fallthru
          _
        // Predicated region
        $region77: #{tpu_custom_call.1} parent=31 // pred_check
          %p643 = pneg %p417
        $region78: #{tpu_custom_call.1} parent=31 // pred_check_branch
          %645 = sbr.rel (%p643) target = $region80
        $region79: #{tpu_custom_call.1} parent=31 // pred_region
          %s646 = sand.u32 %s27, 1
          %s647 = scalar_lea.sflag [#allocation4], %s646
          %s648 = sand.u32 %s407, 1
          %s649 = smul.addr %s648, 32
          %s650 = scalar_lea.vmem [#allocation13], %s649
          %s652 = ssub.s32 512, 512
          %653 = vsyncadd %s647, %s652
          %s654 = smul.addr %s27, 4
          %s655 = smul.addr %s654, 128
          %s656 = scalar_lea.hbm %s15, %s655
          %s657 = sshll.u32 %s650, 4
          %s658 = int_to_ptr.vmem [resolvable:$true] %s657
          %663 = dma.hbm_to_vmem [thread:$0]  %s656, 512, %s658, %s647, 128, 128, 8
        $region80: #{tpu_custom_call.1} parent=31 // pred_fallthru
          _
        // Predicated region
        $region81: #{tpu_custom_call.1} parent=31 // pred_check
          %p664 = pneg %p443
        $region82: #{tpu_custom_call.1} parent=31 // pred_check_branch
          %666 = sbr.rel (%p664) target = $region84
        $region83: #{tpu_custom_call.1} parent=31 // pred_region
          %p667 = scmp.lt.s32.totalorder %s27, 1
          %s668 = scalar_select %p667, %s27, 1
          %s669 = smul.addr %s668, 8
          %s670 = smul.addr %s669, 8
          %s671 = scalar_lea.vmem %s16, %s670
        $region84: #{tpu_custom_call.1} parent=31 // pred_fallthru
          _
      $region32: #{tpu_custom_call.1} parent=5 // pred_fallthru
        _
      %p672 = scmp.le.s32.totalorder 1, %s27
      %p673 = scmp.lt.s32.totalorder %s27, 3
      %p674 = pnand %p672, %p673
      %p675 = pneg %p674
      // Predicated region
      $region85: #{tpu_custom_call.1} parent=5 // pred_check
        _
      $region86: #{tpu_custom_call.1} parent=5 // pred_check_branch
        %677 = sbr.rel (%p674) target = $region88
      $region87: #{tpu_custom_call.1} parent=5 // pred_region
        %s678 = ssub.s32 %s27, 1
        // Predicated region
        $region89: #{tpu_custom_call.1} parent=87 // pred_check
          %p679 = pneg %p48
        $region90: #{tpu_custom_call.1} parent=87 // pred_check_branch
          %681 = sbr.rel (%p679) target = $region92
        $region91: #{tpu_custom_call.1} parent=87 // pred_region
          %682 = dma.done [#allocation4], 256
        $region92: #{tpu_custom_call.1} parent=87 // pred_fallthru
          _
        // Predicated region
        $region93: #{tpu_custom_call.1} parent=87 // pred_check
          %p683 = pneg %p69
        $region94: #{tpu_custom_call.1} parent=87 // pred_check_branch
          %685 = sbr.rel (%p683) target = $region96
        $region95: #{tpu_custom_call.1} parent=87 // pred_region
          %686 = dma.done [#allocation7], 256
        $region96: #{tpu_custom_call.1} parent=87 // pred_fallthru
          _
        // Predicated region
        $region97: #{tpu_custom_call.1} parent=87 // pred_check
          %p687 = pneg %p90
        $region98: #{tpu_custom_call.1} parent=87 // pred_check_branch
          %689 = sbr.rel (%p687) target = $region100
        $region99: #{tpu_custom_call.1} parent=87 // pred_region
          %690 = dma.done [#allocation7], 256
        $region100: #{tpu_custom_call.1} parent=87 // pred_fallthru
          _
        // Predicated region
        $region101: #{tpu_custom_call.1} parent=87 // pred_check
          %p691 = pneg %p111
        $region102: #{tpu_custom_call.1} parent=87 // pred_check_branch
          %693 = sbr.rel (%p691) target = $region104
        $region103: #{tpu_custom_call.1} parent=87 // pred_region
          %694 = dma.done [#allocation10], 256
        $region104: #{tpu_custom_call.1} parent=87 // pred_fallthru
          _
        %s695 = sand.u32 %s32, 1
        %s696 = scalar_lea.sflag [#allocation4], %s695
        %s697 = sand.u32 %s202, 1
        %s698 = smul.addr %s697, 32
        %s699 = scalar_lea.vmem [#allocation11], %s698
        // Predicated region
        $region105: #{tpu_custom_call.1} parent=87 // pred_check
          %p700 = pneg %p215
        $region106: #{tpu_custom_call.1} parent=87 // pred_check_branch
          %702 = sbr.rel (%p700) target = $region108
        $region107: #{tpu_custom_call.1} parent=87 // pred_region
          %703 = dma.done %s696, 512
        $region108: #{tpu_custom_call.1} parent=87 // pred_fallthru
          _
        %s704 = sand.u32 %s32, 1
        %s705 = scalar_lea.sflag [#allocation4], %s704
        %s706 = sand.u32 %s228, 1
        %s707 = smul.addr %s706, 32
        %s708 = scalar_lea.vmem [#allocation12], %s707
        // Predicated region
        $region109: #{tpu_custom_call.1} parent=87 // pred_check
          %p709 = pneg %p241
        $region110: #{tpu_custom_call.1} parent=87 // pred_check_branch
          %711 = sbr.rel (%p709) target = $region112
        $region111: #{tpu_custom_call.1} parent=87 // pred_region
          %712 = dma.done %s705, 512
        $region112: #{tpu_custom_call.1} parent=87 // pred_fallthru
          _
        %s713 = sand.u32 %s32, 1
        %s714 = scalar_lea.sflag [#allocation4], %s713
        %s715 = sand.u32 %s410, 1
        %s716 = smul.addr %s715, 32
        %s717 = scalar_lea.vmem [#allocation13], %s716
        // Predicated region
        $region113: #{tpu_custom_call.1} parent=87 // pred_check
          %p718 = pneg %p423
        $region114: #{tpu_custom_call.1} parent=87 // pred_check_branch
          %720 = sbr.rel (%p718) target = $region116
        $region115: #{tpu_custom_call.1} parent=87 // pred_region
          %721 = dma.done %s714, 512
        $region116: #{tpu_custom_call.1} parent=87 // pred_fallthru
          _
        %p722 = pneg %p48
        %p723 = pneg %p45
        %p724 = pneg %p69
        %p725 = pneg %p66
        %p726 = pneg %p90
        %p727 = pneg %p87
        %p728 = pneg %p111
        %p729 = pneg %p108
        %p730 = scmp.lt.s32.totalorder %s32, 1
        %s731 = scalar_select %p730, %s32, 1
        %s732 = smul.addr %s731, 4
        %s733 = smul.addr %s732, 8
        %s734 = scalar_lea.vmem %s4, %s733
        %p735 = pneg %p137
        %p736 = pneg %p134
        %p737 = scmp.lt.s32.totalorder %s32, 1
        %s738 = scalar_select %p737, %s32, 1
        %s739 = smul.addr %s738, 4
        %s740 = smul.addr %s739, 8
        %s741 = scalar_lea.vmem %s5, %s740
        %p742 = pneg %p163
        %p743 = pneg %p160
        %p744 = scmp.lt.s32.totalorder %s32, 1
        %s745 = scalar_select %p744, %s32, 1
        %s746 = smul.addr %s745, 4
        %s747 = smul.addr %s746, 8
        %s748 = scalar_lea.vmem %s6, %s747
        %p749 = pneg %p189
        %p750 = pneg %p186
        %s751 = sand.u32 %s32, 1
        %s752 = scalar_lea.sflag [#allocation4], %s751
        %s753 = sand.u32 %s202, 1
        %s754 = smul.addr %s753, 32
        %s755 = scalar_lea.vmem [#allocation11], %s754
        %p756 = pneg %p215
        %p757 = pneg %p212
        %s758 = sand.u32 %s32, 1
        %s759 = scalar_lea.sflag [#allocation4], %s758
        %s760 = sand.u32 %s228, 1
        %s761 = smul.addr %s760, 32
        %s762 = scalar_lea.vmem [#allocation12], %s761
        %p763 = pneg %p241
        %p764 = pneg %p238
        %p765 = scmp.lt.s32.totalorder %s32, 1
        %s766 = scalar_select %p765, %s32, 1
        %s767 = scalar_lea.vmem %s9, %s766
        %p768 = pneg %p267
        %p769 = pneg %p264
        %p770 = scmp.lt.s32.totalorder %s32, 1
        %s771 = scalar_select %p770, %s32, 1
        %s772 = scalar_lea.vmem %s10, %s771
        %p773 = pneg %p293
        %p774 = pneg %p290
        %p775 = scmp.lt.s32.totalorder %s32, 1
        %s776 = scalar_select %p775, %s32, 1
        %s777 = scalar_lea.vmem %s11, %s776
        %p778 = pneg %p319
        %p779 = pneg %p316
        %p780 = scmp.lt.s32.totalorder %s32, 1
        %s781 = scalar_select %p780, %s32, 1
        %s782 = scalar_lea.vmem %s12, %s781
        %p783 = pneg %p345
        %p784 = pneg %p342
        %p785 = scmp.lt.s32.totalorder %s32, 1
        %s786 = scalar_select %p785, %s32, 1
        %s787 = scalar_lea.vmem %s13, %s786
        %p788 = pneg %p371
        %p789 = pneg %p368
        %p790 = scmp.lt.s32.totalorder %s32, 1
        %s791 = scalar_select %p790, %s32, 1
        %s792 = scalar_lea.vmem %s14, %s791
        %p793 = pneg %p397
        %p794 = pneg %p394
        %s795 = sand.u32 %s32, 1
        %s796 = scalar_lea.sflag [#allocation4], %s795
        %s797 = sand.u32 %s410, 1
        %s798 = smul.addr %s797, 32
        %s799 = scalar_lea.vmem [#allocation13], %s798
        %p800 = pneg %p423
        %p801 = pneg %p420
        %p802 = scmp.lt.s32.totalorder %s32, 1
        %s803 = scalar_select %p802, %s32, 1
        %s804 = smul.addr %s803, 8
        %s805 = smul.addr %s804, 8
        %s806 = scalar_lea.vmem %s16, %s805
        %p807 = pneg %p449
        %p808 = pneg %p446
        %p809 = pneg %p470
        %p810 = pneg %p467
        %p811 = scmp.lt.s32.totalorder %s32, 1
        %s812 = scalar_select %p811, %s32, 1
        %s813 = smul.addr %s812, 4
        %s814 = smul.addr %s813, 8
        %s815 = scalar_lea.vmem %s4, %s814
        %p816 = scmp.lt.s32.totalorder %s32, 1
        %s817 = scalar_select %p816, %s32, 1
        %s818 = smul.addr %s817, 4
        %s819 = smul.addr %s818, 8
        %s820 = scalar_lea.vmem %s5, %s819
        %p821 = scmp.lt.s32.totalorder %s32, 1
        %s822 = scalar_select %p821, %s32, 1
        %s823 = smul.addr %s822, 4
        %s824 = smul.addr %s823, 8
        %s825 = scalar_lea.vmem %s6, %s824
        %p826 = scmp.lt.s32.totalorder %s32, 1
        %s827 = scalar_select %p826, %s32, 1
        %s828 = scalar_lea.vmem %s9, %s827
        %p829 = scmp.lt.s32.totalorder %s32, 1
        %s830 = scalar_select %p829, %s32, 1
        %s831 = scalar_lea.vmem %s10, %s830
        %p832 = scmp.lt.s32.totalorder %s32, 1
        %s833 = scalar_select %p832, %s32, 1
        %s834 = scalar_lea.vmem %s11, %s833
        %p835 = scmp.lt.s32.totalorder %s32, 1
        %s836 = scalar_select %p835, %s32, 1
        %s837 = scalar_lea.vmem %s12, %s836
        %p838 = scmp.lt.s32.totalorder %s32, 1
        %s839 = scalar_select %p838, %s32, 1
        %s840 = scalar_lea.vmem %s13, %s839
        %p841 = scmp.lt.s32.totalorder %s32, 1
        %s842 = scalar_select %p841, %s32, 1
        %s843 = scalar_lea.vmem %s14, %s842
        %p844 = scmp.lt.s32.totalorder %s32, 1
        %s845 = scalar_select %p844, %s32, 1
        %s846 = smul.addr %s845, 8
        %s847 = smul.addr %s846, 8
        %s848 = scalar_lea.vmem %s16, %s847
        %p849 = scmp.eq.s32.totalorder %s32, 0
        // Predicated region
        $region117: #{tpu_custom_call.1} parent=87 // pred_check
          %p850 = pneg %p849
        $region118: #{tpu_custom_call.1} parent=87 // pred_check_branch
          %852 = sbr.rel (%p850) target = $region120
        $region119: #{tpu_custom_call.1} parent=87 // pred_region
          %v853 = vld [vmem:[#allocation3] sm:$0xff]
          %v854 = vld [vmem:[#allocation3 + $0x8] sm:$0xff]
          %vm855 = vcmask 261120
          %856 = vst.msk [vmem:[#allocation2] sm:$0xff] %vm855, %v853
          %857 = vst.msk [vmem:[#allocation2 + $0x8] sm:$0xff] %vm855, %v854
        $region120: #{tpu_custom_call.1} parent=87 // pred_fallthru
          _
        %v858 = vld [vmem:[#allocation2] sm:$0xff]
        %v859 = vld [vmem:[#allocation2 + $0x8] sm:$0xff]
        %v860 = vld [vmem:[#allocation6] sm:$0xff]
        %v861 = vld [vmem:[#allocation6 + $0x8] sm:$0xff]
        %v862 = vld [vmem:[#allocation8] sm:$0xff]
        %v863 = vld [vmem:[#allocation8 + $0x8] sm:$0xff]
        %v864 = vld [vmem:[#allocation9] sm:$0xff]
        %v865 = vld [vmem:[#allocation9 + $0x8] sm:$0xff]
        %v866 = vld [vmem:[%s815] sm:$0xff]
        %v867 = vld [vmem:[%s815 + $0x8] sm:$0xff]
        %v868 = vld [vmem:[%s815 + $0x10] sm:$0xff]
        %v869 = vld [vmem:[%s815 + $0x18] sm:$0xff]
        %vm870 = vcmask 261120
        %v872 = vsel %vm870, %v858, 0
        %v875 = vsel %vm870, %v859, 0
        %877 = vmatprep.subr.mxu0 0.0
        %878 = vmatpush1.msra.mxu0 0.0
        %879 = vmatprep.subr.mxu0 0.0
        %880 = vmatpush1.msra.mxu0 0.0
        %881 = vmatprep.subr.mxu0 0.0
        %882 = vmatpush1.msra.mxu0 0.0
        %883 = vmatprep.subr.mxu0 0.0
        %884 = vmatpush1.msra.mxu0 0.0
        %885 = vmatprep.subr.mxu0 0.0
        %886 = vmatpush1.msra.mxu0 0.0
        %887 = vmatprep.subr.mxu0 0.0
        %888 = vmatpush1.msra.mxu0 0.0
        %889 = vmatprep.subr.mxu0 0.0
        %890 = vmatpush1.msra.mxu0 0.0
        %891 = vmatprep.subr.mxu0 0.0
        %892 = vmatpush1.msra.mxu0 0.0
        %893 = vmatprep.subr.mxu0 0.0
        %894 = vmatpush1.msra.mxu0 0.0
        %895 = vmatprep.subr.mxu0 0.0
        %896 = vmatpush1.msra.mxu0 0.0
        %897 = vmatprep.subr.mxu0 0.0
        %898 = vmatpush1.msra.mxu0 0.0
        %899 = vmatprep.subr.mxu0 0.0
        %900 = vmatpush1.msra.mxu0 0.0
        %901 = vmatprep.subr.mxu0 0.0
        %902 = vmatpush1.msra.mxu0 %v869
        %903 = vmatprep.subr.mxu0 0.0
        %904 = vmatpush1.msra.mxu0 %v868
        %905 = vmatprep.subr.mxu0 0.0
        %906 = vmatpush1.msra.mxu0 %v867
        %907 = vmatprep.subr.mxu0 0.0
        %908 = vmatpush1.msra.mxu0 %v866
        %909 = vmatprep.subr.mxu0 0.0
        %910 = vmatpush2.msra.mxu0 0.0
        %911 = vmatprep.subr.mxu0 0.0
        %912 = vmatpush2.msra.mxu0 0.0
        %913 = vmatprep.subr.mxu0 0.0
        %914 = vmatpush2.msra.mxu0 0.0
        %915 = vmatprep.subr.mxu0 0.0
        %916 = vmatpush2.msra.mxu0 0.0
        %917 = vmatprep.subr.mxu0 0.0
        %918 = vmatpush2.msra.mxu0 0.0
        %919 = vmatprep.subr.mxu0 0.0
        %920 = vmatpush2.msra.mxu0 0.0
        %921 = vmatprep.subr.mxu0 0.0
        %922 = vmatpush2.msra.mxu0 0.0
        %923 = vmatprep.subr.mxu0 0.0
        %924 = vmatpush2.msra.mxu0 0.0
        %925 = vmatprep.subr.mxu0 0.0
        %926 = vmatpush2.msra.mxu0 0.0
        %927 = vmatprep.subr.mxu0 0.0
        %928 = vmatpush2.msra.mxu0 0.0
        %929 = vmatprep.subr.mxu0 0.0
        %930 = vmatpush2.msra.mxu0 0.0
        %931 = vmatprep.subr.mxu0 0.0
        %932 = vmatpush2.msra.mxu0 0.0
        %933 = vmatprep.subr.mxu0 0.0
        %934 = vmatpush2.msra.mxu0 0.0
        %935 = vmatprep.subr.mxu0 0.0
        %936 = vmatpush2.msra.mxu0 0.0
        %937 = vmatprep.subr.mxu0 0.0
        %938 = vmatpush2.msra.mxu0 0.0
        %939 = vmatprep.subr.mxu0 0.0
        %940 = vmatpush2.msra.mxu0 0.0
        %941 = vmatprep.mubr.f32.mxu0 0.0
        %942 = vmatmul.mubr.f32.gmra.mxu0 %v872
        %v943 = vpop.f32.mrf.mxu0
        %v944 = vadd.f32 0.0, %v943
        %v945 = vpop.f32.mrf.mxu0
        %946 = vmatprep.mubr.f32.mxu0 0.0
        %947 = vmatmul.mubr.f32.gmra.mxu0 %v875
        %v948 = vpop.f32.mrf.mxu0
        %v949 = vadd.f32 0.0, %v948
        %v950 = vpop.f32.mrf.mxu0
        %951 = vdwg.mxu0
        %954 = vrot.lane.b32.xlu0 %v944, 96
        %v955 = vpop.permute.xlu0 %954
        %956 = vrot.lane.b32.xlu0 %v949, 96
        %v957 = vpop.permute.xlu0 %956
        %vm958 = vcmask 64512
        %v959 = vsel %vm958, %v944, 0
        %v961 = vsel %vm958, %v949, 0
        %v963 = vsel %vm958, %v955, 0
        %v965 = vsel %vm958, %v957, 0
        %967 = vmatprep.subr.mxu0 0.0
        %968 = vmatpush1.xpose.msra.mxu0 0.0
        %969 = vmatprep.subr.mxu0 0.0
        %970 = vmatpush1.xpose.msra.mxu0 0.0
        %971 = vmatprep.subr.mxu0 0.0
        %972 = vmatpush1.xpose.msra.mxu0 0.0
        %973 = vmatprep.subr.mxu0 0.0
        %974 = vmatpush1.xpose.msra.mxu0 0.0
        %975 = vmatprep.subr.mxu0 0.0
        %976 = vmatpush1.xpose.msra.mxu0 0.0
        %977 = vmatprep.subr.mxu0 0.0
        %978 = vmatpush1.xpose.msra.mxu0 0.0
        %979 = vmatprep.subr.mxu0 0.0
        %980 = vmatpush1.xpose.msra.mxu0 0.0
        %981 = vmatprep.subr.mxu0 0.0
        %982 = vmatpush1.xpose.msra.mxu0 0.0
        %983 = vmatprep.subr.mxu0 0.0
        %984 = vmatpush1.xpose.msra.mxu0 0.0
        %985 = vmatprep.subr.mxu0 0.0
        %986 = vmatpush1.xpose.msra.mxu0 0.0
        %987 = vmatprep.subr.mxu0 0.0
        %988 = vmatpush1.xpose.msra.mxu0 0.0
        %989 = vmatprep.subr.mxu0 0.0
        %990 = vmatpush1.xpose.msra.mxu0 0.0
        %991 = vmatprep.subr.mxu0 0.0
        %992 = vmatpush1.xpose.msra.mxu0 0.0
        %993 = vmatprep.subr.mxu0 0.0
        %994 = vmatpush1.xpose.msra.mxu0 0.0
        %995 = vmatprep.subr.mxu0 0.0
        %996 = vmatpush1.xpose.msra.mxu0 %v965
        %997 = vmatprep.subr.mxu0 0.0
        %998 = vmatpush1.xpose.msra.mxu0 %v963
        %999 = vmatprep.subr.mxu0 0.0
        %1000 = vmatpush2.xpose.msra.mxu0 0.0
        %1001 = vmatprep.subr.mxu0 0.0
        %1002 = vmatpush2.xpose.msra.mxu0 0.0
        %1003 = vmatprep.subr.mxu0 0.0
        %1004 = vmatpush2.xpose.msra.mxu0 0.0
        %1005 = vmatprep.subr.mxu0 0.0
        %1006 = vmatpush2.xpose.msra.mxu0 0.0
        %1007 = vmatprep.subr.mxu0 0.0
        %1008 = vmatpush2.xpose.msra.mxu0 0.0
        %1009 = vmatprep.subr.mxu0 0.0
        %1010 = vmatpush2.xpose.msra.mxu0 0.0
        %1011 = vmatprep.subr.mxu0 0.0
        %1012 = vmatpush2.xpose.msra.mxu0 0.0
        %1013 = vmatprep.subr.mxu0 0.0
        %1014 = vmatpush2.xpose.msra.mxu0 0.0
        %1015 = vmatprep.subr.mxu0 0.0
        %1016 = vmatpush2.xpose.msra.mxu0 0.0
        %1017 = vmatprep.subr.mxu0 0.0
        %1018 = vmatpush2.xpose.msra.mxu0 0.0
        %1019 = vmatprep.subr.mxu0 0.0
        %1020 = vmatpush2.xpose.msra.mxu0 0.0
        %1021 = vmatprep.subr.mxu0 0.0
        %1022 = vmatpush2.xpose.msra.mxu0 0.0
        %1023 = vmatprep.subr.mxu0 0.0
        %1024 = vmatpush2.xpose.msra.mxu0 0.0
        %1025 = vmatprep.subr.mxu0 0.0
        %1026 = vmatpush2.xpose.msra.mxu0 0.0
        %1027 = vmatprep.subr.mxu0 0.0
        %1028 = vmatpush2.xpose.msra.mxu0 0.0
        %1029 = vmatprep.subr.mxu0 0.0
        %1030 = vmatpush2.xpose.msra.mxu0 0.0
        %1031 = vmatprep.mubr.f32.mxu0 0.0
        %1032 = vmatmul.mubr.f32.gmra.mxu0 %v959
        %v1033 = vpop.f32.mrf.mxu0
        %v1034 = vadd.f32 0.0, %v1033
        %v1035 = vpop.f32.mrf.mxu0
        %1036 = vmatprep.mubr.f32.mxu0 0.0
        %1037 = vmatmul.mubr.f32.gmra.mxu0 %v961
        %v1038 = vpop.f32.mrf.mxu0
        %v1039 = vadd.f32 0.0, %v1038
        %v1040 = vpop.f32.mrf.mxu0
        %1041 = vdwg.mxu0
        %v1042 = vmul.f32 %v1034, 0.35355338
        %v1043 = vmul.f32 %v1039, 0.35355338
        %v1044 = vadd.f32 %v1042, %v862
        %v1045 = vadd.f32 %v1043, %v863
        %vm1046 = vcmask 130048
        %v1047 = vsel %vm1046, %v1044, -inf
        %1048 = vmax.xlane.f32.xlu0 %v1047
        %v1049 = vpop.xlane.xlu0 %1048
        %v1050 = vsel %vm1046, %v1045, -inf
        %1051 = vmax.xlane.f32.xlu0 %v1050
        %v1052 = vpop.xlane.xlu0 %1051
        %v1053 = vsub.f32 %v1044, %v1049
        %v1054 = vsub.f32 %v1045, %v1052
        %v1055 = vmul.f32 %v1053, 1.442695
        %v1056 = vpow.pop %v1055
        %v1057 = vmul.f32 %v1054, 1.442695
        %v1058 = vpow.pop %v1057
        %v1059 = vsel %vm1046, %v1056, 0.0
        %1060 = vadd.xlane.f32.xlu0 %v1059
        %v1061 = vpop.xlane.xlu0 %1060
        %v1062 = vsel %vm1046, %v1058, 0.0
        %1063 = vadd.xlane.f32.xlu0 %v1062
        %v1064 = vpop.xlane.xlu0 %1063
        %v1065 = vrcp.pop %v1061
        %v1066 = vrcp.pop %v1064
        %v1067 = vmul.f32 %v1056, %v1065
        %v1068 = vmul.f32 %v1058, %v1066
        %1069 = vrot.lane.b32.xlu0 %v944, 64
        %v1070 = vpop.permute.xlu0 %1069
        %1071 = vrot.lane.b32.xlu0 %v949, 64
        %v1072 = vpop.permute.xlu0 %1071
        %v1076 = vsel %vm1046, %v1067, 0
        %v1079 = vsel %vm1046, %v1068, 0
        %1081 = vmatprep.subr.mxu0 0.0
        %1082 = vmatpush1.msra.mxu0 0.0
        %1083 = vmatprep.subr.mxu0 0.0
        %1084 = vmatpush1.msra.mxu0 0.0
        %1085 = vmatprep.subr.mxu0 0.0
        %1086 = vmatpush1.msra.mxu0 0.0
        %1087 = vmatprep.subr.mxu0 0.0
        %1088 = vmatpush1.msra.mxu0 0.0
        %1089 = vmatprep.subr.mxu0 0.0
        %1090 = vmatpush1.msra.mxu0 0.0
        %1091 = vmatprep.subr.mxu0 0.0
        %1092 = vmatpush1.msra.mxu0 0.0
        %1093 = vmatprep.subr.mxu0 0.0
        %1094 = vmatpush1.msra.mxu0 0.0
        %1095 = vmatprep.subr.mxu0 0.0
        %1096 = vmatpush1.msra.mxu0 0.0
        %1097 = vmatprep.subr.mxu0 0.0
        %1098 = vmatpush1.msra.mxu0 0.0
        %1099 = vmatprep.subr.mxu0 0.0
        %1100 = vmatpush1.msra.mxu0 0.0
        %1101 = vmatprep.subr.mxu0 0.0
        %1102 = vmatpush1.msra.mxu0 0.0
        %1103 = vmatprep.subr.mxu0 0.0
        %1104 = vmatpush1.msra.mxu0 0.0
        %1105 = vmatprep.subr.mxu0 0.0
        %1106 = vmatpush1.msra.mxu0 0.0
        %1107 = vmatprep.subr.mxu0 0.0
        %1108 = vmatpush1.msra.mxu0 0.0
        %1109 = vmatprep.subr.mxu0 0.0
        %1110 = vmatpush1.msra.mxu0 %v1072
        %1111 = vmatprep.subr.mxu0 0.0
        %1112 = vmatpush1.msra.mxu0 %v1070
        %1113 = vmatprep.subr.mxu0 0.0
        %1114 = vmatpush2.msra.mxu0 0.0
        %1115 = vmatprep.subr.mxu0 0.0
        %1116 = vmatpush2.msra.mxu0 0.0
        %1117 = vmatprep.subr.mxu0 0.0
        %1118 = vmatpush2.msra.mxu0 0.0
        %1119 = vmatprep.subr.mxu0 0.0
        %1120 = vmatpush2.msra.mxu0 0.0
        %1121 = vmatprep.subr.mxu0 0.0
        %1122 = vmatpush2.msra.mxu0 0.0
        %1123 = vmatprep.subr.mxu0 0.0
        %1124 = vmatpush2.msra.mxu0 0.0
        %1125 = vmatprep.subr.mxu0 0.0
        %1126 = vmatpush2.msra.mxu0 0.0
        %1127 = vmatprep.subr.mxu0 0.0
        %1128 = vmatpush2.msra.mxu0 0.0
        %1129 = vmatprep.subr.mxu0 0.0
        %1130 = vmatpush2.msra.mxu0 0.0
        %1131 = vmatprep.subr.mxu0 0.0
        %1132 = vmatpush2.msra.mxu0 0.0
        %1133 = vmatprep.subr.mxu0 0.0
        %1134 = vmatpush2.msra.mxu0 0.0
        %1135 = vmatprep.subr.mxu0 0.0
        %1136 = vmatpush2.msra.mxu0 0.0
        %1137 = vmatprep.subr.mxu0 0.0
        %1138 = vmatpush2.msra.mxu0 0.0
        %1139 = vmatprep.subr.mxu0 0.0
        %1140 = vmatpush2.msra.mxu0 0.0
        %1141 = vmatprep.subr.mxu0 0.0
        %1142 = vmatpush2.msra.mxu0 0.0
        %1143 = vmatprep.subr.mxu0 0.0
        %1144 = vmatpush2.msra.mxu0 0.0
        %1145 = vmatprep.mubr.f32.mxu0 0.0
        %1146 = vmatmul.mubr.f32.gmra.mxu0 %v1076
        %v1147 = vpop.f32.mrf.mxu0
        %v1148 = vadd.f32 0.0, %v1147
        %v1149 = vpop.f32.mrf.mxu0
        %1150 = vmatprep.mubr.f32.mxu0 0.0
        %1151 = vmatmul.mubr.f32.gmra.mxu0 %v1079
        %v1152 = vpop.f32.mrf.mxu0
        %v1153 = vadd.f32 0.0, %v1152
        %v1154 = vpop.f32.mrf.mxu0
        %1155 = vdwg.mxu0
        %1156 = vrot.lane.b32.xlu0 %v944, 120
        %v1157 = vpop.permute.xlu0 %1156
        %1158 = vrot.lane.b32.xlu0 %v949, 120
        %v1159 = vpop.permute.xlu0 %1158
        %1160 = vrot.lane.b32.xlu0 %v944, 88
        %v1161 = vpop.permute.xlu0 %1160
        %1162 = vrot.lane.b32.xlu0 %v949, 88
        %v1163 = vpop.permute.xlu0 %1162
        %v1164 = vsel %vm958, %v1157, 0
        %v1166 = vsel %vm958, %v1159, 0
        %v1168 = vsel %vm958, %v1161, 0
        %v1170 = vsel %vm958, %v1163, 0
        %1172 = vmatprep.subr.mxu0 0.0
        %1173 = vmatpush1.xpose.msra.mxu0 0.0
        %1174 = vmatprep.subr.mxu0 0.0
        %1175 = vmatpush1.xpose.msra.mxu0 0.0
        %1176 = vmatprep.subr.mxu0 0.0
        %1177 = vmatpush1.xpose.msra.mxu0 0.0
        %1178 = vmatprep.subr.mxu0 0.0
        %1179 = vmatpush1.xpose.msra.mxu0 0.0
        %1180 = vmatprep.subr.mxu0 0.0
        %1181 = vmatpush1.xpose.msra.mxu0 0.0
        %1182 = vmatprep.subr.mxu0 0.0
        %1183 = vmatpush1.xpose.msra.mxu0 0.0
        %1184 = vmatprep.subr.mxu0 0.0
        %1185 = vmatpush1.xpose.msra.mxu0 0.0
        %1186 = vmatprep.subr.mxu0 0.0
        %1187 = vmatpush1.xpose.msra.mxu0 0.0
        %1188 = vmatprep.subr.mxu0 0.0
        %1189 = vmatpush1.xpose.msra.mxu0 0.0
        %1190 = vmatprep.subr.mxu0 0.0
        %1191 = vmatpush1.xpose.msra.mxu0 0.0
        %1192 = vmatprep.subr.mxu0 0.0
        %1193 = vmatpush1.xpose.msra.mxu0 0.0
        %1194 = vmatprep.subr.mxu0 0.0
        %1195 = vmatpush1.xpose.msra.mxu0 0.0
        %1196 = vmatprep.subr.mxu0 0.0
        %1197 = vmatpush1.xpose.msra.mxu0 0.0
        %1198 = vmatprep.subr.mxu0 0.0
        %1199 = vmatpush1.xpose.msra.mxu0 0.0
        %1200 = vmatprep.subr.mxu0 0.0
        %1201 = vmatpush1.xpose.msra.mxu0 %v1170
        %1202 = vmatprep.subr.mxu0 0.0
        %1203 = vmatpush1.xpose.msra.mxu0 %v1168
        %1204 = vmatprep.subr.mxu0 0.0
        %1205 = vmatpush2.xpose.msra.mxu0 0.0
        %1206 = vmatprep.subr.mxu0 0.0
        %1207 = vmatpush2.xpose.msra.mxu0 0.0
        %1208 = vmatprep.subr.mxu0 0.0
        %1209 = vmatpush2.xpose.msra.mxu0 0.0
        %1210 = vmatprep.subr.mxu0 0.0
        %1211 = vmatpush2.xpose.msra.mxu0 0.0
        %1212 = vmatprep.subr.mxu0 0.0
        %1213 = vmatpush2.xpose.msra.mxu0 0.0
        %1214 = vmatprep.subr.mxu0 0.0
        %1215 = vmatpush2.xpose.msra.mxu0 0.0
        %1216 = vmatprep.subr.mxu0 0.0
        %1217 = vmatpush2.xpose.msra.mxu0 0.0
        %1218 = vmatprep.subr.mxu0 0.0
        %1219 = vmatpush2.xpose.msra.mxu0 0.0
        %1220 = vmatprep.subr.mxu0 0.0
        %1221 = vmatpush2.xpose.msra.mxu0 0.0
        %1222 = vmatprep.subr.mxu0 0.0
        %1223 = vmatpush2.xpose.msra.mxu0 0.0
        %1224 = vmatprep.subr.mxu0 0.0
        %1225 = vmatpush2.xpose.msra.mxu0 0.0
        %1226 = vmatprep.subr.mxu0 0.0
        %1227 = vmatpush2.xpose.msra.mxu0 0.0
        %1228 = vmatprep.subr.mxu0 0.0
        %1229 = vmatpush2.xpose.msra.mxu0 0.0
        %1230 = vmatprep.subr.mxu0 0.0
        %1231 = vmatpush2.xpose.msra.mxu0 0.0
        %1232 = vmatprep.subr.mxu0 0.0
        %1233 = vmatpush2.xpose.msra.mxu0 0.0
        %1234 = vmatprep.subr.mxu0 0.0
        %1235 = vmatpush2.xpose.msra.mxu0 0.0
        %1236 = vmatprep.mubr.f32.mxu0 0.0
        %1237 = vmatmul.mubr.f32.gmra.mxu0 %v1164
        %v1238 = vpop.f32.mrf.mxu0
        %v1239 = vadd.f32 0.0, %v1238
        %v1240 = vpop.f32.mrf.mxu0
        %1241 = vmatprep.mubr.f32.mxu0 0.0
        %1242 = vmatmul.mubr.f32.gmra.mxu0 %v1166
        %v1243 = vpop.f32.mrf.mxu0
        %v1244 = vadd.f32 0.0, %v1243
        %v1245 = vpop.f32.mrf.mxu0
        %1246 = vdwg.mxu0
        %v1247 = vmul.f32 %v1239, 0.35355338
        %v1248 = vmul.f32 %v1244, 0.35355338
        %v1249 = vadd.f32 %v1247, %v862
        %v1250 = vadd.f32 %v1248, %v863
        %v1251 = vsel %vm1046, %v1249, -inf
        %1252 = vmax.xlane.f32.xlu0 %v1251
        %v1253 = vpop.xlane.xlu0 %1252
        %v1254 = vsel %vm1046, %v1250, -inf
        %1255 = vmax.xlane.f32.xlu0 %v1254
        %v1256 = vpop.xlane.xlu0 %1255
        %v1257 = vsub.f32 %v1249, %v1253
        %v1258 = vsub.f32 %v1250, %v1256
        %v1259 = vmul.f32 %v1257, 1.442695
        %v1260 = vpow.pop %v1259
        %v1261 = vmul.f32 %v1258, 1.442695
        %v1262 = vpow.pop %v1261
        %v1263 = vsel %vm1046, %v1260, 0.0
        %1264 = vadd.xlane.f32.xlu0 %v1263
        %v1265 = vpop.xlane.xlu0 %1264
        %v1266 = vsel %vm1046, %v1262, 0.0
        %1267 = vadd.xlane.f32.xlu0 %v1266
        %v1268 = vpop.xlane.xlu0 %1267
        %v1269 = vrcp.pop %v1265
        %v1270 = vrcp.pop %v1268
        %v1271 = vmul.f32 %v1260, %v1269
        %v1272 = vmul.f32 %v1262, %v1270
        %1273 = vrot.lane.b32.xlu0 %v944, 56
        %v1274 = vpop.permute.xlu0 %1273
        %1275 = vrot.lane.b32.xlu0 %v949, 56
        %v1276 = vpop.permute.xlu0 %1275
        %v1280 = vsel %vm1046, %v1271, 0
        %v1283 = vsel %vm1046, %v1272, 0
        %1285 = vmatprep.subr.mxu0 0.0
        %1286 = vmatpush1.msra.mxu0 0.0
        %1287 = vmatprep.subr.mxu0 0.0
        %1288 = vmatpush1.msra.mxu0 0.0
        %1289 = vmatprep.subr.mxu0 0.0
        %1290 = vmatpush1.msra.mxu0 0.0
        %1291 = vmatprep.subr.mxu0 0.0
        %1292 = vmatpush1.msra.mxu0 0.0
        %1293 = vmatprep.subr.mxu0 0.0
        %1294 = vmatpush1.msra.mxu0 0.0
        %1295 = vmatprep.subr.mxu0 0.0
        %1296 = vmatpush1.msra.mxu0 0.0
        %1297 = vmatprep.subr.mxu0 0.0
        %1298 = vmatpush1.msra.mxu0 0.0
        %1299 = vmatprep.subr.mxu0 0.0
        %1300 = vmatpush1.msra.mxu0 0.0
        %1301 = vmatprep.subr.mxu0 0.0
        %1302 = vmatpush1.msra.mxu0 0.0
        %1303 = vmatprep.subr.mxu0 0.0
        %1304 = vmatpush1.msra.mxu0 0.0
        %1305 = vmatprep.subr.mxu0 0.0
        %1306 = vmatpush1.msra.mxu0 0.0
        %1307 = vmatprep.subr.mxu0 0.0
        %1308 = vmatpush1.msra.mxu0 0.0
        %1309 = vmatprep.subr.mxu0 0.0
        %1310 = vmatpush1.msra.mxu0 0.0
        %1311 = vmatprep.subr.mxu0 0.0
        %1312 = vmatpush1.msra.mxu0 0.0
        %1313 = vmatprep.subr.mxu0 0.0
        %1314 = vmatpush1.msra.mxu0 %v1276
        %1315 = vmatprep.subr.mxu0 0.0
        %1316 = vmatpush1.msra.mxu0 %v1274
        %1317 = vmatprep.subr.mxu0 0.0
        %1318 = vmatpush2.msra.mxu0 0.0
        %1319 = vmatprep.subr.mxu0 0.0
        %1320 = vmatpush2.msra.mxu0 0.0
        %1321 = vmatprep.subr.mxu0 0.0
        %1322 = vmatpush2.msra.mxu0 0.0
        %1323 = vmatprep.subr.mxu0 0.0
        %1324 = vmatpush2.msra.mxu0 0.0
        %1325 = vmatprep.subr.mxu0 0.0
        %1326 = vmatpush2.msra.mxu0 0.0
        %1327 = vmatprep.subr.mxu0 0.0
        %1328 = vmatpush2.msra.mxu0 0.0
        %1329 = vmatprep.subr.mxu0 0.0
        %1330 = vmatpush2.msra.mxu0 0.0
        %1331 = vmatprep.subr.mxu0 0.0
        %1332 = vmatpush2.msra.mxu0 0.0
        %1333 = vmatprep.subr.mxu0 0.0
        %1334 = vmatpush2.msra.mxu0 0.0
        %1335 = vmatprep.subr.mxu0 0.0
        %1336 = vmatpush2.msra.mxu0 0.0
        %1337 = vmatprep.subr.mxu0 0.0
        %1338 = vmatpush2.msra.mxu0 0.0
        %1339 = vmatprep.subr.mxu0 0.0
        %1340 = vmatpush2.msra.mxu0 0.0
        %1341 = vmatprep.subr.mxu0 0.0
        %1342 = vmatpush2.msra.mxu0 0.0
        %1343 = vmatprep.subr.mxu0 0.0
        %1344 = vmatpush2.msra.mxu0 0.0
        %1345 = vmatprep.subr.mxu0 0.0
        %1346 = vmatpush2.msra.mxu0 0.0
        %1347 = vmatprep.subr.mxu0 0.0
        %1348 = vmatpush2.msra.mxu0 0.0
        %1349 = vmatprep.mubr.f32.mxu0 0.0
        %1350 = vmatmul.mubr.f32.gmra.mxu0 %v1280
        %v1351 = vpop.f32.mrf.mxu0
        %v1352 = vadd.f32 0.0, %v1351
        %v1353 = vpop.f32.mrf.mxu0
        %1354 = vmatprep.mubr.f32.mxu0 0.0
        %1355 = vmatmul.mubr.f32.gmra.mxu0 %v1283
        %v1356 = vpop.f32.mrf.mxu0
        %v1357 = vadd.f32 0.0, %v1356
        %v1358 = vpop.f32.mrf.mxu0
        %1359 = vdwg.mxu0
        %1360 = vrot.lane.b32.xlu0 %v944, 112
        %v1361 = vpop.permute.xlu0 %1360
        %1362 = vrot.lane.b32.xlu0 %v949, 112
        %v1363 = vpop.permute.xlu0 %1362
        %1364 = vrot.lane.b32.xlu0 %v944, 80
        %v1365 = vpop.permute.xlu0 %1364
        %1366 = vrot.lane.b32.xlu0 %v949, 80
        %v1367 = vpop.permute.xlu0 %1366
        %v1368 = vsel %vm958, %v1361, 0
        %v1370 = vsel %vm958, %v1363, 0
        %v1372 = vsel %vm958, %v1365, 0
        %v1374 = vsel %vm958, %v1367, 0
        %1376 = vmatprep.subr.mxu0 0.0
        %1377 = vmatpush1.xpose.msra.mxu0 0.0
        %1378 = vmatprep.subr.mxu0 0.0
        %1379 = vmatpush1.xpose.msra.mxu0 0.0
        %1380 = vmatprep.subr.mxu0 0.0
        %1381 = vmatpush1.xpose.msra.mxu0 0.0
        %1382 = vmatprep.subr.mxu0 0.0
        %1383 = vmatpush1.xpose.msra.mxu0 0.0
        %1384 = vmatprep.subr.mxu0 0.0
        %1385 = vmatpush1.xpose.msra.mxu0 0.0
        %1386 = vmatprep.subr.mxu0 0.0
        %1387 = vmatpush1.xpose.msra.mxu0 0.0
        %1388 = vmatprep.subr.mxu0 0.0
        %1389 = vmatpush1.xpose.msra.mxu0 0.0
        %1390 = vmatprep.subr.mxu0 0.0
        %1391 = vmatpush1.xpose.msra.mxu0 0.0
        %1392 = vmatprep.subr.mxu0 0.0
        %1393 = vmatpush1.xpose.msra.mxu0 0.0
        %1394 = vmatprep.subr.mxu0 0.0
        %1395 = vmatpush1.xpose.msra.mxu0 0.0
        %1396 = vmatprep.subr.mxu0 0.0
        %1397 = vmatpush1.xpose.msra.mxu0 0.0
        %1398 = vmatprep.subr.mxu0 0.0
        %1399 = vmatpush1.xpose.msra.mxu0 0.0
        %1400 = vmatprep.subr.mxu0 0.0
        %1401 = vmatpush1.xpose.msra.mxu0 0.0
        %1402 = vmatprep.subr.mxu0 0.0
        %1403 = vmatpush1.xpose.msra.mxu0 0.0
        %1404 = vmatprep.subr.mxu0 0.0
        %1405 = vmatpush1.xpose.msra.mxu0 %v1374
        %1406 = vmatprep.subr.mxu0 0.0
        %1407 = vmatpush1.xpose.msra.mxu0 %v1372
        %1408 = vmatprep.subr.mxu0 0.0
        %1409 = vmatpush2.xpose.msra.mxu0 0.0
        %1410 = vmatprep.subr.mxu0 0.0
        %1411 = vmatpush2.xpose.msra.mxu0 0.0
        %1412 = vmatprep.subr.mxu0 0.0
        %1413 = vmatpush2.xpose.msra.mxu0 0.0
        %1414 = vmatprep.subr.mxu0 0.0
        %1415 = vmatpush2.xpose.msra.mxu0 0.0
        %1416 = vmatprep.subr.mxu0 0.0
        %1417 = vmatpush2.xpose.msra.mxu0 0.0
        %1418 = vmatprep.subr.mxu0 0.0
        %1419 = vmatpush2.xpose.msra.mxu0 0.0
        %1420 = vmatprep.subr.mxu0 0.0
        %1421 = vmatpush2.xpose.msra.mxu0 0.0
        %1422 = vmatprep.subr.mxu0 0.0
        %1423 = vmatpush2.xpose.msra.mxu0 0.0
        %1424 = vmatprep.subr.mxu0 0.0
        %1425 = vmatpush2.xpose.msra.mxu0 0.0
        %1426 = vmatprep.subr.mxu0 0.0
        %1427 = vmatpush2.xpose.msra.mxu0 0.0
        %1428 = vmatprep.subr.mxu0 0.0
        %1429 = vmatpush2.xpose.msra.mxu0 0.0
        %1430 = vmatprep.subr.mxu0 0.0
        %1431 = vmatpush2.xpose.msra.mxu0 0.0
        %1432 = vmatprep.subr.mxu0 0.0
        %1433 = vmatpush2.xpose.msra.mxu0 0.0
        %1434 = vmatprep.subr.mxu0 0.0
        %1435 = vmatpush2.xpose.msra.mxu0 0.0
        %1436 = vmatprep.subr.mxu0 0.0
        %1437 = vmatpush2.xpose.msra.mxu0 0.0
        %1438 = vmatprep.subr.mxu0 0.0
        %1439 = vmatpush2.xpose.msra.mxu0 0.0
        %1440 = vmatprep.mubr.f32.mxu0 0.0
        %1441 = vmatmul.mubr.f32.gmra.mxu0 %v1368
        %v1442 = vpop.f32.mrf.mxu0
        %v1443 = vadd.f32 0.0, %v1442
        %v1444 = vpop.f32.mrf.mxu0
        %1445 = vmatprep.mubr.f32.mxu0 0.0
        %1446 = vmatmul.mubr.f32.gmra.mxu0 %v1370
        %v1447 = vpop.f32.mrf.mxu0
        %v1448 = vadd.f32 0.0, %v1447
        %v1449 = vpop.f32.mrf.mxu0
        %1450 = vdwg.mxu0
        %v1451 = vmul.f32 %v1443, 0.35355338
        %v1452 = vmul.f32 %v1448, 0.35355338
        %v1453 = vadd.f32 %v1451, %v862
        %v1454 = vadd.f32 %v1452, %v863
        %v1455 = vsel %vm1046, %v1453, -inf
        %1456 = vmax.xlane.f32.xlu0 %v1455
        %v1457 = vpop.xlane.xlu0 %1456
        %v1458 = vsel %vm1046, %v1454, -inf
        %1459 = vmax.xlane.f32.xlu0 %v1458
        %v1460 = vpop.xlane.xlu0 %1459
        %v1461 = vsub.f32 %v1453, %v1457
        %v1462 = vsub.f32 %v1454, %v1460
        %v1463 = vmul.f32 %v1461, 1.442695
        %v1464 = vpow.pop %v1463
        %v1465 = vmul.f32 %v1462, 1.442695
        %v1466 = vpow.pop %v1465
        %v1467 = vsel %vm1046, %v1464, 0.0
        %1468 = vadd.xlane.f32.xlu0 %v1467
        %v1469 = vpop.xlane.xlu0 %1468
        %v1470 = vsel %vm1046, %v1466, 0.0
        %1471 = vadd.xlane.f32.xlu0 %v1470
        %v1472 = vpop.xlane.xlu0 %1471
        %v1473 = vrcp.pop %v1469
        %v1474 = vrcp.pop %v1472
        %v1475 = vmul.f32 %v1464, %v1473
        %v1476 = vmul.f32 %v1466, %v1474
        %1477 = vrot.lane.b32.xlu0 %v944, 48
        %v1478 = vpop.permute.xlu0 %1477
        %1479 = vrot.lane.b32.xlu0 %v949, 48
        %v1480 = vpop.permute.xlu0 %1479
        %v1484 = vsel %vm1046, %v1475, 0
        %v1487 = vsel %vm1046, %v1476, 0
        %1489 = vmatprep.subr.mxu0 0.0
        %1490 = vmatpush1.msra.mxu0 0.0
        %1491 = vmatprep.subr.mxu0 0.0
        %1492 = vmatpush1.msra.mxu0 0.0
        %1493 = vmatprep.subr.mxu0 0.0
        %1494 = vmatpush1.msra.mxu0 0.0
        %1495 = vmatprep.subr.mxu0 0.0
        %1496 = vmatpush1.msra.mxu0 0.0
        %1497 = vmatprep.subr.mxu0 0.0
        %1498 = vmatpush1.msra.mxu0 0.0
        %1499 = vmatprep.subr.mxu0 0.0
        %1500 = vmatpush1.msra.mxu0 0.0
        %1501 = vmatprep.subr.mxu0 0.0
        %1502 = vmatpush1.msra.mxu0 0.0
        %1503 = vmatprep.subr.mxu0 0.0
        %1504 = vmatpush1.msra.mxu0 0.0
        %1505 = vmatprep.subr.mxu0 0.0
        %1506 = vmatpush1.msra.mxu0 0.0
        %1507 = vmatprep.subr.mxu0 0.0
        %1508 = vmatpush1.msra.mxu0 0.0
        %1509 = vmatprep.subr.mxu0 0.0
        %1510 = vmatpush1.msra.mxu0 0.0
        %1511 = vmatprep.subr.mxu0 0.0
        %1512 = vmatpush1.msra.mxu0 0.0
        %1513 = vmatprep.subr.mxu0 0.0
        %1514 = vmatpush1.msra.mxu0 0.0
        %1515 = vmatprep.subr.mxu0 0.0
        %1516 = vmatpush1.msra.mxu0 0.0
        %1517 = vmatprep.subr.mxu0 0.0
        %1518 = vmatpush1.msra.mxu0 %v1480
        %1519 = vmatprep.subr.mxu0 0.0
        %1520 = vmatpush1.msra.mxu0 %v1478
        %1521 = vmatprep.subr.mxu0 0.0
        %1522 = vmatpush2.msra.mxu0 0.0
        %1523 = vmatprep.subr.mxu0 0.0
        %1524 = vmatpush2.msra.mxu0 0.0
        %1525 = vmatprep.subr.mxu0 0.0
        %1526 = vmatpush2.msra.mxu0 0.0
        %1527 = vmatprep.subr.mxu0 0.0
        %1528 = vmatpush2.msra.mxu0 0.0
        %1529 = vmatprep.subr.mxu0 0.0
        %1530 = vmatpush2.msra.mxu0 0.0
        %1531 = vmatprep.subr.mxu0 0.0
        %1532 = vmatpush2.msra.mxu0 0.0
        %1533 = vmatprep.subr.mxu0 0.0
        %1534 = vmatpush2.msra.mxu0 0.0
        %1535 = vmatprep.subr.mxu0 0.0
        %1536 = vmatpush2.msra.mxu0 0.0
        %1537 = vmatprep.subr.mxu0 0.0
        %1538 = vmatpush2.msra.mxu0 0.0
        %1539 = vmatprep.subr.mxu0 0.0
        %1540 = vmatpush2.msra.mxu0 0.0
        %1541 = vmatprep.subr.mxu0 0.0
        %1542 = vmatpush2.msra.mxu0 0.0
        %1543 = vmatprep.subr.mxu0 0.0
        %1544 = vmatpush2.msra.mxu0 0.0
        %1545 = vmatprep.subr.mxu0 0.0
        %1546 = vmatpush2.msra.mxu0 0.0
        %1547 = vmatprep.subr.mxu0 0.0
        %1548 = vmatpush2.msra.mxu0 0.0
        %1549 = vmatprep.subr.mxu0 0.0
        %1550 = vmatpush2.msra.mxu0 0.0
        %1551 = vmatprep.subr.mxu0 0.0
        %1552 = vmatpush2.msra.mxu0 0.0
        %1553 = vmatprep.mubr.f32.mxu0 0.0
        %1554 = vmatmul.mubr.f32.gmra.mxu0 %v1484
        %v1555 = vpop.f32.mrf.mxu0
        %v1556 = vadd.f32 0.0, %v1555
        %v1557 = vpop.f32.mrf.mxu0
        %1558 = vmatprep.mubr.f32.mxu0 0.0
        %1559 = vmatmul.mubr.f32.gmra.mxu0 %v1487
        %v1560 = vpop.f32.mrf.mxu0
        %v1561 = vadd.f32 0.0, %v1560
        %v1562 = vpop.f32.mrf.mxu0
        %1563 = vdwg.mxu0
        %1564 = vrot.lane.b32.xlu0 %v944, 104
        %v1565 = vpop.permute.xlu0 %1564
        %1566 = vrot.lane.b32.xlu0 %v949, 104
        %v1567 = vpop.permute.xlu0 %1566
        %1568 = vrot.lane.b32.xlu0 %v944, 72
        %v1569 = vpop.permute.xlu0 %1568
        %1570 = vrot.lane.b32.xlu0 %v949, 72
        %v1571 = vpop.permute.xlu0 %1570
        %v1572 = vsel %vm958, %v1565, 0
        %v1574 = vsel %vm958, %v1567, 0
        %v1576 = vsel %vm958, %v1569, 0
        %v1578 = vsel %vm958, %v1571, 0
        %1580 = vmatprep.subr.mxu0 0.0
        %1581 = vmatpush1.xpose.msra.mxu0 0.0
        %1582 = vmatprep.subr.mxu0 0.0
        %1583 = vmatpush1.xpose.msra.mxu0 0.0
        %1584 = vmatprep.subr.mxu0 0.0
        %1585 = vmatpush1.xpose.msra.mxu0 0.0
        %1586 = vmatprep.subr.mxu0 0.0
        %1587 = vmatpush1.xpose.msra.mxu0 0.0
        %1588 = vmatprep.subr.mxu0 0.0
        %1589 = vmatpush1.xpose.msra.mxu0 0.0
        %1590 = vmatprep.subr.mxu0 0.0
        %1591 = vmatpush1.xpose.msra.mxu0 0.0
        %1592 = vmatprep.subr.mxu0 0.0
        %1593 = vmatpush1.xpose.msra.mxu0 0.0
        %1594 = vmatprep.subr.mxu0 0.0
        %1595 = vmatpush1.xpose.msra.mxu0 0.0
        %1596 = vmatprep.subr.mxu0 0.0
        %1597 = vmatpush1.xpose.msra.mxu0 0.0
        %1598 = vmatprep.subr.mxu0 0.0
        %1599 = vmatpush1.xpose.msra.mxu0 0.0
        %1600 = vmatprep.subr.mxu0 0.0
        %1601 = vmatpush1.xpose.msra.mxu0 0.0
        %1602 = vmatprep.subr.mxu0 0.0
        %1603 = vmatpush1.xpose.msra.mxu0 0.0
        %1604 = vmatprep.subr.mxu0 0.0
        %1605 = vmatpush1.xpose.msra.mxu0 0.0
        %1606 = vmatprep.subr.mxu0 0.0
        %1607 = vmatpush1.xpose.msra.mxu0 0.0
        %1608 = vmatprep.subr.mxu0 0.0
        %1609 = vmatpush1.xpose.msra.mxu0 %v1578
        %1610 = vmatprep.subr.mxu0 0.0
        %1611 = vmatpush1.xpose.msra.mxu0 %v1576
        %1612 = vmatprep.subr.mxu0 0.0
        %1613 = vmatpush2.xpose.msra.mxu0 0.0
        %1614 = vmatprep.subr.mxu0 0.0
        %1615 = vmatpush2.xpose.msra.mxu0 0.0
        %1616 = vmatprep.subr.mxu0 0.0
        %1617 = vmatpush2.xpose.msra.mxu0 0.0
        %1618 = vmatprep.subr.mxu0 0.0
        %1619 = vmatpush2.xpose.msra.mxu0 0.0
        %1620 = vmatprep.subr.mxu0 0.0
        %1621 = vmatpush2.xpose.msra.mxu0 0.0
        %1622 = vmatprep.subr.mxu0 0.0
        %1623 = vmatpush2.xpose.msra.mxu0 0.0
        %1624 = vmatprep.subr.mxu0 0.0
        %1625 = vmatpush2.xpose.msra.mxu0 0.0
        %1626 = vmatprep.subr.mxu0 0.0
        %1627 = vmatpush2.xpose.msra.mxu0 0.0
        %1628 = vmatprep.subr.mxu0 0.0
        %1629 = vmatpush2.xpose.msra.mxu0 0.0
        %1630 = vmatprep.subr.mxu0 0.0
        %1631 = vmatpush2.xpose.msra.mxu0 0.0
        %1632 = vmatprep.subr.mxu0 0.0
        %1633 = vmatpush2.xpose.msra.mxu0 0.0
        %1634 = vmatprep.subr.mxu0 0.0
        %1635 = vmatpush2.xpose.msra.mxu0 0.0
        %1636 = vmatprep.subr.mxu0 0.0
        %1637 = vmatpush2.xpose.msra.mxu0 0.0
        %1638 = vmatprep.subr.mxu0 0.0
        %1639 = vmatpush2.xpose.msra.mxu0 0.0
        %1640 = vmatprep.subr.mxu0 0.0
        %1641 = vmatpush2.xpose.msra.mxu0 0.0
        %1642 = vmatprep.subr.mxu0 0.0
        %1643 = vmatpush2.xpose.msra.mxu0 0.0
        %1644 = vmatprep.mubr.f32.mxu0 0.0
        %1645 = vmatmul.mubr.f32.gmra.mxu0 %v1572
        %v1646 = vpop.f32.mrf.mxu0
        %v1647 = vadd.f32 0.0, %v1646
        %v1648 = vpop.f32.mrf.mxu0
        %1649 = vmatprep.mubr.f32.mxu0 0.0
        %1650 = vmatmul.mubr.f32.gmra.mxu0 %v1574
        %v1651 = vpop.f32.mrf.mxu0
        %v1652 = vadd.f32 0.0, %v1651
        %v1653 = vpop.f32.mrf.mxu0
        %1654 = vdwg.mxu0
        %v1655 = vmul.f32 %v1647, 0.35355338
        %v1656 = vmul.f32 %v1652, 0.35355338
        %v1657 = vadd.f32 %v1655, %v862
        %v1658 = vadd.f32 %v1656, %v863
        %v1659 = vsel %vm1046, %v1657, -inf
        %1660 = vmax.xlane.f32.xlu0 %v1659
        %v1661 = vpop.xlane.xlu0 %1660
        %v1662 = vsel %vm1046, %v1658, -inf
        %1663 = vmax.xlane.f32.xlu0 %v1662
        %v1664 = vpop.xlane.xlu0 %1663
        %v1665 = vsub.f32 %v1657, %v1661
        %v1666 = vsub.f32 %v1658, %v1664
        %v1667 = vmul.f32 %v1665, 1.442695
        %v1668 = vpow.pop %v1667
        %v1669 = vmul.f32 %v1666, 1.442695
        %v1670 = vpow.pop %v1669
        %v1671 = vsel %vm1046, %v1668, 0.0
        %1672 = vadd.xlane.f32.xlu0 %v1671
        %v1673 = vpop.xlane.xlu0 %1672
        %v1674 = vsel %vm1046, %v1670, 0.0
        %1675 = vadd.xlane.f32.xlu0 %v1674
        %v1676 = vpop.xlane.xlu0 %1675
        %v1677 = vrcp.pop %v1673
        %v1678 = vrcp.pop %v1676
        %v1679 = vmul.f32 %v1668, %v1677
        %v1680 = vmul.f32 %v1670, %v1678
        %1681 = vrot.lane.b32.xlu0 %v944, 40
        %v1682 = vpop.permute.xlu0 %1681
        %1683 = vrot.lane.b32.xlu0 %v949, 40
        %v1684 = vpop.permute.xlu0 %1683
        %v1688 = vsel %vm1046, %v1679, 0
        %v1691 = vsel %vm1046, %v1680, 0
        %1693 = vmatprep.subr.mxu0 0.0
        %1694 = vmatpush1.msra.mxu0 0.0
        %1695 = vmatprep.subr.mxu0 0.0
        %1696 = vmatpush1.msra.mxu0 0.0
        %1697 = vmatprep.subr.mxu0 0.0
        %1698 = vmatpush1.msra.mxu0 0.0
        %1699 = vmatprep.subr.mxu0 0.0
        %1700 = vmatpush1.msra.mxu0 0.0
        %1701 = vmatprep.subr.mxu0 0.0
        %1702 = vmatpush1.msra.mxu0 0.0
        %1703 = vmatprep.subr.mxu0 0.0
        %1704 = vmatpush1.msra.mxu0 0.0
        %1705 = vmatprep.subr.mxu0 0.0
        %1706 = vmatpush1.msra.mxu0 0.0
        %1707 = vmatprep.subr.mxu0 0.0
        %1708 = vmatpush1.msra.mxu0 0.0
        %1709 = vmatprep.subr.mxu0 0.0
        %1710 = vmatpush1.msra.mxu0 0.0
        %1711 = vmatprep.subr.mxu0 0.0
        %1712 = vmatpush1.msra.mxu0 0.0
        %1713 = vmatprep.subr.mxu0 0.0
        %1714 = vmatpush1.msra.mxu0 0.0
        %1715 = vmatprep.subr.mxu0 0.0
        %1716 = vmatpush1.msra.mxu0 0.0
        %1717 = vmatprep.subr.mxu0 0.0
        %1718 = vmatpush1.msra.mxu0 0.0
        %1719 = vmatprep.subr.mxu0 0.0
        %1720 = vmatpush1.msra.mxu0 0.0
        %1721 = vmatprep.subr.mxu0 0.0
        %1722 = vmatpush1.msra.mxu0 %v1684
        %1723 = vmatprep.subr.mxu0 0.0
        %1724 = vmatpush1.msra.mxu0 %v1682
        %1725 = vmatprep.subr.mxu0 0.0
        %1726 = vmatpush2.msra.mxu0 0.0
        %1727 = vmatprep.subr.mxu0 0.0
        %1728 = vmatpush2.msra.mxu0 0.0
        %1729 = vmatprep.subr.mxu0 0.0
        %1730 = vmatpush2.msra.mxu0 0.0
        %1731 = vmatprep.subr.mxu0 0.0
        %1732 = vmatpush2.msra.mxu0 0.0
        %1733 = vmatprep.subr.mxu0 0.0
        %1734 = vmatpush2.msra.mxu0 0.0
        %1735 = vmatprep.subr.mxu0 0.0
        %1736 = vmatpush2.msra.mxu0 0.0
        %1737 = vmatprep.subr.mxu0 0.0
        %1738 = vmatpush2.msra.mxu0 0.0
        %1739 = vmatprep.subr.mxu0 0.0
        %1740 = vmatpush2.msra.mxu0 0.0
        %1741 = vmatprep.subr.mxu0 0.0
        %1742 = vmatpush2.msra.mxu0 0.0
        %1743 = vmatprep.subr.mxu0 0.0
        %1744 = vmatpush2.msra.mxu0 0.0
        %1745 = vmatprep.subr.mxu0 0.0
        %1746 = vmatpush2.msra.mxu0 0.0
        %1747 = vmatprep.subr.mxu0 0.0
        %1748 = vmatpush2.msra.mxu0 0.0
        %1749 = vmatprep.subr.mxu0 0.0
        %1750 = vmatpush2.msra.mxu0 0.0
        %1751 = vmatprep.subr.mxu0 0.0
        %1752 = vmatpush2.msra.mxu0 0.0
        %1753 = vmatprep.subr.mxu0 0.0
        %1754 = vmatpush2.msra.mxu0 0.0
        %1755 = vmatprep.subr.mxu0 0.0
        %1756 = vmatpush2.msra.mxu0 0.0
        %1757 = vmatprep.mubr.f32.mxu0 0.0
        %1758 = vmatmul.mubr.f32.gmra.mxu0 %v1688
        %v1759 = vpop.f32.mrf.mxu0
        %v1760 = vadd.f32 0.0, %v1759
        %v1761 = vpop.f32.mrf.mxu0
        %1762 = vmatprep.mubr.f32.mxu0 0.0
        %1763 = vmatmul.mubr.f32.gmra.mxu0 %v1691
        %v1764 = vpop.f32.mrf.mxu0
        %v1765 = vadd.f32 0.0, %v1764
        %v1766 = vpop.f32.mrf.mxu0
        %1767 = vdwg.mxu0
        %1770 = vrot.lane.b32.xlu0 %v1352, 8
        %v1771 = vpop.permute.xlu0 %1770
        %1772 = vrot.lane.b32.xlu0 %v1357, 8
        %v1773 = vpop.permute.xlu0 %1772
        %1778 = vrot.lane.b32.xlu0 %v1556, 16
        %v1779 = vpop.permute.xlu0 %1778
        %1780 = vrot.lane.b32.xlu0 %v1561, 16
        %v1781 = vpop.permute.xlu0 %1780
        %1786 = vrot.lane.b32.xlu0 %v1760, 24
        %v1787 = vpop.permute.xlu0 %1786
        %1788 = vrot.lane.b32.xlu0 %v1765, 24
        %v1789 = vpop.permute.xlu0 %1788
        %v1792 = vsel %vm958, %v1148, %v1771
        %v1793 = vsel %vm958, %v1153, %v1773
        %v1794 = vsel %vm1046, %v1792, %v1779
        %v1795 = vsel %vm1046, %v1793, %v1781
        %vm1796 = vcmask 195584
        %v1797 = vsel %vm1796, %v1794, %v1787
        %v1798 = vsel %vm1796, %v1795, %v1789
        %v1799 = vld [vmem:[%s820] sm:$0xff]
        %v1800 = vld [vmem:[%s820 + $0x8] sm:$0xff]
        %v1801 = vld [vmem:[%s820 + $0x10] sm:$0xff]
        %v1802 = vld [vmem:[%s820 + $0x18] sm:$0xff]
        %v1804 = vsel %vm870, %v1797, 0
        %v1807 = vsel %vm870, %v1798, 0
        %1809 = vmatprep.subr.mxu0 0.0
        %1810 = vmatpush1.msra.mxu0 0.0
        %1811 = vmatprep.subr.mxu0 0.0
        %1812 = vmatpush1.msra.mxu0 0.0
        %1813 = vmatprep.subr.mxu0 0.0
        %1814 = vmatpush1.msra.mxu0 0.0
        %1815 = vmatprep.subr.mxu0 0.0
        %1816 = vmatpush1.msra.mxu0 0.0
        %1817 = vmatprep.subr.mxu0 0.0
        %1818 = vmatpush1.msra.mxu0 0.0
        %1819 = vmatprep.subr.mxu0 0.0
        %1820 = vmatpush1.msra.mxu0 0.0
        %1821 = vmatprep.subr.mxu0 0.0
        %1822 = vmatpush1.msra.mxu0 0.0
        %1823 = vmatprep.subr.mxu0 0.0
        %1824 = vmatpush1.msra.mxu0 0.0
        %1825 = vmatprep.subr.mxu0 0.0
        %1826 = vmatpush1.msra.mxu0 0.0
        %1827 = vmatprep.subr.mxu0 0.0
        %1828 = vmatpush1.msra.mxu0 0.0
        %1829 = vmatprep.subr.mxu0 0.0
        %1830 = vmatpush1.msra.mxu0 0.0
        %1831 = vmatprep.subr.mxu0 0.0
        %1832 = vmatpush1.msra.mxu0 0.0
        %1833 = vmatprep.subr.mxu0 0.0
        %1834 = vmatpush1.msra.mxu0 %v1802
        %1835 = vmatprep.subr.mxu0 0.0
        %1836 = vmatpush1.msra.mxu0 %v1801
        %1837 = vmatprep.subr.mxu0 0.0
        %1838 = vmatpush1.msra.mxu0 %v1800
        %1839 = vmatprep.subr.mxu0 0.0
        %1840 = vmatpush1.msra.mxu0 %v1799
        %1841 = vmatprep.subr.mxu0 0.0
        %1842 = vmatpush2.msra.mxu0 0.0
        %1843 = vmatprep.subr.mxu0 0.0
        %1844 = vmatpush2.msra.mxu0 0.0
        %1845 = vmatprep.subr.mxu0 0.0
        %1846 = vmatpush2.msra.mxu0 0.0
        %1847 = vmatprep.subr.mxu0 0.0
        %1848 = vmatpush2.msra.mxu0 0.0
        %1849 = vmatprep.subr.mxu0 0.0
        %1850 = vmatpush2.msra.mxu0 0.0
        %1851 = vmatprep.subr.mxu0 0.0
        %1852 = vmatpush2.msra.mxu0 0.0
        %1853 = vmatprep.subr.mxu0 0.0
        %1854 = vmatpush2.msra.mxu0 0.0
        %1855 = vmatprep.subr.mxu0 0.0
        %1856 = vmatpush2.msra.mxu0 0.0
        %1857 = vmatprep.subr.mxu0 0.0
        %1858 = vmatpush2.msra.mxu0 0.0
        %1859 = vmatprep.subr.mxu0 0.0
        %1860 = vmatpush2.msra.mxu0 0.0
        %1861 = vmatprep.subr.mxu0 0.0
        %1862 = vmatpush2.msra.mxu0 0.0
        %1863 = vmatprep.subr.mxu0 0.0
        %1864 = vmatpush2.msra.mxu0 0.0
        %1865 = vmatprep.subr.mxu0 0.0
        %1866 = vmatpush2.msra.mxu0 0.0
        %1867 = vmatprep.subr.mxu0 0.0
        %1868 = vmatpush2.msra.mxu0 0.0
        %1869 = vmatprep.subr.mxu0 0.0
        %1870 = vmatpush2.msra.mxu0 0.0
        %1871 = vmatprep.subr.mxu0 0.0
        %1872 = vmatpush2.msra.mxu0 0.0
        %1873 = vmatprep.mubr.f32.mxu0 0.0
        %1874 = vmatmul.mubr.f32.gmra.mxu0 %v1804
        %v1875 = vpop.f32.mrf.mxu0
        %v1876 = vadd.f32 0.0, %v1875
        %v1877 = vpop.f32.mrf.mxu0
        %1878 = vmatprep.mubr.f32.mxu0 0.0
        %1879 = vmatmul.mubr.f32.gmra.mxu0 %v1807
        %v1880 = vpop.f32.mrf.mxu0
        %v1881 = vadd.f32 0.0, %v1880
        %v1882 = vpop.f32.mrf.mxu0
        %1883 = vdwg.mxu0
        %v1884 = vadd.f32 %v858, %v1876
        %v1885 = vadd.f32 %v859, %v1881
        %v1886 = vld [vmem:[%s828] sm:$0x1]
        %v1887 = vld [vmem:[%s831] sm:$0x1]
        %v1888 = vsel %vm870, %v1884, 0.0
        %1889 = vadd.xlane.f32.xlu0 %v1888
        %v1890 = vpop.xlane.xlu0 %1889
        %v1891 = vsel %vm870, %v1885, 0.0
        %1892 = vadd.xlane.f32.xlu0 %v1891
        %v1893 = vpop.xlane.xlu0 %1892
        %v1894 = vrcp.pop 32.0
        %v1895 = vmul.f32 %v1890, %v1894
        %v1896 = vmul.f32 %v1893, %v1894
        %v1897 = vsub.f32 %v1884, %v1895
        %v1898 = vsub.f32 %v1885, %v1896
        %v1899 = vmul.f32 %v1897, %v1897
        %v1900 = vmul.f32 %v1898, %v1898
        %v1901 = vsel %vm870, %v1899, 0.0
        %1902 = vadd.xlane.f32.xlu0 %v1901
        %v1903 = vpop.xlane.xlu0 %1902
        %v1904 = vsel %vm870, %v1900, 0.0
        %1905 = vadd.xlane.f32.xlu0 %v1904
        %v1906 = vpop.xlane.xlu0 %1905
        %v1907 = vmul.f32 %v1903, %v1894
        %v1908 = vmul.f32 %v1906, %v1894
        %v1909 = vadd.f32 %v1907, 1e-05
        %v1910 = vadd.f32 %v1908, 1e-05
        %v1911 = vrsqrt.pop %v1909
        %v1912 = vrsqrt.pop %v1910
        %v1913 = vmul.f32 %v1897, %v1911
        %v1914 = vmul.f32 %v1898, %v1912
        %v1916 = vlaneseq
        %v1917 = vshrl.u32 %v1916, 7
        %v1918 = vsub.s32 0, %v1917
        %v1919 = vrot.slane %v1886, %v1918
        %v1921 = vmul.f32 %v1913, %v1919
        %v1922 = vmul.f32 %v1914, %v1919
        %v1924 = vlaneseq
        %v1925 = vshrl.u32 %v1924, 7
        %v1926 = vsub.s32 0, %v1925
        %v1927 = vrot.slane %v1887, %v1926
        %v1929 = vadd.f32 %v1921, %v1927
        %v1930 = vadd.f32 %v1922, %v1927
        %v1931 = vld [vmem:[%s825] sm:$0xff]
        %v1932 = vld [vmem:[%s825 + $0x8] sm:$0xff]
        %v1933 = vld [vmem:[%s825 + $0x10] sm:$0xff]
        %v1934 = vld [vmem:[%s825 + $0x18] sm:$0xff]
        %v1936 = vsel %vm870, %v1929, 0
        %v1939 = vsel %vm870, %v1930, 0
        %1941 = vmatprep.subr.mxu0 0.0
        %1942 = vmatpush1.msra.mxu0 0.0
        %1943 = vmatprep.subr.mxu0 0.0
        %1944 = vmatpush1.msra.mxu0 0.0
        %1945 = vmatprep.subr.mxu0 0.0
        %1946 = vmatpush1.msra.mxu0 0.0
        %1947 = vmatprep.subr.mxu0 0.0
        %1948 = vmatpush1.msra.mxu0 0.0
        %1949 = vmatprep.subr.mxu0 0.0
        %1950 = vmatpush1.msra.mxu0 0.0
        %1951 = vmatprep.subr.mxu0 0.0
        %1952 = vmatpush1.msra.mxu0 0.0
        %1953 = vmatprep.subr.mxu0 0.0
        %1954 = vmatpush1.msra.mxu0 0.0
        %1955 = vmatprep.subr.mxu0 0.0
        %1956 = vmatpush1.msra.mxu0 0.0
        %1957 = vmatprep.subr.mxu0 0.0
        %1958 = vmatpush1.msra.mxu0 0.0
        %1959 = vmatprep.subr.mxu0 0.0
        %1960 = vmatpush1.msra.mxu0 0.0
        %1961 = vmatprep.subr.mxu0 0.0
        %1962 = vmatpush1.msra.mxu0 0.0
        %1963 = vmatprep.subr.mxu0 0.0
        %1964 = vmatpush1.msra.mxu0 0.0
        %1965 = vmatprep.subr.mxu0 0.0
        %1966 = vmatpush1.msra.mxu0 %v1934
        %1967 = vmatprep.subr.mxu0 0.0
        %1968 = vmatpush1.msra.mxu0 %v1933
        %1969 = vmatprep.subr.mxu0 0.0
        %1970 = vmatpush1.msra.mxu0 %v1932
        %1971 = vmatprep.subr.mxu0 0.0
        %1972 = vmatpush1.msra.mxu0 %v1931
        %1973 = vmatprep.subr.mxu0 0.0
        %1974 = vmatpush2.msra.mxu0 0.0
        %1975 = vmatprep.subr.mxu0 0.0
        %1976 = vmatpush2.msra.mxu0 0.0
        %1977 = vmatprep.subr.mxu0 0.0
        %1978 = vmatpush2.msra.mxu0 0.0
        %1979 = vmatprep.subr.mxu0 0.0
        %1980 = vmatpush2.msra.mxu0 0.0
        %1981 = vmatprep.subr.mxu0 0.0
        %1982 = vmatpush2.msra.mxu0 0.0
        %1983 = vmatprep.subr.mxu0 0.0
        %1984 = vmatpush2.msra.mxu0 0.0
        %1985 = vmatprep.subr.mxu0 0.0
        %1986 = vmatpush2.msra.mxu0 0.0
        %1987 = vmatprep.subr.mxu0 0.0
        %1988 = vmatpush2.msra.mxu0 0.0
        %1989 = vmatprep.subr.mxu0 0.0
        %1990 = vmatpush2.msra.mxu0 0.0
        %1991 = vmatprep.subr.mxu0 0.0
        %1992 = vmatpush2.msra.mxu0 0.0
        %1993 = vmatprep.subr.mxu0 0.0
        %1994 = vmatpush2.msra.mxu0 0.0
        %1995 = vmatprep.subr.mxu0 0.0
        %1996 = vmatpush2.msra.mxu0 0.0
        %1997 = vmatprep.subr.mxu0 0.0
        %1998 = vmatpush2.msra.mxu0 0.0
        %1999 = vmatprep.subr.mxu0 0.0
        %2000 = vmatpush2.msra.mxu0 0.0
        %2001 = vmatprep.subr.mxu0 0.0
        %2002 = vmatpush2.msra.mxu0 0.0
        %2003 = vmatprep.subr.mxu0 0.0
        %2004 = vmatpush2.msra.mxu0 0.0
        %2005 = vmatprep.mubr.f32.mxu0 0.0
        %2006 = vmatmul.mubr.f32.gmra.mxu0 %v1936
        %v2007 = vpop.f32.mrf.mxu0
        %v2008 = vadd.f32 0.0, %v2007
        %v2009 = vpop.f32.mrf.mxu0
        %2010 = vmatprep.mubr.f32.mxu0 0.0
        %2011 = vmatmul.mubr.f32.gmra.mxu0 %v1939
        %v2012 = vpop.f32.mrf.mxu0
        %v2013 = vadd.f32 0.0, %v2012
        %v2014 = vpop.f32.mrf.mxu0
        %2015 = vdwg.mxu0
        %v2016 = vld [vmem:[%s699] sm:$0xff]
        %v2017 = vld [vmem:[%s699 + $0x8] sm:$0xff]
        %v2018 = vld [vmem:[%s699 + $0x10] sm:$0xff]
        %v2019 = vld [vmem:[%s699 + $0x18] sm:$0xff]
        %v2021 = vsel %vm870, %v860, 0
        %v2024 = vsel %vm870, %v861, 0
        %2026 = vmatprep.subr.mxu0 0.0
        %2027 = vmatpush1.msra.mxu0 0.0
        %2028 = vmatprep.subr.mxu0 0.0
        %2029 = vmatpush1.msra.mxu0 0.0
        %2030 = vmatprep.subr.mxu0 0.0
        %2031 = vmatpush1.msra.mxu0 0.0
        %2032 = vmatprep.subr.mxu0 0.0
        %2033 = vmatpush1.msra.mxu0 0.0
        %2034 = vmatprep.subr.mxu0 0.0
        %2035 = vmatpush1.msra.mxu0 0.0
        %2036 = vmatprep.subr.mxu0 0.0
        %2037 = vmatpush1.msra.mxu0 0.0
        %2038 = vmatprep.subr.mxu0 0.0
        %2039 = vmatpush1.msra.mxu0 0.0
        %2040 = vmatprep.subr.mxu0 0.0
        %2041 = vmatpush1.msra.mxu0 0.0
        %2042 = vmatprep.subr.mxu0 0.0
        %2043 = vmatpush1.msra.mxu0 0.0
        %2044 = vmatprep.subr.mxu0 0.0
        %2045 = vmatpush1.msra.mxu0 0.0
        %2046 = vmatprep.subr.mxu0 0.0
        %2047 = vmatpush1.msra.mxu0 0.0
        %2048 = vmatprep.subr.mxu0 0.0
        %2049 = vmatpush1.msra.mxu0 0.0
        %2050 = vmatprep.subr.mxu0 0.0
        %2051 = vmatpush1.msra.mxu0 %v2019
        %2052 = vmatprep.subr.mxu0 0.0
        %2053 = vmatpush1.msra.mxu0 %v2018
        %2054 = vmatprep.subr.mxu0 0.0
        %2055 = vmatpush1.msra.mxu0 %v2017
        %2056 = vmatprep.subr.mxu0 0.0
        %2057 = vmatpush1.msra.mxu0 %v2016
        %2058 = vmatprep.subr.mxu0 0.0
        %2059 = vmatpush2.msra.mxu0 0.0
        %2060 = vmatprep.subr.mxu0 0.0
        %2061 = vmatpush2.msra.mxu0 0.0
        %2062 = vmatprep.subr.mxu0 0.0
        %2063 = vmatpush2.msra.mxu0 0.0
        %2064 = vmatprep.subr.mxu0 0.0
        %2065 = vmatpush2.msra.mxu0 0.0
        %2066 = vmatprep.subr.mxu0 0.0
        %2067 = vmatpush2.msra.mxu0 0.0
        %2068 = vmatprep.subr.mxu0 0.0
        %2069 = vmatpush2.msra.mxu0 0.0
        %2070 = vmatprep.subr.mxu0 0.0
        %2071 = vmatpush2.msra.mxu0 0.0
        %2072 = vmatprep.subr.mxu0 0.0
        %2073 = vmatpush2.msra.mxu0 0.0
        %2074 = vmatprep.subr.mxu0 0.0
        %2075 = vmatpush2.msra.mxu0 0.0
        %2076 = vmatprep.subr.mxu0 0.0
        %2077 = vmatpush2.msra.mxu0 0.0
        %2078 = vmatprep.subr.mxu0 0.0
        %2079 = vmatpush2.msra.mxu0 0.0
        %2080 = vmatprep.subr.mxu0 0.0
        %2081 = vmatpush2.msra.mxu0 0.0
        %2082 = vmatprep.subr.mxu0 0.0
        %2083 = vmatpush2.msra.mxu0 0.0
        %2084 = vmatprep.subr.mxu0 0.0
        %2085 = vmatpush2.msra.mxu0 0.0
        %2086 = vmatprep.subr.mxu0 0.0
        %2087 = vmatpush2.msra.mxu0 0.0
        %2088 = vmatprep.subr.mxu0 0.0
        %2089 = vmatpush2.msra.mxu0 0.0
        %2090 = vmatprep.mubr.f32.mxu0 0.0
        %2091 = vmatmul.mubr.f32.gmra.mxu0 %v2021
        %v2092 = vpop.f32.mrf.mxu0
        %v2093 = vadd.f32 0.0, %v2092
        %v2094 = vpop.f32.mrf.mxu0
        %2095 = vmatprep.mubr.f32.mxu0 0.0
        %2096 = vmatmul.mubr.f32.gmra.mxu0 %v2024
        %v2097 = vpop.f32.mrf.mxu0
        %v2098 = vadd.f32 0.0, %v2097
        %v2099 = vpop.f32.mrf.mxu0
        %2100 = vdwg.mxu0
        %v2102 = vsel %vm958, %v2008, 0
        %v2105 = vsel %vm958, %v2013, 0
        %v2108 = vsel %vm958, %v2093, 0
        %v2111 = vsel %vm958, %v2098, 0
        %2113 = vmatprep.subr.mxu0 0.0
        %2114 = vmatpush1.xpose.msra.mxu0 0.0
        %2115 = vmatprep.subr.mxu0 0.0
        %2116 = vmatpush1.xpose.msra.mxu0 0.0
        %2117 = vmatprep.subr.mxu0 0.0
        %2118 = vmatpush1.xpose.msra.mxu0 0.0
        %2119 = vmatprep.subr.mxu0 0.0
        %2120 = vmatpush1.xpose.msra.mxu0 0.0
        %2121 = vmatprep.subr.mxu0 0.0
        %2122 = vmatpush1.xpose.msra.mxu0 0.0
        %2123 = vmatprep.subr.mxu0 0.0
        %2124 = vmatpush1.xpose.msra.mxu0 0.0
        %2125 = vmatprep.subr.mxu0 0.0
        %2126 = vmatpush1.xpose.msra.mxu0 0.0
        %2127 = vmatprep.subr.mxu0 0.0
        %2128 = vmatpush1.xpose.msra.mxu0 0.0
        %2129 = vmatprep.subr.mxu0 0.0
        %2130 = vmatpush1.xpose.msra.mxu0 0.0
        %2131 = vmatprep.subr.mxu0 0.0
        %2132 = vmatpush1.xpose.msra.mxu0 0.0
        %2133 = vmatprep.subr.mxu0 0.0
        %2134 = vmatpush1.xpose.msra.mxu0 0.0
        %2135 = vmatprep.subr.mxu0 0.0
        %2136 = vmatpush1.xpose.msra.mxu0 0.0
        %2137 = vmatprep.subr.mxu0 0.0
        %2138 = vmatpush1.xpose.msra.mxu0 0.0
        %2139 = vmatprep.subr.mxu0 0.0
        %2140 = vmatpush1.xpose.msra.mxu0 0.0
        %2141 = vmatprep.subr.mxu0 0.0
        %2142 = vmatpush1.xpose.msra.mxu0 %v2111
        %2143 = vmatprep.subr.mxu0 0.0
        %2144 = vmatpush1.xpose.msra.mxu0 %v2108
        %2145 = vmatprep.subr.mxu0 0.0
        %2146 = vmatpush2.xpose.msra.mxu0 0.0
        %2147 = vmatprep.subr.mxu0 0.0
        %2148 = vmatpush2.xpose.msra.mxu0 0.0
        %2149 = vmatprep.subr.mxu0 0.0
        %2150 = vmatpush2.xpose.msra.mxu0 0.0
        %2151 = vmatprep.subr.mxu0 0.0
        %2152 = vmatpush2.xpose.msra.mxu0 0.0
        %2153 = vmatprep.subr.mxu0 0.0
        %2154 = vmatpush2.xpose.msra.mxu0 0.0
        %2155 = vmatprep.subr.mxu0 0.0
        %2156 = vmatpush2.xpose.msra.mxu0 0.0
        %2157 = vmatprep.subr.mxu0 0.0
        %2158 = vmatpush2.xpose.msra.mxu0 0.0
        %2159 = vmatprep.subr.mxu0 0.0
        %2160 = vmatpush2.xpose.msra.mxu0 0.0
        %2161 = vmatprep.subr.mxu0 0.0
        %2162 = vmatpush2.xpose.msra.mxu0 0.0
        %2163 = vmatprep.subr.mxu0 0.0
        %2164 = vmatpush2.xpose.msra.mxu0 0.0
        %2165 = vmatprep.subr.mxu0 0.0
        %2166 = vmatpush2.xpose.msra.mxu0 0.0
        %2167 = vmatprep.subr.mxu0 0.0
        %2168 = vmatpush2.xpose.msra.mxu0 0.0
        %2169 = vmatprep.subr.mxu0 0.0
        %2170 = vmatpush2.xpose.msra.mxu0 0.0
        %2171 = vmatprep.subr.mxu0 0.0
        %2172 = vmatpush2.xpose.msra.mxu0 0.0
        %2173 = vmatprep.subr.mxu0 0.0
        %2174 = vmatpush2.xpose.msra.mxu0 0.0
        %2175 = vmatprep.subr.mxu0 0.0
        %2176 = vmatpush2.xpose.msra.mxu0 0.0
        %2177 = vmatprep.mubr.f32.mxu0 0.0
        %2178 = vmatmul.mubr.f32.gmra.mxu0 %v2102
        %v2179 = vpop.f32.mrf.mxu0
        %v2180 = vadd.f32 0.0, %v2179
        %v2181 = vpop.f32.mrf.mxu0
        %2182 = vmatprep.mubr.f32.mxu0 0.0
        %2183 = vmatmul.mubr.f32.gmra.mxu0 %v2105
        %v2184 = vpop.f32.mrf.mxu0
        %v2185 = vadd.f32 0.0, %v2184
        %v2186 = vpop.f32.mrf.mxu0
        %2187 = vdwg.mxu0
        %v2188 = vmul.f32 %v2180, 0.35355338
        %v2189 = vmul.f32 %v2185, 0.35355338
        %v2190 = vadd.f32 %v2188, %v864
        %v2191 = vadd.f32 %v2189, %v865
        %v2192 = vsel %vm1046, %v2190, -inf
        %2193 = vmax.xlane.f32.xlu0 %v2192
        %v2194 = vpop.xlane.xlu0 %2193
        %v2195 = vsel %vm1046, %v2191, -inf
        %2196 = vmax.xlane.f32.xlu0 %v2195
        %v2197 = vpop.xlane.xlu0 %2196
        %v2198 = vsub.f32 %v2190, %v2194
        %v2199 = vsub.f32 %v2191, %v2197
        %v2200 = vmul.f32 %v2198, 1.442695
        %v2201 = vpow.pop %v2200
        %v2202 = vmul.f32 %v2199, 1.442695
        %v2203 = vpow.pop %v2202
        %v2204 = vsel %vm1046, %v2201, 0.0
        %2205 = vadd.xlane.f32.xlu0 %v2204
        %v2206 = vpop.xlane.xlu0 %2205
        %v2207 = vsel %vm1046, %v2203, 0.0
        %2208 = vadd.xlane.f32.xlu0 %v2207
        %v2209 = vpop.xlane.xlu0 %2208
        %v2210 = vrcp.pop %v2206
        %v2211 = vrcp.pop %v2209
        %v2212 = vmul.f32 %v2201, %v2210
        %v2213 = vmul.f32 %v2203, %v2211
        %2214 = vrot.lane.b32.xlu0 %v2093, 96
        %v2215 = vpop.permute.xlu0 %2214
        %2216 = vrot.lane.b32.xlu0 %v2098, 96
        %v2217 = vpop.permute.xlu0 %2216
        %v2221 = vsel %vm1046, %v2212, 0
        %v2224 = vsel %vm1046, %v2213, 0
        %2226 = vmatprep.subr.mxu0 0.0
        %2227 = vmatpush1.msra.mxu0 0.0
        %2228 = vmatprep.subr.mxu0 0.0
        %2229 = vmatpush1.msra.mxu0 0.0
        %2230 = vmatprep.subr.mxu0 0.0
        %2231 = vmatpush1.msra.mxu0 0.0
        %2232 = vmatprep.subr.mxu0 0.0
        %2233 = vmatpush1.msra.mxu0 0.0
        %2234 = vmatprep.subr.mxu0 0.0
        %2235 = vmatpush1.msra.mxu0 0.0
        %2236 = vmatprep.subr.mxu0 0.0
        %2237 = vmatpush1.msra.mxu0 0.0
        %2238 = vmatprep.subr.mxu0 0.0
        %2239 = vmatpush1.msra.mxu0 0.0
        %2240 = vmatprep.subr.mxu0 0.0
        %2241 = vmatpush1.msra.mxu0 0.0
        %2242 = vmatprep.subr.mxu0 0.0
        %2243 = vmatpush1.msra.mxu0 0.0
        %2244 = vmatprep.subr.mxu0 0.0
        %2245 = vmatpush1.msra.mxu0 0.0
        %2246 = vmatprep.subr.mxu0 0.0
        %2247 = vmatpush1.msra.mxu0 0.0
        %2248 = vmatprep.subr.mxu0 0.0
        %2249 = vmatpush1.msra.mxu0 0.0
        %2250 = vmatprep.subr.mxu0 0.0
        %2251 = vmatpush1.msra.mxu0 0.0
        %2252 = vmatprep.subr.mxu0 0.0
        %2253 = vmatpush1.msra.mxu0 0.0
        %2254 = vmatprep.subr.mxu0 0.0
        %2255 = vmatpush1.msra.mxu0 %v2217
        %2256 = vmatprep.subr.mxu0 0.0
        %2257 = vmatpush1.msra.mxu0 %v2215
        %2258 = vmatprep.subr.mxu0 0.0
        %2259 = vmatpush2.msra.mxu0 0.0
        %2260 = vmatprep.subr.mxu0 0.0
        %2261 = vmatpush2.msra.mxu0 0.0
        %2262 = vmatprep.subr.mxu0 0.0
        %2263 = vmatpush2.msra.mxu0 0.0
        %2264 = vmatprep.subr.mxu0 0.0
        %2265 = vmatpush2.msra.mxu0 0.0
        %2266 = vmatprep.subr.mxu0 0.0
        %2267 = vmatpush2.msra.mxu0 0.0
        %2268 = vmatprep.subr.mxu0 0.0
        %2269 = vmatpush2.msra.mxu0 0.0
        %2270 = vmatprep.subr.mxu0 0.0
        %2271 = vmatpush2.msra.mxu0 0.0
        %2272 = vmatprep.subr.mxu0 0.0
        %2273 = vmatpush2.msra.mxu0 0.0
        %2274 = vmatprep.subr.mxu0 0.0
        %2275 = vmatpush2.msra.mxu0 0.0
        %2276 = vmatprep.subr.mxu0 0.0
        %2277 = vmatpush2.msra.mxu0 0.0
        %2278 = vmatprep.subr.mxu0 0.0
        %2279 = vmatpush2.msra.mxu0 0.0
        %2280 = vmatprep.subr.mxu0 0.0
        %2281 = vmatpush2.msra.mxu0 0.0
        %2282 = vmatprep.subr.mxu0 0.0
        %2283 = vmatpush2.msra.mxu0 0.0
        %2284 = vmatprep.subr.mxu0 0.0
        %2285 = vmatpush2.msra.mxu0 0.0
        %2286 = vmatprep.subr.mxu0 0.0
        %2287 = vmatpush2.msra.mxu0 0.0
        %2288 = vmatprep.subr.mxu0 0.0
        %2289 = vmatpush2.msra.mxu0 0.0
        %2290 = vmatprep.mubr.f32.mxu0 0.0
        %2291 = vmatmul.mubr.f32.gmra.mxu0 %v2221
        %v2292 = vpop.f32.mrf.mxu0
        %v2293 = vadd.f32 0.0, %v2292
        %v2294 = vpop.f32.mrf.mxu0
        %2295 = vmatprep.mubr.f32.mxu0 0.0
        %2296 = vmatmul.mubr.f32.gmra.mxu0 %v2224
        %v2297 = vpop.f32.mrf.mxu0
        %v2298 = vadd.f32 0.0, %v2297
        %v2299 = vpop.f32.mrf.mxu0
        %2300 = vdwg.mxu0
        %2301 = vrot.lane.b32.xlu0 %v2008, 120
        %v2302 = vpop.permute.xlu0 %2301
        %2303 = vrot.lane.b32.xlu0 %v2013, 120
        %v2304 = vpop.permute.xlu0 %2303
        %2305 = vrot.lane.b32.xlu0 %v2093, 120
        %v2306 = vpop.permute.xlu0 %2305
        %2307 = vrot.lane.b32.xlu0 %v2098, 120
        %v2308 = vpop.permute.xlu0 %2307
        %v2309 = vsel %vm958, %v2302, 0
        %v2311 = vsel %vm958, %v2304, 0
        %v2313 = vsel %vm958, %v2306, 0
        %v2315 = vsel %vm958, %v2308, 0
        %2317 = vmatprep.subr.mxu0 0.0
        %2318 = vmatpush1.xpose.msra.mxu0 0.0
        %2319 = vmatprep.subr.mxu0 0.0
        %2320 = vmatpush1.xpose.msra.mxu0 0.0
        %2321 = vmatprep.subr.mxu0 0.0
        %2322 = vmatpush1.xpose.msra.mxu0 0.0
        %2323 = vmatprep.subr.mxu0 0.0
        %2324 = vmatpush1.xpose.msra.mxu0 0.0
        %2325 = vmatprep.subr.mxu0 0.0
        %2326 = vmatpush1.xpose.msra.mxu0 0.0
        %2327 = vmatprep.subr.mxu0 0.0
        %2328 = vmatpush1.xpose.msra.mxu0 0.0
        %2329 = vmatprep.subr.mxu0 0.0
        %2330 = vmatpush1.xpose.msra.mxu0 0.0
        %2331 = vmatprep.subr.mxu0 0.0
        %2332 = vmatpush1.xpose.msra.mxu0 0.0
        %2333 = vmatprep.subr.mxu0 0.0
        %2334 = vmatpush1.xpose.msra.mxu0 0.0
        %2335 = vmatprep.subr.mxu0 0.0
        %2336 = vmatpush1.xpose.msra.mxu0 0.0
        %2337 = vmatprep.subr.mxu0 0.0
        %2338 = vmatpush1.xpose.msra.mxu0 0.0
        %2339 = vmatprep.subr.mxu0 0.0
        %2340 = vmatpush1.xpose.msra.mxu0 0.0
        %2341 = vmatprep.subr.mxu0 0.0
        %2342 = vmatpush1.xpose.msra.mxu0 0.0
        %2343 = vmatprep.subr.mxu0 0.0
        %2344 = vmatpush1.xpose.msra.mxu0 0.0
        %2345 = vmatprep.subr.mxu0 0.0
        %2346 = vmatpush1.xpose.msra.mxu0 %v2315
        %2347 = vmatprep.subr.mxu0 0.0
        %2348 = vmatpush1.xpose.msra.mxu0 %v2313
        %2349 = vmatprep.subr.mxu0 0.0
        %2350 = vmatpush2.xpose.msra.mxu0 0.0
        %2351 = vmatprep.subr.mxu0 0.0
        %2352 = vmatpush2.xpose.msra.mxu0 0.0
        %2353 = vmatprep.subr.mxu0 0.0
        %2354 = vmatpush2.xpose.msra.mxu0 0.0
        %2355 = vmatprep.subr.mxu0 0.0
        %2356 = vmatpush2.xpose.msra.mxu0 0.0
        %2357 = vmatprep.subr.mxu0 0.0
        %2358 = vmatpush2.xpose.msra.mxu0 0.0
        %2359 = vmatprep.subr.mxu0 0.0
        %2360 = vmatpush2.xpose.msra.mxu0 0.0
        %2361 = vmatprep.subr.mxu0 0.0
        %2362 = vmatpush2.xpose.msra.mxu0 0.0
        %2363 = vmatprep.subr.mxu0 0.0
        %2364 = vmatpush2.xpose.msra.mxu0 0.0
        %2365 = vmatprep.subr.mxu0 0.0
        %2366 = vmatpush2.xpose.msra.mxu0 0.0
        %2367 = vmatprep.subr.mxu0 0.0
        %2368 = vmatpush2.xpose.msra.mxu0 0.0
        %2369 = vmatprep.subr.mxu0 0.0
        %2370 = vmatpush2.xpose.msra.mxu0 0.0
        %2371 = vmatprep.subr.mxu0 0.0
        %2372 = vmatpush2.xpose.msra.mxu0 0.0
        %2373 = vmatprep.subr.mxu0 0.0
        %2374 = vmatpush2.xpose.msra.mxu0 0.0
        %2375 = vmatprep.subr.mxu0 0.0
        %2376 = vmatpush2.xpose.msra.mxu0 0.0
        %2377 = vmatprep.subr.mxu0 0.0
        %2378 = vmatpush2.xpose.msra.mxu0 0.0
        %2379 = vmatprep.subr.mxu0 0.0
        %2380 = vmatpush2.xpose.msra.mxu0 0.0
        %2381 = vmatprep.mubr.f32.mxu0 0.0
        %2382 = vmatmul.mubr.f32.gmra.mxu0 %v2309
        %v2383 = vpop.f32.mrf.mxu0
        %v2384 = vadd.f32 0.0, %v2383
        %v2385 = vpop.f32.mrf.mxu0
        %2386 = vmatprep.mubr.f32.mxu0 0.0
        %2387 = vmatmul.mubr.f32.gmra.mxu0 %v2311
        %v2388 = vpop.f32.mrf.mxu0
        %v2389 = vadd.f32 0.0, %v2388
        %v2390 = vpop.f32.mrf.mxu0
        %2391 = vdwg.mxu0
        %v2392 = vmul.f32 %v2384, 0.35355338
        %v2393 = vmul.f32 %v2389, 0.35355338
        %v2394 = vadd.f32 %v2392, %v864
        %v2395 = vadd.f32 %v2393, %v865
        %v2396 = vsel %vm1046, %v2394, -inf
        %2397 = vmax.xlane.f32.xlu0 %v2396
        %v2398 = vpop.xlane.xlu0 %2397
        %v2399 = vsel %vm1046, %v2395, -inf
        %2400 = vmax.xlane.f32.xlu0 %v2399
        %v2401 = vpop.xlane.xlu0 %2400
        %v2402 = vsub.f32 %v2394, %v2398
        %v2403 = vsub.f32 %v2395, %v2401
        %v2404 = vmul.f32 %v2402, 1.442695
        %v2405 = vpow.pop %v2404
        %v2406 = vmul.f32 %v2403, 1.442695
        %v2407 = vpow.pop %v2406
        %v2408 = vsel %vm1046, %v2405, 0.0
        %2409 = vadd.xlane.f32.xlu0 %v2408
        %v2410 = vpop.xlane.xlu0 %2409
        %v2411 = vsel %vm1046, %v2407, 0.0
        %2412 = vadd.xlane.f32.xlu0 %v2411
        %v2413 = vpop.xlane.xlu0 %2412
        %v2414 = vrcp.pop %v2410
        %v2415 = vrcp.pop %v2413
        %v2416 = vmul.f32 %v2405, %v2414
        %v2417 = vmul.f32 %v2407, %v2415
        %2418 = vrot.lane.b32.xlu0 %v2093, 88
        %v2419 = vpop.permute.xlu0 %2418
        %2420 = vrot.lane.b32.xlu0 %v2098, 88
        %v2421 = vpop.permute.xlu0 %2420
        %v2425 = vsel %vm1046, %v2416, 0
        %v2428 = vsel %vm1046, %v2417, 0
        %2430 = vmatprep.subr.mxu0 0.0
        %2431 = vmatpush1.msra.mxu0 0.0
        %2432 = vmatprep.subr.mxu0 0.0
        %2433 = vmatpush1.msra.mxu0 0.0
        %2434 = vmatprep.subr.mxu0 0.0
        %2435 = vmatpush1.msra.mxu0 0.0
        %2436 = vmatprep.subr.mxu0 0.0
        %2437 = vmatpush1.msra.mxu0 0.0
        %2438 = vmatprep.subr.mxu0 0.0
        %2439 = vmatpush1.msra.mxu0 0.0
        %2440 = vmatprep.subr.mxu0 0.0
        %2441 = vmatpush1.msra.mxu0 0.0
        %2442 = vmatprep.subr.mxu0 0.0
        %2443 = vmatpush1.msra.mxu0 0.0
        %2444 = vmatprep.subr.mxu0 0.0
        %2445 = vmatpush1.msra.mxu0 0.0
        %2446 = vmatprep.subr.mxu0 0.0
        %2447 = vmatpush1.msra.mxu0 0.0
        %2448 = vmatprep.subr.mxu0 0.0
        %2449 = vmatpush1.msra.mxu0 0.0
        %2450 = vmatprep.subr.mxu0 0.0
        %2451 = vmatpush1.msra.mxu0 0.0
        %2452 = vmatprep.subr.mxu0 0.0
        %2453 = vmatpush1.msra.mxu0 0.0
        %2454 = vmatprep.subr.mxu0 0.0
        %2455 = vmatpush1.msra.mxu0 0.0
        %2456 = vmatprep.subr.mxu0 0.0
        %2457 = vmatpush1.msra.mxu0 0.0
        %2458 = vmatprep.subr.mxu0 0.0
        %2459 = vmatpush1.msra.mxu0 %v2421
        %2460 = vmatprep.subr.mxu0 0.0
        %2461 = vmatpush1.msra.mxu0 %v2419
        %2462 = vmatprep.subr.mxu0 0.0
        %2463 = vmatpush2.msra.mxu0 0.0
        %2464 = vmatprep.subr.mxu0 0.0
        %2465 = vmatpush2.msra.mxu0 0.0
        %2466 = vmatprep.subr.mxu0 0.0
        %2467 = vmatpush2.msra.mxu0 0.0
        %2468 = vmatprep.subr.mxu0 0.0
        %2469 = vmatpush2.msra.mxu0 0.0
        %2470 = vmatprep.subr.mxu0 0.0
        %2471 = vmatpush2.msra.mxu0 0.0
        %2472 = vmatprep.subr.mxu0 0.0
        %2473 = vmatpush2.msra.mxu0 0.0
        %2474 = vmatprep.subr.mxu0 0.0
        %2475 = vmatpush2.msra.mxu0 0.0
        %2476 = vmatprep.subr.mxu0 0.0
        %2477 = vmatpush2.msra.mxu0 0.0
        %2478 = vmatprep.subr.mxu0 0.0
        %2479 = vmatpush2.msra.mxu0 0.0
        %2480 = vmatprep.subr.mxu0 0.0
        %2481 = vmatpush2.msra.mxu0 0.0
        %2482 = vmatprep.subr.mxu0 0.0
        %2483 = vmatpush2.msra.mxu0 0.0
        %2484 = vmatprep.subr.mxu0 0.0
        %2485 = vmatpush2.msra.mxu0 0.0
        %2486 = vmatprep.subr.mxu0 0.0
        %2487 = vmatpush2.msra.mxu0 0.0
        %2488 = vmatprep.subr.mxu0 0.0
        %2489 = vmatpush2.msra.mxu0 0.0
        %2490 = vmatprep.subr.mxu0 0.0
        %2491 = vmatpush2.msra.mxu0 0.0
        %2492 = vmatprep.subr.mxu0 0.0
        %2493 = vmatpush2.msra.mxu0 0.0
        %2494 = vmatprep.mubr.f32.mxu0 0.0
        %2495 = vmatmul.mubr.f32.gmra.mxu0 %v2425
        %v2496 = vpop.f32.mrf.mxu0
        %v2497 = vadd.f32 0.0, %v2496
        %v2498 = vpop.f32.mrf.mxu0
        %2499 = vmatprep.mubr.f32.mxu0 0.0
        %2500 = vmatmul.mubr.f32.gmra.mxu0 %v2428
        %v2501 = vpop.f32.mrf.mxu0
        %v2502 = vadd.f32 0.0, %v2501
        %v2503 = vpop.f32.mrf.mxu0
        %2504 = vdwg.mxu0
        %2505 = vrot.lane.b32.xlu0 %v2008, 112
        %v2506 = vpop.permute.xlu0 %2505
        %2507 = vrot.lane.b32.xlu0 %v2013, 112
        %v2508 = vpop.permute.xlu0 %2507
        %2509 = vrot.lane.b32.xlu0 %v2093, 112
        %v2510 = vpop.permute.xlu0 %2509
        %2511 = vrot.lane.b32.xlu0 %v2098, 112
        %v2512 = vpop.permute.xlu0 %2511
        %v2513 = vsel %vm958, %v2506, 0
        %v2515 = vsel %vm958, %v2508, 0
        %v2517 = vsel %vm958, %v2510, 0
        %v2519 = vsel %vm958, %v2512, 0
        %2521 = vmatprep.subr.mxu0 0.0
        %2522 = vmatpush1.xpose.msra.mxu0 0.0
        %2523 = vmatprep.subr.mxu0 0.0
        %2524 = vmatpush1.xpose.msra.mxu0 0.0
        %2525 = vmatprep.subr.mxu0 0.0
        %2526 = vmatpush1.xpose.msra.mxu0 0.0
        %2527 = vmatprep.subr.mxu0 0.0
        %2528 = vmatpush1.xpose.msra.mxu0 0.0
        %2529 = vmatprep.subr.mxu0 0.0
        %2530 = vmatpush1.xpose.msra.mxu0 0.0
        %2531 = vmatprep.subr.mxu0 0.0
        %2532 = vmatpush1.xpose.msra.mxu0 0.0
        %2533 = vmatprep.subr.mxu0 0.0
        %2534 = vmatpush1.xpose.msra.mxu0 0.0
        %2535 = vmatprep.subr.mxu0 0.0
        %2536 = vmatpush1.xpose.msra.mxu0 0.0
        %2537 = vmatprep.subr.mxu0 0.0
        %2538 = vmatpush1.xpose.msra.mxu0 0.0
        %2539 = vmatprep.subr.mxu0 0.0
        %2540 = vmatpush1.xpose.msra.mxu0 0.0
        %2541 = vmatprep.subr.mxu0 0.0
        %2542 = vmatpush1.xpose.msra.mxu0 0.0
        %2543 = vmatprep.subr.mxu0 0.0
        %2544 = vmatpush1.xpose.msra.mxu0 0.0
        %2545 = vmatprep.subr.mxu0 0.0
        %2546 = vmatpush1.xpose.msra.mxu0 0.0
        %2547 = vmatprep.subr.mxu0 0.0
        %2548 = vmatpush1.xpose.msra.mxu0 0.0
        %2549 = vmatprep.subr.mxu0 0.0
        %2550 = vmatpush1.xpose.msra.mxu0 %v2519
        %2551 = vmatprep.subr.mxu0 0.0
        %2552 = vmatpush1.xpose.msra.mxu0 %v2517
        %2553 = vmatprep.subr.mxu0 0.0
        %2554 = vmatpush2.xpose.msra.mxu0 0.0
        %2555 = vmatprep.subr.mxu0 0.0
        %2556 = vmatpush2.xpose.msra.mxu0 0.0
        %2557 = vmatprep.subr.mxu0 0.0
        %2558 = vmatpush2.xpose.msra.mxu0 0.0
        %2559 = vmatprep.subr.mxu0 0.0
        %2560 = vmatpush2.xpose.msra.mxu0 0.0
        %2561 = vmatprep.subr.mxu0 0.0
        %2562 = vmatpush2.xpose.msra.mxu0 0.0
        %2563 = vmatprep.subr.mxu0 0.0
        %2564 = vmatpush2.xpose.msra.mxu0 0.0
        %2565 = vmatprep.subr.mxu0 0.0
        %2566 = vmatpush2.xpose.msra.mxu0 0.0
        %2567 = vmatprep.subr.mxu0 0.0
        %2568 = vmatpush2.xpose.msra.mxu0 0.0
        %2569 = vmatprep.subr.mxu0 0.0
        %2570 = vmatpush2.xpose.msra.mxu0 0.0
        %2571 = vmatprep.subr.mxu0 0.0
        %2572 = vmatpush2.xpose.msra.mxu0 0.0
        %2573 = vmatprep.subr.mxu0 0.0
        %2574 = vmatpush2.xpose.msra.mxu0 0.0
        %2575 = vmatprep.subr.mxu0 0.0
        %2576 = vmatpush2.xpose.msra.mxu0 0.0
        %2577 = vmatprep.subr.mxu0 0.0
        %2578 = vmatpush2.xpose.msra.mxu0 0.0
        %2579 = vmatprep.subr.mxu0 0.0
        %2580 = vmatpush2.xpose.msra.mxu0 0.0
        %2581 = vmatprep.subr.mxu0 0.0
        %2582 = vmatpush2.xpose.msra.mxu0 0.0
        %2583 = vmatprep.subr.mxu0 0.0
        %2584 = vmatpush2.xpose.msra.mxu0 0.0
        %2585 = vmatprep.mubr.f32.mxu0 0.0
        %2586 = vmatmul.mubr.f32.gmra.mxu0 %v2513
        %v2587 = vpop.f32.mrf.mxu0
        %v2588 = vadd.f32 0.0, %v2587
        %v2589 = vpop.f32.mrf.mxu0
        %2590 = vmatprep.mubr.f32.mxu0 0.0
        %2591 = vmatmul.mubr.f32.gmra.mxu0 %v2515
        %v2592 = vpop.f32.mrf.mxu0
        %v2593 = vadd.f32 0.0, %v2592
        %v2594 = vpop.f32.mrf.mxu0
        %2595 = vdwg.mxu0
        %v2596 = vmul.f32 %v2588, 0.35355338
        %v2597 = vmul.f32 %v2593, 0.35355338
        %v2598 = vadd.f32 %v2596, %v864
        %v2599 = vadd.f32 %v2597, %v865
        %v2600 = vsel %vm1046, %v2598, -inf
        %2601 = vmax.xlane.f32.xlu0 %v2600
        %v2602 = vpop.xlane.xlu0 %2601
        %v2603 = vsel %vm1046, %v2599, -inf
        %2604 = vmax.xlane.f32.xlu0 %v2603
        %v2605 = vpop.xlane.xlu0 %2604
        %v2606 = vsub.f32 %v2598, %v2602
        %v2607 = vsub.f32 %v2599, %v2605
        %v2608 = vmul.f32 %v2606, 1.442695
        %v2609 = vpow.pop %v2608
        %v2610 = vmul.f32 %v2607, 1.442695
        %v2611 = vpow.pop %v2610
        %v2612 = vsel %vm1046, %v2609, 0.0
        %2613 = vadd.xlane.f32.xlu0 %v2612
        %v2614 = vpop.xlane.xlu0 %2613
        %v2615 = vsel %vm1046, %v2611, 0.0
        %2616 = vadd.xlane.f32.xlu0 %v2615
        %v2617 = vpop.xlane.xlu0 %2616
        %v2618 = vrcp.pop %v2614
        %v2619 = vrcp.pop %v2617
        %v2620 = vmul.f32 %v2609, %v2618
        %v2621 = vmul.f32 %v2611, %v2619
        %2622 = vrot.lane.b32.xlu0 %v2093, 80
        %v2623 = vpop.permute.xlu0 %2622
        %2624 = vrot.lane.b32.xlu0 %v2098, 80
        %v2625 = vpop.permute.xlu0 %2624
        %v2629 = vsel %vm1046, %v2620, 0
        %v2632 = vsel %vm1046, %v2621, 0
        %2634 = vmatprep.subr.mxu0 0.0
        %2635 = vmatpush1.msra.mxu0 0.0
        %2636 = vmatprep.subr.mxu0 0.0
        %2637 = vmatpush1.msra.mxu0 0.0
        %2638 = vmatprep.subr.mxu0 0.0
        %2639 = vmatpush1.msra.mxu0 0.0
        %2640 = vmatprep.subr.mxu0 0.0
        %2641 = vmatpush1.msra.mxu0 0.0
        %2642 = vmatprep.subr.mxu0 0.0
        %2643 = vmatpush1.msra.mxu0 0.0
        %2644 = vmatprep.subr.mxu0 0.0
        %2645 = vmatpush1.msra.mxu0 0.0
        %2646 = vmatprep.subr.mxu0 0.0
        %2647 = vmatpush1.msra.mxu0 0.0
        %2648 = vmatprep.subr.mxu0 0.0
        %2649 = vmatpush1.msra.mxu0 0.0
        %2650 = vmatprep.subr.mxu0 0.0
        %2651 = vmatpush1.msra.mxu0 0.0
        %2652 = vmatprep.subr.mxu0 0.0
        %2653 = vmatpush1.msra.mxu0 0.0
        %2654 = vmatprep.subr.mxu0 0.0
        %2655 = vmatpush1.msra.mxu0 0.0
        %2656 = vmatprep.subr.mxu0 0.0
        %2657 = vmatpush1.msra.mxu0 0.0
        %2658 = vmatprep.subr.mxu0 0.0
        %2659 = vmatpush1.msra.mxu0 0.0
        %2660 = vmatprep.subr.mxu0 0.0
        %2661 = vmatpush1.msra.mxu0 0.0
        %2662 = vmatprep.subr.mxu0 0.0
        %2663 = vmatpush1.msra.mxu0 %v2625
        %2664 = vmatprep.subr.mxu0 0.0
        %2665 = vmatpush1.msra.mxu0 %v2623
        %2666 = vmatprep.subr.mxu0 0.0
        %2667 = vmatpush2.msra.mxu0 0.0
        %2668 = vmatprep.subr.mxu0 0.0
        %2669 = vmatpush2.msra.mxu0 0.0
        %2670 = vmatprep.subr.mxu0 0.0
        %2671 = vmatpush2.msra.mxu0 0.0
        %2672 = vmatprep.subr.mxu0 0.0
        %2673 = vmatpush2.msra.mxu0 0.0
        %2674 = vmatprep.subr.mxu0 0.0
        %2675 = vmatpush2.msra.mxu0 0.0
        %2676 = vmatprep.subr.mxu0 0.0
        %2677 = vmatpush2.msra.mxu0 0.0
        %2678 = vmatprep.subr.mxu0 0.0
        %2679 = vmatpush2.msra.mxu0 0.0
        %2680 = vmatprep.subr.mxu0 0.0
        %2681 = vmatpush2.msra.mxu0 0.0
        %2682 = vmatprep.subr.mxu0 0.0
        %2683 = vmatpush2.msra.mxu0 0.0
        %2684 = vmatprep.subr.mxu0 0.0
        %2685 = vmatpush2.msra.mxu0 0.0
        %2686 = vmatprep.subr.mxu0 0.0
        %2687 = vmatpush2.msra.mxu0 0.0
        %2688 = vmatprep.subr.mxu0 0.0
        %2689 = vmatpush2.msra.mxu0 0.0
        %2690 = vmatprep.subr.mxu0 0.0
        %2691 = vmatpush2.msra.mxu0 0.0
        %2692 = vmatprep.subr.mxu0 0.0
        %2693 = vmatpush2.msra.mxu0 0.0
        %2694 = vmatprep.subr.mxu0 0.0
        %2695 = vmatpush2.msra.mxu0 0.0
        %2696 = vmatprep.subr.mxu0 0.0
        %2697 = vmatpush2.msra.mxu0 0.0
        %2698 = vmatprep.mubr.f32.mxu0 0.0
        %2699 = vmatmul.mubr.f32.gmra.mxu0 %v2629
        %v2700 = vpop.f32.mrf.mxu0
        %v2701 = vadd.f32 0.0, %v2700
        %v2702 = vpop.f32.mrf.mxu0
        %2703 = vmatprep.mubr.f32.mxu0 0.0
        %2704 = vmatmul.mubr.f32.gmra.mxu0 %v2632
        %v2705 = vpop.f32.mrf.mxu0
        %v2706 = vadd.f32 0.0, %v2705
        %v2707 = vpop.f32.mrf.mxu0
        %2708 = vdwg.mxu0
        %2709 = vrot.lane.b32.xlu0 %v2008, 104
        %v2710 = vpop.permute.xlu0 %2709
        %2711 = vrot.lane.b32.xlu0 %v2013, 104
        %v2712 = vpop.permute.xlu0 %2711
        %2713 = vrot.lane.b32.xlu0 %v2093, 104
        %v2714 = vpop.permute.xlu0 %2713
        %2715 = vrot.lane.b32.xlu0 %v2098, 104
        %v2716 = vpop.permute.xlu0 %2715
        %v2717 = vsel %vm958, %v2710, 0
        %v2719 = vsel %vm958, %v2712, 0
        %v2721 = vsel %vm958, %v2714, 0
        %v2723 = vsel %vm958, %v2716, 0
        %2725 = vmatprep.subr.mxu0 0.0
        %2726 = vmatpush1.xpose.msra.mxu0 0.0
        %2727 = vmatprep.subr.mxu0 0.0
        %2728 = vmatpush1.xpose.msra.mxu0 0.0
        %2729 = vmatprep.subr.mxu0 0.0
        %2730 = vmatpush1.xpose.msra.mxu0 0.0
        %2731 = vmatprep.subr.mxu0 0.0
        %2732 = vmatpush1.xpose.msra.mxu0 0.0
        %2733 = vmatprep.subr.mxu0 0.0
        %2734 = vmatpush1.xpose.msra.mxu0 0.0
        %2735 = vmatprep.subr.mxu0 0.0
        %2736 = vmatpush1.xpose.msra.mxu0 0.0
        %2737 = vmatprep.subr.mxu0 0.0
        %2738 = vmatpush1.xpose.msra.mxu0 0.0
        %2739 = vmatprep.subr.mxu0 0.0
        %2740 = vmatpush1.xpose.msra.mxu0 0.0
        %2741 = vmatprep.subr.mxu0 0.0
        %2742 = vmatpush1.xpose.msra.mxu0 0.0
        %2743 = vmatprep.subr.mxu0 0.0
        %2744 = vmatpush1.xpose.msra.mxu0 0.0
        %2745 = vmatprep.subr.mxu0 0.0
        %2746 = vmatpush1.xpose.msra.mxu0 0.0
        %2747 = vmatprep.subr.mxu0 0.0
        %2748 = vmatpush1.xpose.msra.mxu0 0.0
        %2749 = vmatprep.subr.mxu0 0.0
        %2750 = vmatpush1.xpose.msra.mxu0 0.0
        %2751 = vmatprep.subr.mxu0 0.0
        %2752 = vmatpush1.xpose.msra.mxu0 0.0
        %2753 = vmatprep.subr.mxu0 0.0
        %2754 = vmatpush1.xpose.msra.mxu0 %v2723
        %2755 = vmatprep.subr.mxu0 0.0
        %2756 = vmatpush1.xpose.msra.mxu0 %v2721
        %2757 = vmatprep.subr.mxu0 0.0
        %2758 = vmatpush2.xpose.msra.mxu0 0.0
        %2759 = vmatprep.subr.mxu0 0.0
        %2760 = vmatpush2.xpose.msra.mxu0 0.0
        %2761 = vmatprep.subr.mxu0 0.0
        %2762 = vmatpush2.xpose.msra.mxu0 0.0
        %2763 = vmatprep.subr.mxu0 0.0
        %2764 = vmatpush2.xpose.msra.mxu0 0.0
        %2765 = vmatprep.subr.mxu0 0.0
        %2766 = vmatpush2.xpose.msra.mxu0 0.0
        %2767 = vmatprep.subr.mxu0 0.0
        %2768 = vmatpush2.xpose.msra.mxu0 0.0
        %2769 = vmatprep.subr.mxu0 0.0
        %2770 = vmatpush2.xpose.msra.mxu0 0.0
        %2771 = vmatprep.subr.mxu0 0.0
        %2772 = vmatpush2.xpose.msra.mxu0 0.0
        %2773 = vmatprep.subr.mxu0 0.0
        %2774 = vmatpush2.xpose.msra.mxu0 0.0
        %2775 = vmatprep.subr.mxu0 0.0
        %2776 = vmatpush2.xpose.msra.mxu0 0.0
        %2777 = vmatprep.subr.mxu0 0.0
        %2778 = vmatpush2.xpose.msra.mxu0 0.0
        %2779 = vmatprep.subr.mxu0 0.0
        %2780 = vmatpush2.xpose.msra.mxu0 0.0
        %2781 = vmatprep.subr.mxu0 0.0
        %2782 = vmatpush2.xpose.msra.mxu0 0.0
        %2783 = vmatprep.subr.mxu0 0.0
        %2784 = vmatpush2.xpose.msra.mxu0 0.0
        %2785 = vmatprep.subr.mxu0 0.0
        %2786 = vmatpush2.xpose.msra.mxu0 0.0
        %2787 = vmatprep.subr.mxu0 0.0
        %2788 = vmatpush2.xpose.msra.mxu0 0.0
        %2789 = vmatprep.mubr.f32.mxu0 0.0
        %2790 = vmatmul.mubr.f32.gmra.mxu0 %v2717
        %v2791 = vpop.f32.mrf.mxu0
        %v2792 = vadd.f32 0.0, %v2791
        %v2793 = vpop.f32.mrf.mxu0
        %2794 = vmatprep.mubr.f32.mxu0 0.0
        %2795 = vmatmul.mubr.f32.gmra.mxu0 %v2719
        %v2796 = vpop.f32.mrf.mxu0
        %v2797 = vadd.f32 0.0, %v2796
        %v2798 = vpop.f32.mrf.mxu0
        %2799 = vdwg.mxu0
        %v2800 = vmul.f32 %v2792, 0.35355338
        %v2801 = vmul.f32 %v2797, 0.35355338
        %v2802 = vadd.f32 %v2800, %v864
        %v2803 = vadd.f32 %v2801, %v865
        %v2804 = vsel %vm1046, %v2802, -inf
        %2805 = vmax.xlane.f32.xlu0 %v2804
        %v2806 = vpop.xlane.xlu0 %2805
        %v2807 = vsel %vm1046, %v2803, -inf
        %2808 = vmax.xlane.f32.xlu0 %v2807
        %v2809 = vpop.xlane.xlu0 %2808
        %v2810 = vsub.f32 %v2802, %v2806
        %v2811 = vsub.f32 %v2803, %v2809
        %v2812 = vmul.f32 %v2810, 1.442695
        %v2813 = vpow.pop %v2812
        %v2814 = vmul.f32 %v2811, 1.442695
        %v2815 = vpow.pop %v2814
        %v2816 = vsel %vm1046, %v2813, 0.0
        %2817 = vadd.xlane.f32.xlu0 %v2816
        %v2818 = vpop.xlane.xlu0 %2817
        %v2819 = vsel %vm1046, %v2815, 0.0
        %2820 = vadd.xlane.f32.xlu0 %v2819
        %v2821 = vpop.xlane.xlu0 %2820
        %v2822 = vrcp.pop %v2818
        %v2823 = vrcp.pop %v2821
        %v2824 = vmul.f32 %v2813, %v2822
        %v2825 = vmul.f32 %v2815, %v2823
        %2826 = vrot.lane.b32.xlu0 %v2093, 72
        %v2827 = vpop.permute.xlu0 %2826
        %2828 = vrot.lane.b32.xlu0 %v2098, 72
        %v2829 = vpop.permute.xlu0 %2828
        %v2833 = vsel %vm1046, %v2824, 0
        %v2836 = vsel %vm1046, %v2825, 0
        %2838 = vmatprep.subr.mxu0 0.0
        %2839 = vmatpush1.msra.mxu0 0.0
        %2840 = vmatprep.subr.mxu0 0.0
        %2841 = vmatpush1.msra.mxu0 0.0
        %2842 = vmatprep.subr.mxu0 0.0
        %2843 = vmatpush1.msra.mxu0 0.0
        %2844 = vmatprep.subr.mxu0 0.0
        %2845 = vmatpush1.msra.mxu0 0.0
        %2846 = vmatprep.subr.mxu0 0.0
        %2847 = vmatpush1.msra.mxu0 0.0
        %2848 = vmatprep.subr.mxu0 0.0
        %2849 = vmatpush1.msra.mxu0 0.0
        %2850 = vmatprep.subr.mxu0 0.0
        %2851 = vmatpush1.msra.mxu0 0.0
        %2852 = vmatprep.subr.mxu0 0.0
        %2853 = vmatpush1.msra.mxu0 0.0
        %2854 = vmatprep.subr.mxu0 0.0
        %2855 = vmatpush1.msra.mxu0 0.0
        %2856 = vmatprep.subr.mxu0 0.0
        %2857 = vmatpush1.msra.mxu0 0.0
        %2858 = vmatprep.subr.mxu0 0.0
        %2859 = vmatpush1.msra.mxu0 0.0
        %2860 = vmatprep.subr.mxu0 0.0
        %2861 = vmatpush1.msra.mxu0 0.0
        %2862 = vmatprep.subr.mxu0 0.0
        %2863 = vmatpush1.msra.mxu0 0.0
        %2864 = vmatprep.subr.mxu0 0.0
        %2865 = vmatpush1.msra.mxu0 0.0
        %2866 = vmatprep.subr.mxu0 0.0
        %2867 = vmatpush1.msra.mxu0 %v2829
        %2868 = vmatprep.subr.mxu0 0.0
        %2869 = vmatpush1.msra.mxu0 %v2827
        %2870 = vmatprep.subr.mxu0 0.0
        %2871 = vmatpush2.msra.mxu0 0.0
        %2872 = vmatprep.subr.mxu0 0.0
        %2873 = vmatpush2.msra.mxu0 0.0
        %2874 = vmatprep.subr.mxu0 0.0
        %2875 = vmatpush2.msra.mxu0 0.0
        %2876 = vmatprep.subr.mxu0 0.0
        %2877 = vmatpush2.msra.mxu0 0.0
        %2878 = vmatprep.subr.mxu0 0.0
        %2879 = vmatpush2.msra.mxu0 0.0
        %2880 = vmatprep.subr.mxu0 0.0
        %2881 = vmatpush2.msra.mxu0 0.0
        %2882 = vmatprep.subr.mxu0 0.0
        %2883 = vmatpush2.msra.mxu0 0.0
        %2884 = vmatprep.subr.mxu0 0.0
        %2885 = vmatpush2.msra.mxu0 0.0
        %2886 = vmatprep.subr.mxu0 0.0
        %2887 = vmatpush2.msra.mxu0 0.0
        %2888 = vmatprep.subr.mxu0 0.0
        %2889 = vmatpush2.msra.mxu0 0.0
        %2890 = vmatprep.subr.mxu0 0.0
        %2891 = vmatpush2.msra.mxu0 0.0
        %2892 = vmatprep.subr.mxu0 0.0
        %2893 = vmatpush2.msra.mxu0 0.0
        %2894 = vmatprep.subr.mxu0 0.0
        %2895 = vmatpush2.msra.mxu0 0.0
        %2896 = vmatprep.subr.mxu0 0.0
        %2897 = vmatpush2.msra.mxu0 0.0
        %2898 = vmatprep.subr.mxu0 0.0
        %2899 = vmatpush2.msra.mxu0 0.0
        %2900 = vmatprep.subr.mxu0 0.0
        %2901 = vmatpush2.msra.mxu0 0.0
        %2902 = vmatprep.mubr.f32.mxu0 0.0
        %2903 = vmatmul.mubr.f32.gmra.mxu0 %v2833
        %v2904 = vpop.f32.mrf.mxu0
        %v2905 = vadd.f32 0.0, %v2904
        %v2906 = vpop.f32.mrf.mxu0
        %2907 = vmatprep.mubr.f32.mxu0 0.0
        %2908 = vmatmul.mubr.f32.gmra.mxu0 %v2836
        %v2909 = vpop.f32.mrf.mxu0
        %v2910 = vadd.f32 0.0, %v2909
        %v2911 = vpop.f32.mrf.mxu0
        %2912 = vdwg.mxu0
        %2915 = vrot.lane.b32.xlu0 %v2497, 8
        %v2916 = vpop.permute.xlu0 %2915
        %2917 = vrot.lane.b32.xlu0 %v2502, 8
        %v2918 = vpop.permute.xlu0 %2917
        %2923 = vrot.lane.b32.xlu0 %v2701, 16
        %v2924 = vpop.permute.xlu0 %2923
        %2925 = vrot.lane.b32.xlu0 %v2706, 16
        %v2926 = vpop.permute.xlu0 %2925
        %2931 = vrot.lane.b32.xlu0 %v2905, 24
        %v2932 = vpop.permute.xlu0 %2931
        %2933 = vrot.lane.b32.xlu0 %v2910, 24
        %v2934 = vpop.permute.xlu0 %2933
        %v2937 = vsel %vm958, %v2293, %v2916
        %v2938 = vsel %vm958, %v2298, %v2918
        %v2939 = vsel %vm1046, %v2937, %v2924
        %v2940 = vsel %vm1046, %v2938, %v2926
        %v2941 = vsel %vm1796, %v2939, %v2932
        %v2942 = vsel %vm1796, %v2940, %v2934
        %v2943 = vld [vmem:[%s708] sm:$0xff]
        %v2944 = vld [vmem:[%s708 + $0x8] sm:$0xff]
        %v2945 = vld [vmem:[%s708 + $0x10] sm:$0xff]
        %v2946 = vld [vmem:[%s708 + $0x18] sm:$0xff]
        %v2948 = vsel %vm870, %v2941, 0
        %v2951 = vsel %vm870, %v2942, 0
        %2953 = vmatprep.subr.mxu0 0.0
        %2954 = vmatpush1.msra.mxu0 0.0
        %2955 = vmatprep.subr.mxu0 0.0
        %2956 = vmatpush1.msra.mxu0 0.0
        %2957 = vmatprep.subr.mxu0 0.0
        %2958 = vmatpush1.msra.mxu0 0.0
        %2959 = vmatprep.subr.mxu0 0.0
        %2960 = vmatpush1.msra.mxu0 0.0
        %2961 = vmatprep.subr.mxu0 0.0
        %2962 = vmatpush1.msra.mxu0 0.0
        %2963 = vmatprep.subr.mxu0 0.0
        %2964 = vmatpush1.msra.mxu0 0.0
        %2965 = vmatprep.subr.mxu0 0.0
        %2966 = vmatpush1.msra.mxu0 0.0
        %2967 = vmatprep.subr.mxu0 0.0
        %2968 = vmatpush1.msra.mxu0 0.0
        %2969 = vmatprep.subr.mxu0 0.0
        %2970 = vmatpush1.msra.mxu0 0.0
        %2971 = vmatprep.subr.mxu0 0.0
        %2972 = vmatpush1.msra.mxu0 0.0
        %2973 = vmatprep.subr.mxu0 0.0
        %2974 = vmatpush1.msra.mxu0 0.0
        %2975 = vmatprep.subr.mxu0 0.0
        %2976 = vmatpush1.msra.mxu0 0.0
        %2977 = vmatprep.subr.mxu0 0.0
        %2978 = vmatpush1.msra.mxu0 %v2946
        %2979 = vmatprep.subr.mxu0 0.0
        %2980 = vmatpush1.msra.mxu0 %v2945
        %2981 = vmatprep.subr.mxu0 0.0
        %2982 = vmatpush1.msra.mxu0 %v2944
        %2983 = vmatprep.subr.mxu0 0.0
        %2984 = vmatpush1.msra.mxu0 %v2943
        %2985 = vmatprep.subr.mxu0 0.0
        %2986 = vmatpush2.msra.mxu0 0.0
        %2987 = vmatprep.subr.mxu0 0.0
        %2988 = vmatpush2.msra.mxu0 0.0
        %2989 = vmatprep.subr.mxu0 0.0
        %2990 = vmatpush2.msra.mxu0 0.0
        %2991 = vmatprep.subr.mxu0 0.0
        %2992 = vmatpush2.msra.mxu0 0.0
        %2993 = vmatprep.subr.mxu0 0.0
        %2994 = vmatpush2.msra.mxu0 0.0
        %2995 = vmatprep.subr.mxu0 0.0
        %2996 = vmatpush2.msra.mxu0 0.0
        %2997 = vmatprep.subr.mxu0 0.0
        %2998 = vmatpush2.msra.mxu0 0.0
        %2999 = vmatprep.subr.mxu0 0.0
        %3000 = vmatpush2.msra.mxu0 0.0
        %3001 = vmatprep.subr.mxu0 0.0
        %3002 = vmatpush2.msra.mxu0 0.0
        %3003 = vmatprep.subr.mxu0 0.0
        %3004 = vmatpush2.msra.mxu0 0.0
        %3005 = vmatprep.subr.mxu0 0.0
        %3006 = vmatpush2.msra.mxu0 0.0
        %3007 = vmatprep.subr.mxu0 0.0
        %3008 = vmatpush2.msra.mxu0 0.0
        %3009 = vmatprep.subr.mxu0 0.0
        %3010 = vmatpush2.msra.mxu0 0.0
        %3011 = vmatprep.subr.mxu0 0.0
        %3012 = vmatpush2.msra.mxu0 0.0
        %3013 = vmatprep.subr.mxu0 0.0
        %3014 = vmatpush2.msra.mxu0 0.0
        %3015 = vmatprep.subr.mxu0 0.0
        %3016 = vmatpush2.msra.mxu0 0.0
        %3017 = vmatprep.mubr.f32.mxu0 0.0
        %3018 = vmatmul.mubr.f32.gmra.mxu0 %v2948
        %v3019 = vpop.f32.mrf.mxu0
        %v3020 = vadd.f32 0.0, %v3019
        %v3021 = vpop.f32.mrf.mxu0
        %3022 = vmatprep.mubr.f32.mxu0 0.0
        %3023 = vmatmul.mubr.f32.gmra.mxu0 %v2951
        %v3024 = vpop.f32.mrf.mxu0
        %v3025 = vadd.f32 0.0, %v3024
        %v3026 = vpop.f32.mrf.mxu0
        %3027 = vdwg.mxu0
        %v3028 = vadd.f32 %v1929, %v3020
        %v3029 = vadd.f32 %v1930, %v3025
        %v3030 = vld [vmem:[%s834] sm:$0x1]
        %v3031 = vld [vmem:[%s837] sm:$0x1]
        %v3032 = vsel %vm870, %v3028, 0.0
        %3033 = vadd.xlane.f32.xlu0 %v3032
        %v3034 = vpop.xlane.xlu0 %3033
        %v3035 = vsel %vm870, %v3029, 0.0
        %3036 = vadd.xlane.f32.xlu0 %v3035
        %v3037 = vpop.xlane.xlu0 %3036
        %v3038 = vmul.f32 %v3034, %v1894
        %v3039 = vmul.f32 %v3037, %v1894
        %v3040 = vsub.f32 %v3028, %v3038
        %v3041 = vsub.f32 %v3029, %v3039
        %v3042 = vmul.f32 %v3040, %v3040
        %v3043 = vmul.f32 %v3041, %v3041
        %v3044 = vsel %vm870, %v3042, 0.0
        %3045 = vadd.xlane.f32.xlu0 %v3044
        %v3046 = vpop.xlane.xlu0 %3045
        %v3047 = vsel %vm870, %v3043, 0.0
        %3048 = vadd.xlane.f32.xlu0 %v3047
        %v3049 = vpop.xlane.xlu0 %3048
        %v3050 = vmul.f32 %v3046, %v1894
        %v3051 = vmul.f32 %v3049, %v1894
        %v3052 = vadd.f32 %v3050, 1e-05
        %v3053 = vadd.f32 %v3051, 1e-05
        %v3054 = vrsqrt.pop %v3052
        %v3055 = vrsqrt.pop %v3053
        %v3056 = vmul.f32 %v3040, %v3054
        %v3057 = vmul.f32 %v3041, %v3055
        %v3059 = vlaneseq
        %v3060 = vshrl.u32 %v3059, 7
        %v3061 = vsub.s32 0, %v3060
        %v3062 = vrot.slane %v3030, %v3061
        %v3064 = vmul.f32 %v3056, %v3062
        %v3065 = vmul.f32 %v3057, %v3062
        %v3067 = vlaneseq
        %v3068 = vshrl.u32 %v3067, 7
        %v3069 = vsub.s32 0, %v3068
        %v3070 = vrot.slane %v3031, %v3069
        %v3072 = vadd.f32 %v3064, %v3070
        %v3073 = vadd.f32 %v3065, %v3070
        %v3074 = vld [vmem:[%s717] sm:$0xff]
        %v3075 = vld [vmem:[%s717 + $0x8] sm:$0xff]
        %v3076 = vld [vmem:[%s717 + $0x10] sm:$0xff]
        %v3077 = vld [vmem:[%s717 + $0x18] sm:$0xff]
        %v3079 = vsel %vm870, %v3072, 0
        %v3082 = vsel %vm870, %v3073, 0
        %3084 = vmatprep.subr.mxu0 0.0
        %3085 = vmatpush1.msra.mxu0 0.0
        %3086 = vmatprep.subr.mxu0 0.0
        %3087 = vmatpush1.msra.mxu0 0.0
        %3088 = vmatprep.subr.mxu0 0.0
        %3089 = vmatpush1.msra.mxu0 0.0
        %3090 = vmatprep.subr.mxu0 0.0
        %3091 = vmatpush1.msra.mxu0 0.0
        %3092 = vmatprep.subr.mxu0 0.0
        %3093 = vmatpush1.msra.mxu0 0.0
        %3094 = vmatprep.subr.mxu0 0.0
        %3095 = vmatpush1.msra.mxu0 0.0
        %3096 = vmatprep.subr.mxu0 0.0
        %3097 = vmatpush1.msra.mxu0 0.0
        %3098 = vmatprep.subr.mxu0 0.0
        %3099 = vmatpush1.msra.mxu0 0.0
        %3100 = vmatprep.subr.mxu0 0.0
        %3101 = vmatpush1.msra.mxu0 0.0
        %3102 = vmatprep.subr.mxu0 0.0
        %3103 = vmatpush1.msra.mxu0 0.0
        %3104 = vmatprep.subr.mxu0 0.0
        %3105 = vmatpush1.msra.mxu0 0.0
        %3106 = vmatprep.subr.mxu0 0.0
        %3107 = vmatpush1.msra.mxu0 0.0
        %3108 = vmatprep.subr.mxu0 0.0
        %3109 = vmatpush1.msra.mxu0 %v3077
        %3110 = vmatprep.subr.mxu0 0.0
        %3111 = vmatpush1.msra.mxu0 %v3076
        %3112 = vmatprep.subr.mxu0 0.0
        %3113 = vmatpush1.msra.mxu0 %v3075
        %3114 = vmatprep.subr.mxu0 0.0
        %3115 = vmatpush1.msra.mxu0 %v3074
        %3116 = vmatprep.subr.mxu0 0.0
        %3117 = vmatpush2.msra.mxu0 0.0
        %3118 = vmatprep.subr.mxu0 0.0
        %3119 = vmatpush2.msra.mxu0 0.0
        %3120 = vmatprep.subr.mxu0 0.0
        %3121 = vmatpush2.msra.mxu0 0.0
        %3122 = vmatprep.subr.mxu0 0.0
        %3123 = vmatpush2.msra.mxu0 0.0
        %3124 = vmatprep.subr.mxu0 0.0
        %3125 = vmatpush2.msra.mxu0 0.0
        %3126 = vmatprep.subr.mxu0 0.0
        %3127 = vmatpush2.msra.mxu0 0.0
        %3128 = vmatprep.subr.mxu0 0.0
        %3129 = vmatpush2.msra.mxu0 0.0
        %3130 = vmatprep.subr.mxu0 0.0
        %3131 = vmatpush2.msra.mxu0 0.0
        %3132 = vmatprep.subr.mxu0 0.0
        %3133 = vmatpush2.msra.mxu0 0.0
        %3134 = vmatprep.subr.mxu0 0.0
        %3135 = vmatpush2.msra.mxu0 0.0
        %3136 = vmatprep.subr.mxu0 0.0
        %3137 = vmatpush2.msra.mxu0 0.0
        %3138 = vmatprep.subr.mxu0 0.0
        %3139 = vmatpush2.msra.mxu0 0.0
        %3140 = vmatprep.subr.mxu0 0.0
        %3141 = vmatpush2.msra.mxu0 0.0
        %3142 = vmatprep.subr.mxu0 0.0
        %3143 = vmatpush2.msra.mxu0 0.0
        %3144 = vmatprep.subr.mxu0 0.0
        %3145 = vmatpush2.msra.mxu0 0.0
        %3146 = vmatprep.subr.mxu0 0.0
        %3147 = vmatpush2.msra.mxu0 0.0
        %3148 = vmatprep.mubr.f32.mxu0 0.0
        %3149 = vmatmul.mubr.f32.gmra.mxu0 %v3079
        %v3150 = vpop.f32.mrf.mxu0
        %v3151 = vadd.f32 0.0, %v3150
        %v3152 = vpop.f32.mrf.mxu0
        %3153 = vmatprep.mubr.f32.mxu0 0.0
        %3154 = vmatmul.mubr.f32.gmra.mxu0 %v3082
        %v3155 = vpop.f32.mrf.mxu0
        %v3156 = vadd.f32 0.0, %v3155
        %v3157 = vpop.f32.mrf.mxu0
        %3158 = vdwg.mxu0
        %v3159 = vmax.f32 %v3151, 0.0
        %v3160 = vmax.f32 %v3156, 0.0
        %v3161 = vld [vmem:[%s848] sm:$0xff]
        %v3162 = vld [vmem:[%s848 + $0x8] sm:$0xff]
        %v3163 = vld [vmem:[%s848 + $0x10] sm:$0xff]
        %v3164 = vld [vmem:[%s848 + $0x18] sm:$0xff]
        %v3165 = vld [vmem:[%s848 + $0x20] sm:$0xff]
        %v3166 = vld [vmem:[%s848 + $0x28] sm:$0xff]
        %v3167 = vld [vmem:[%s848 + $0x30] sm:$0xff]
        %v3168 = vld [vmem:[%s848 + $0x38] sm:$0xff]
        %vm3169 = vcmask 523264
        %v3171 = vsel %vm3169, %v3159, 0
        %v3174 = vsel %vm3169, %v3160, 0
        %3176 = vmatprep.subr.mxu0 0.0
        %3177 = vmatpush1.msra.mxu0 0.0
        %3178 = vmatprep.subr.mxu0 0.0
        %3179 = vmatpush1.msra.mxu0 0.0
        %3180 = vmatprep.subr.mxu0 0.0
        %3181 = vmatpush1.msra.mxu0 0.0
        %3182 = vmatprep.subr.mxu0 0.0
        %3183 = vmatpush1.msra.mxu0 0.0
        %3184 = vmatprep.subr.mxu0 0.0
        %3185 = vmatpush1.msra.mxu0 0.0
        %3186 = vmatprep.subr.mxu0 0.0
        %3187 = vmatpush1.msra.mxu0 0.0
        %3188 = vmatprep.subr.mxu0 0.0
        %3189 = vmatpush1.msra.mxu0 0.0
        %3190 = vmatprep.subr.mxu0 0.0
        %3191 = vmatpush1.msra.mxu0 0.0
        %3192 = vmatprep.subr.mxu0 0.0
        %3193 = vmatpush1.msra.mxu0 %v3168
        %3194 = vmatprep.subr.mxu0 0.0
        %3195 = vmatpush1.msra.mxu0 %v3167
        %3196 = vmatprep.subr.mxu0 0.0
        %3197 = vmatpush1.msra.mxu0 %v3166
        %3198 = vmatprep.subr.mxu0 0.0
        %3199 = vmatpush1.msra.mxu0 %v3165
        %3200 = vmatprep.subr.mxu0 0.0
        %3201 = vmatpush1.msra.mxu0 %v3164
        %3202 = vmatprep.subr.mxu0 0.0
        %3203 = vmatpush1.msra.mxu0 %v3163
        %3204 = vmatprep.subr.mxu0 0.0
        %3205 = vmatpush1.msra.mxu0 %v3162
        %3206 = vmatprep.subr.mxu0 0.0
        %3207 = vmatpush1.msra.mxu0 %v3161
        %3208 = vmatprep.subr.mxu0 0.0
        %3209 = vmatpush2.msra.mxu0 0.0
        %3210 = vmatprep.subr.mxu0 0.0
        %3211 = vmatpush2.msra.mxu0 0.0
        %3212 = vmatprep.subr.mxu0 0.0
        %3213 = vmatpush2.msra.mxu0 0.0
        %3214 = vmatprep.subr.mxu0 0.0
        %3215 = vmatpush2.msra.mxu0 0.0
        %3216 = vmatprep.subr.mxu0 0.0
        %3217 = vmatpush2.msra.mxu0 0.0
        %3218 = vmatprep.subr.mxu0 0.0
        %3219 = vmatpush2.msra.mxu0 0.0
        %3220 = vmatprep.subr.mxu0 0.0
        %3221 = vmatpush2.msra.mxu0 0.0
        %3222 = vmatprep.subr.mxu0 0.0
        %3223 = vmatpush2.msra.mxu0 0.0
        %3224 = vmatprep.subr.mxu0 0.0
        %3225 = vmatpush2.msra.mxu0 0.0
        %3226 = vmatprep.subr.mxu0 0.0
        %3227 = vmatpush2.msra.mxu0 0.0
        %3228 = vmatprep.subr.mxu0 0.0
        %3229 = vmatpush2.msra.mxu0 0.0
        %3230 = vmatprep.subr.mxu0 0.0
        %3231 = vmatpush2.msra.mxu0 0.0
        %3232 = vmatprep.subr.mxu0 0.0
        %3233 = vmatpush2.msra.mxu0 0.0
        %3234 = vmatprep.subr.mxu0 0.0
        %3235 = vmatpush2.msra.mxu0 0.0
        %3236 = vmatprep.subr.mxu0 0.0
        %3237 = vmatpush2.msra.mxu0 0.0
        %3238 = vmatprep.subr.mxu0 0.0
        %3239 = vmatpush2.msra.mxu0 0.0
        %3240 = vmatprep.mubr.f32.mxu0 0.0
        %3241 = vmatmul.mubr.f32.gmra.mxu0 %v3171
        %v3242 = vpop.f32.mrf.mxu0
        %v3243 = vadd.f32 0.0, %v3242
        %v3244 = vpop.f32.mrf.mxu0
        %3245 = vmatprep.mubr.f32.mxu0 0.0
        %3246 = vmatmul.mubr.f32.gmra.mxu0 %v3174
        %v3247 = vpop.f32.mrf.mxu0
        %v3248 = vadd.f32 0.0, %v3247
        %v3249 = vpop.f32.mrf.mxu0
        %3250 = vdwg.mxu0
        %v3251 = vadd.f32 %v3072, %v3243
        %v3252 = vadd.f32 %v3073, %v3248
        %v3253 = vld [vmem:[%s840] sm:$0x1]
        %v3254 = vld [vmem:[%s843] sm:$0x1]
        %v3255 = vsel %vm870, %v3251, 0.0
        %3256 = vadd.xlane.f32.xlu0 %v3255
        %v3257 = vpop.xlane.xlu0 %3256
        %v3258 = vsel %vm870, %v3252, 0.0
        %3259 = vadd.xlane.f32.xlu0 %v3258
        %v3260 = vpop.xlane.xlu0 %3259
        %v3261 = vmul.f32 %v3257, %v1894
        %v3262 = vmul.f32 %v3260, %v1894
        %v3263 = vsub.f32 %v3251, %v3261
        %v3264 = vsub.f32 %v3252, %v3262
        %v3265 = vmul.f32 %v3263, %v3263
        %v3266 = vmul.f32 %v3264, %v3264
        %v3267 = vsel %vm870, %v3265, 0.0
        %3268 = vadd.xlane.f32.xlu0 %v3267
        %v3269 = vpop.xlane.xlu0 %3268
        %v3270 = vsel %vm870, %v3266, 0.0
        %3271 = vadd.xlane.f32.xlu0 %v3270
        %v3272 = vpop.xlane.xlu0 %3271
        %v3273 = vmul.f32 %v3269, %v1894
        %v3274 = vmul.f32 %v3272, %v1894
        %v3275 = vadd.f32 %v3273, 1e-05
        %v3276 = vadd.f32 %v3274, 1e-05
        %v3277 = vrsqrt.pop %v3275
        %v3278 = vrsqrt.pop %v3276
        %v3279 = vmul.f32 %v3263, %v3277
        %v3280 = vmul.f32 %v3264, %v3278
        %v3282 = vlaneseq
        %v3283 = vshrl.u32 %v3282, 7
        %v3284 = vsub.s32 0, %v3283
        %v3285 = vrot.slane %v3253, %v3284
        %v3287 = vmul.f32 %v3279, %v3285
        %v3288 = vmul.f32 %v3280, %v3285
        %v3290 = vlaneseq
        %v3291 = vshrl.u32 %v3290, 7
        %v3292 = vsub.s32 0, %v3291
        %v3293 = vrot.slane %v3254, %v3292
        %v3295 = vadd.f32 %v3287, %v3293
        %v3296 = vadd.f32 %v3288, %v3293
        %3297 = vst.msk [vmem:[#allocation2] sm:$0xff] %vm870, %v3295
        %3298 = vst.msk [vmem:[#allocation2 + $0x8] sm:$0xff] %vm870, %v3296
        %p3299 = scmp.eq.s32.totalorder %s32, 1
        // Predicated region
        $region121: #{tpu_custom_call.1} parent=87 // pred_check
          %p3300 = pneg %p3299
        $region122: #{tpu_custom_call.1} parent=87 // pred_check_branch
          %3302 = sbr.rel (%p3300) target = $region124
        $region123: #{tpu_custom_call.1} parent=87 // pred_region
          %3303 = vst.msk [vmem:[#allocation14] sm:$0xff] %vm870, %v3295
          %3304 = vst.msk [vmem:[#allocation14 + $0x8] sm:$0xff] %vm870, %v3296
        $region124: #{tpu_custom_call.1} parent=87 // pred_fallthru
          _
        // Predicated region
        $region125: #{tpu_custom_call.1} parent=87 // pred_check
          %p3305 = pneg %p467
        $region126: #{tpu_custom_call.1} parent=87 // pred_check_branch
          %3307 = sbr.rel (%p3305) target = $region128
        $region127: #{tpu_custom_call.1} parent=87 // pred_region
          %s3309 = ssub.s32 256, 256
          %3310 = vsyncadd [#allocation5], %s3309
          %s3311 = sshll.u32 [#allocation14], 4
          %s3312 = int_to_ptr.vmem [resolvable:$true] %s3311
          %3317 = dma.vmem_to_hbm [thread:$0]  %s3312, 256, %s17, [#allocation5], 128, 128, 8
        $region128: #{tpu_custom_call.1} parent=87 // pred_fallthru
          _
        // Predicated region
        $region129: #{tpu_custom_call.1} parent=87 // pred_check
          %p3318 = pneg %p467
        $region130: #{tpu_custom_call.1} parent=87 // pred_check_branch
          %3320 = sbr.rel (%p3318) target = $region132
        $region131: #{tpu_custom_call.1} parent=87 // pred_region
          %3321 = dma.done [#allocation5], 256
        $region132: #{tpu_custom_call.1} parent=87 // pred_fallthru
          _
      $region88: #{tpu_custom_call.1} parent=5 // pred_fallthru
        _
      %p3322 = scmp.le.s32.totalorder 2, %s27
      // Predicated region
      $region133: #{tpu_custom_call.1} parent=5 // pred_check
        %p3323 = pneg %p3322
      $region134: #{tpu_custom_call.1} parent=5 // pred_check_branch
        %3325 = sbr.rel (%p3323) target = $region136
      $region135: #{tpu_custom_call.1} parent=5 // pred_region
        %s3326 = ssub.s32 %s27, 2
      $region136: #{tpu_custom_call.1} parent=5 // pred_fallthru
        _
    $region6: #{tpu_custom_call.1} parent=1 // loop_footer
      %s31 = sadd.s32 1, %s27
    $region7: #{tpu_custom_call.1} parent=1 // loop_footer_branch
      %26 = sbr.rel target = $region3
    $region8: #{tpu_custom_call.1} parent=1 // loop_exit
      _
    %3327 = vsyncpa [#allocation4], 1
    %s3328 = scalar_lea.sflag [#allocation4], 1
    %3329 = vsyncpa %s3328, 1
    %3330 = vsyncpa [#allocation7], 1
    %3331 = vsyncpa [#allocation10], 1
    %3332 = vsyncpa [#allocation5], 1
    %s3333 = scalar_lea.sflag [#allocation5], 1
    %3334 = vsyncpa %s3333, 1

</llo_original>
